<compile_context>
chip_gen: v5e
topology: v5e:2x2
jax: 0.10.0
libtpu: 0.0.40
codegen_flags: <defaults>
</compile_context>

<pallas_src>
import jax
import jax.numpy as jnp
from jax.experimental import pallas as pl
from jax.experimental.pallas import tpu as pltpu

N_EMBED = 384
HIDDEN = 4 * N_EMBED
DROPOUT_P = 0.2

_DROP_THRESHOLD = int(DROPOUT_P * (1 << 32))      # drop if hash < p * 2^32
_DROPOUT_SCALE = 1.0 / (1.0 - DROPOUT_P)


def _random_u32(seed, tile_row0, shape):
    """Per-element 32-bit hash (murmur3 finalizer) — portable integer ops only."""
    tm, e = shape
    row = jax.lax.broadcasted_iota(jnp.int32, shape, 0) + tile_row0
    col = jax.lax.broadcasted_iota(jnp.int32, shape, 1)
    idx = (row * e + col).astype(jnp.uint32)                   # unique per element
    h = idx ^ (seed.astype(jnp.uint32) * jnp.uint32(0x9E3779B9))
    h = h ^ (h >> 16)
    h = h * jnp.uint32(0x85EBCA6B)
    h = h ^ (h >> 13)
    h = h * jnp.uint32(0xC2B2AE35)
    h = h ^ (h >> 16)
    return h


def _ffwd_kernel(seed_ref, x_ref, w1_ref, b1_ref, w2_ref, b2_ref, o_ref):
    # x_ref: (TM, E) bf16 tile | w1: (E, H) bf16 | b1: (1, H) f32
    # w2: (H, E) bf16 | b2: (1, E) f32 | o_ref: (TM, E) f32

    # Linear(E -> 4E): bf16 MXU matmul, f32 accumulation; bias + ReLU in f32.
    h = jnp.dot(x_ref[...], w1_ref[...], preferred_element_type=jnp.float32)
    h = jnp.maximum(h + b1_ref[...], 0.0)

    # Linear(4E -> E): cast to bf16 only after the f32 bias+ReLU.
    y = jnp.dot(h.astype(jnp.bfloat16), w2_ref[...],
                preferred_element_type=jnp.float32)
    y = y + b2_ref[...]

    # Dropout(p=0.2), training mode: keep w.p. (1-p), scale kept by 1/(1-p).
    tm, e = y.shape
    tile_row0 = pl.program_id(0) * tm            # distinct mask per grid tile
    bits = _random_u32(seed_ref[0], tile_row0, (tm, e))
    keep = bits >= jnp.uint32(_DROP_THRESHOLD)   # integer-threshold compare
    y = jnp.where(keep, y * jnp.float32(_DROPOUT_SCALE), 0.0)

    o_ref[...] = y.astype(o_ref.dtype)


def _round_up(x, m):
    return ((x + m - 1) // m) * m


def feed_forward(x, w1, b1, w2, b2, seed, *, tile_m=512, out_dtype=jnp.float32):
    """x: (B, T, E) float32.  Weights stored (in, out).  Returns (B, T, E)."""
    B, T, E = x.shape
    H = w1.shape[1]
    M = B * T

    # Tile the flattened token axis; don't over-pad tiny launches.
    # Round to 16 so bf16 sublane packing is always happy.
    TM = min(tile_m, _round_up(M, 16))
    Mp = _round_up(M, TM)

    # bf16 x halves its HBM traffic; the MXU takes bf16 inputs either way.
    x2d = x.reshape(M, E).astype(jnp.bfloat16)
    if Mp != M:
        x2d = jnp.pad(x2d, ((0, Mp - M), (0, 0)))

    w1b = w1.astype(jnp.bfloat16)
    w2b = w2.astype(jnp.bfloat16)
    b1f = b1.reshape(1, H).astype(jnp.float32)
    b2f = b2.reshape(1, E).astype(jnp.float32)
    seed_arr = jnp.asarray([seed], dtype=jnp.int32)

    out_itemsize = jnp.dtype(out_dtype).itemsize
    cost = pl.CostEstimate(
        flops=4 * Mp * E * H,                       # two matmuls, 2*M*E*H each
        transcendentals=0,
        bytes_accessed=(Mp * E * 2                  # x (bf16)
                        + E * H * 2 + H * E * 2     # bf16 weights
                        + H * 4 + E * 4             # biases (f32)
                        + Mp * E * out_itemsize),   # output
    )

    out = pl.pallas_call(
        _ffwd_kernel,
        out_shape=jax.ShapeDtypeStruct((Mp, E), out_dtype),
        grid_spec=pltpu.PrefetchScalarGridSpec(
            num_scalar_prefetch=1,                  # seed lives in SMEM
            grid=(Mp // TM,),
            in_specs=[
                pl.BlockSpec((TM, E), lambda i, seed: (i, 0)),  # x tile (pipelined)
                pl.BlockSpec((E, H), lambda i, seed: (0, 0)),   # w1 (VMEM-resident)
                pl.BlockSpec((1, H), lambda i, seed: (0, 0)),   # b1
                pl.BlockSpec((H, E), lambda i, seed: (0, 0)),   # w2 (VMEM-resident)
                pl.BlockSpec((1, E), lambda i, seed: (0, 0)),   # b2
            ],
            out_specs=pl.BlockSpec((TM, E), lambda i, seed: (i, 0)),
        ),
        compiler_params=pltpu.CompilerParams(
            dimension_semantics=("parallel",),      # M tiles independent
        ),
        cost_estimate=cost,
    )(seed_arr, x2d, w1b, b1f, w2b, b2f)

    return out[:M].reshape(B, T, E)


def init_params(key, n_embed=N_EMBED, hidden=HIDDEN):
    """Deterministic init mirroring torch.nn.Linear (uniform +/- 1/sqrt(fan_in))."""
    k1, k2, k3, k4 = jax.random.split(key, 4)
    lim1 = 1.0 / jnp.sqrt(jnp.float32(n_embed))
    lim2 = 1.0 / jnp.sqrt(jnp.float32(hidden))
    w1 = jax.random.uniform(k1, (n_embed, hidden), jnp.float32, -lim1, lim1)
    b1 = jax.random.uniform(k2, (1, hidden), jnp.float32, -lim1, lim1)
    w2 = jax.random.uniform(k3, (hidden, n_embed), jnp.float32, -lim2, lim2)
    b2 = jax.random.uniform(k4, (1, n_embed), jnp.float32, -lim2, lim2)
    return w1, b1, w2, b2


if __name__ == "__main__":
    key = jax.random.PRNGKey(0)
    kx, kp = jax.random.split(key)

    B, T = 2, 8
    x = jax.random.normal(kx, (B, T, N_EMBED), jnp.float32)
    w1, b1, w2, b2 = init_params(kp)

    y = feed_forward(x, w1, b1, w2, b2, seed=1234)
    y = jax.block_until_ready(y)

    assert y.shape == (B, T, N_EMBED)
    assert bool(jnp.all(jnp.isfinite(y)))

    # Reference mirroring the kernel's bf16 matmul inputs / f32 accumulation.
    xb = x.reshape(-1, N_EMBED).astype(jnp.bfloat16).astype(jnp.float32)
    w1r = w1.astype(jnp.bfloat16).astype(jnp.float32)
    w2r = w2.astype(jnp.bfloat16).astype(jnp.float32)
    h = jnp.maximum(xb @ w1r + b1, 0.0)
    ref = (h.astype(jnp.bfloat16).astype(jnp.float32) @ w2r + b2)
    ref = ref.reshape(B, T, N_EMBED)

    # Kept elements must equal ref * 1/(1-p); dropped elements are exactly 0.
    kept = y != 0.0
    scale = 1.0 / (1.0 - DROPOUT_P)
    assert bool(jnp.allclose(jnp.where(kept, y, 0.0),
                             jnp.where(kept, ref * scale, 0.0),
                             atol=1e-2, rtol=1e-2))

    # Dropout rate sanity check (loose bound for 16*384 elements, p=0.2).
    drop_frac = 1.0 - jnp.mean(kept.astype(jnp.float32))
    assert 0.08 < float(drop_frac) < 0.35

    print("KERNEL_OK")
</pallas_src>

<mosaic_0001>
module attributes {stable_mosaic.version = 11 : i64} {
  func.func @_ffwd_kernel(%arg0: i32, %arg1: memref<1xi32, #tpu.memory_space<smem>>, %arg2: memref<16x384xbf16, #tpu.memory_space<vmem>>, %arg3: memref<384x1536xbf16, #tpu.memory_space<vmem>>, %arg4: memref<1x1536xf32, #tpu.memory_space<vmem>>, %arg5: memref<1536x384xbf16, #tpu.memory_space<vmem>>, %arg6: memref<1x384xf32, #tpu.memory_space<vmem>>, %arg7: memref<16x384xf32, #tpu.memory_space<vmem>>) attributes {dimension_semantics = [#tpu.dimension_semantics<parallel>], iteration_bounds = array<i64: 1>, scalar_prefetch = 1 : i64, scratch_operands = 0 : i64, tpu.core_type = #tpu.core_type<tc>, window_params = [{transform_indices = @transform_0, window_bounds = array<i64: 16, 384>}, {pipeline_mode = #tpu.pipeline_mode<synchronous>, transform_indices = @transform_1, window_bounds = array<i64: 384, 1536>}, {pipeline_mode = #tpu.pipeline_mode<synchronous>, transform_indices = @transform_2, window_bounds = array<i64: 1, 1536>}, {pipeline_mode = #tpu.pipeline_mode<synchronous>, transform_indices = @transform_3, window_bounds = array<i64: 1536, 384>}, {pipeline_mode = #tpu.pipeline_mode<synchronous>, transform_indices = @transform_4, window_bounds = array<i64: 1, 384>}, {transform_indices = @transform_5, window_bounds = array<i64: 16, 384>}]} {
    %c0 = arith.constant 0 : index
    %c0_0 = arith.constant 0 : index
    %0 = vector.load %arg2[%c0, %c0_0] : memref<16x384xbf16, #tpu.memory_space<vmem>>, vector<16x384xbf16>
    %c0_1 = arith.constant 0 : index
    %c0_2 = arith.constant 0 : index
    %1 = vector.load %arg3[%c0_1, %c0_2] : memref<384x1536xbf16, #tpu.memory_space<vmem>>, vector<384x1536xbf16>
    %cst = arith.constant dense<0.000000e+00> : vector<16x1536xf32>
    %2 = tpu.matmul %0, %1, %cst {dimension_numbers = #tpu.dot_dimension_numbers<[1], [0], [0], [1], [0, 0, 1, 1], [], []>} : vector<16x384xbf16>, vector<384x1536xbf16>, vector<16x1536xf32> -> vector<16x1536xf32>
    %c0_3 = arith.constant 0 : index
    %c0_4 = arith.constant 0 : index
    %3 = vector.load %arg4[%c0_3, %c0_4] : memref<1x1536xf32, #tpu.memory_space<vmem>>, vector<1x1536xf32>
    %4 = vector.broadcast %3 : vector<1x1536xf32> to vector<16x1536xf32>
    %5 = arith.addf %2, %4 : vector<16x1536xf32>
    %cst_5 = arith.constant 0.000000e+00 : f32
    %6 = vector.broadcast %cst_5 : f32 to vector<16x1536xf32>
    %7 = arith.maximumf %5, %6 : vector<16x1536xf32>
    %8 = arith.truncf %7 : vector<16x1536xf32> to vector<16x1536xbf16>
    %c0_6 = arith.constant 0 : index
    %c0_7 = arith.constant 0 : index
    %9 = vector.load %arg5[%c0_6, %c0_7] : memref<1536x384xbf16, #tpu.memory_space<vmem>>, vector<1536x384xbf16>
    %cst_8 = arith.constant dense<0.000000e+00> : vector<16x384xf32>
    %10 = tpu.matmul %8, %9, %cst_8 {dimension_numbers = #tpu.dot_dimension_numbers<[1], [0], [0], [1], [0, 0, 1, 1], [], []>} : vector<16x1536xbf16>, vector<1536x384xbf16>, vector<16x384xf32> -> vector<16x384xf32>
    %c0_9 = arith.constant 0 : index
    %c0_10 = arith.constant 0 : index
    %11 = vector.load %arg6[%c0_9, %c0_10] : memref<1x384xf32, #tpu.memory_space<vmem>>, vector<1x384xf32>
    %12 = vector.broadcast %11 : vector<1x384xf32> to vector<16x384xf32>
    %13 = arith.addf %10, %12 : vector<16x384xf32>
    %c16_i32 = arith.constant 16 : i32
    %14 = arith.muli %arg0, %c16_i32 : i32
    %c0_11 = arith.constant 0 : index
    %15 = memref.load %arg1[%c0_11] : memref<1xi32, #tpu.memory_space<smem>>
    %16 = tpu.iota {dimensions = array<i32: 0>} : vector<16x384xi32>
    %17 = vector.broadcast %14 : i32 to vector<16x384xi32>
    %18 = arith.addi %16, %17 : vector<16x384xi32>
    %19 = tpu.iota {dimensions = array<i32: 1>} : vector<16x384xi32>
    %c384_i32 = arith.constant 384 : i32
    %20 = vector.broadcast %c384_i32 : i32 to vector<16x384xi32>
    %21 = arith.muli %18, %20 : vector<16x384xi32>
    %22 = arith.addi %21, %19 : vector<16x384xi32>
    %c-1640531527_i32 = arith.constant -1640531527 : i32
    %23 = arith.muli %15, %c-1640531527_i32 : i32
    %24 = vector.broadcast %23 : i32 to vector<16x384xi32>
    %25 = arith.xori %22, %24 : vector<16x384xi32>
    %c16_i32_12 = arith.constant 16 : i32
    %26 = vector.broadcast %c16_i32_12 : i32 to vector<16x384xi32>
    %27 = arith.shrui %25, %26 : vector<16x384xi32>
    %28 = arith.xori %25, %27 : vector<16x384xi32>
    %c-2048144789_i32 = arith.constant -2048144789 : i32
    %29 = vector.broadcast %c-2048144789_i32 : i32 to vector<16x384xi32>
    %30 = arith.muli %28, %29 : vector<16x384xi32>
    %c13_i32 = arith.constant 13 : i32
    %31 = vector.broadcast %c13_i32 : i32 to vector<16x384xi32>
    %32 = arith.shrui %30, %31 : vector<16x384xi32>
    %33 = arith.xori %30, %32 : vector<16x384xi32>
    %c-1028477387_i32 = arith.constant -1028477387 : i32
    %34 = vector.broadcast %c-1028477387_i32 : i32 to vector<16x384xi32>
    %35 = arith.muli %33, %34 : vector<16x384xi32>
    %c16_i32_13 = arith.constant 16 : i32
    %36 = vector.broadcast %c16_i32_13 : i32 to vector<16x384xi32>
    %37 = arith.shrui %35, %36 : vector<16x384xi32>
    %38 = arith.xori %35, %37 : vector<16x384xi32>
    %c858993459_i32 = arith.constant 858993459 : i32
    %39 = vector.broadcast %c858993459_i32 : i32 to vector<16x384xi32>
    %40 = arith.cmpi uge, %38, %39 : vector<16x384xi32>
    %cst_14 = arith.constant 1.250000e+00 : f32
    %41 = vector.broadcast %cst_14 : f32 to vector<16x384xf32>
    %42 = arith.mulf %13, %41 : vector<16x384xf32>
    %cst_15 = arith.constant 0.000000e+00 : f32
    %43 = vector.broadcast %cst_15 : f32 to vector<16x384xf32>
    %44 = arith.select %40, %42, %43 : vector<16x384xi1>, vector<16x384xf32>
    %c0_16 = arith.constant 0 : index
    %c0_17 = arith.constant 0 : index
    %45 = vector.load %arg7[%c0_16, %c0_17] : memref<16x384xf32, #tpu.memory_space<vmem>>, vector<16x384xf32>
    tpu.vector_store %arg7[%c0_16, %c0_17], %44 {strides = array<i32>} : memref<16x384xf32, #tpu.memory_space<vmem>>, vector<16x384xf32>,
    return
  }
  func.func @transform_0(%arg0: i32, %arg1: memref<1xi32, #tpu.memory_space<smem>>) -> (i32, i32) {
    %c0_i32 = arith.constant 0 : i32
    %c0_i32_0 = arith.constant 0 : i32
    return %arg0, %c0_i32 : i32, i32
  }
  func.func @transform_1(%arg0: i32, %arg1: memref<1xi32, #tpu.memory_space<smem>>) -> (i32, i32) {
    %c0_i32 = arith.constant 0 : i32
    %c0_i32_0 = arith.constant 0 : i32
    %c0_i32_1 = arith.constant 0 : i32
    return %c0_i32, %c0_i32_0 : i32, i32
  }
  func.func @transform_2(%arg0: i32, %arg1: memref<1xi32, #tpu.memory_space<smem>>) -> (i32, i32) {
    %c0_i32 = arith.constant 0 : i32
    %c0_i32_0 = arith.constant 0 : i32
    %c0_i32_1 = arith.constant 0 : i32
    return %c0_i32, %c0_i32_0 : i32, i32
  }
  func.func @transform_3(%arg0: i32, %arg1: memref<1xi32, #tpu.memory_space<smem>>) -> (i32, i32) {
    %c0_i32 = arith.constant 0 : i32
    %c0_i32_0 = arith.constant 0 : i32
    %c0_i32_1 = arith.constant 0 : i32
    return %c0_i32, %c0_i32_0 : i32, i32
  }
  func.func @transform_4(%arg0: i32, %arg1: memref<1xi32, #tpu.memory_space<smem>>) -> (i32, i32) {
    %c0_i32 = arith.constant 0 : i32
    %c0_i32_0 = arith.constant 0 : i32
    %c0_i32_1 = arith.constant 0 : i32
    return %c0_i32, %c0_i32_0 : i32, i32
  }
  func.func @transform_5(%arg0: i32, %arg1: memref<1xi32, #tpu.memory_space<smem>>) -> (i32, i32) {
    %c0_i32 = arith.constant 0 : i32
    %c0_i32_0 = arith.constant 0 : i32
    return %arg0, %c0_i32 : i32, i32
  }
}

</mosaic_0001>

<llo_original>
// kernel: tpu_custom_call.1
$region0: #{tpu_custom_call.1}
  #allocation0 [shape = 'u32[]', space=smem, size = 0x4, offset = 0x4, fixed_abs, tag = 'smem constant byte address 0x4 - core index']
  #allocation1 [shape = 'u32[72,128]{1,0:T(1,128)}', space=vmem, size = 0x9000, scoped, tag = 'internal scratch']
  #allocation2 [shape = 's32[1]{0}', space=sflag, size = 0x4, scoped, tag = 'scoped memory for tpu_custom_call.1']
  #allocation3 [shape = 's32[1]{0:T(128)S(6)}', space=smem, size = 0x200, scoped, tag = 'prefetched SMEM operand 0']
  %s0 = inlined_call_operand.<no memory space> [shape: s32[1], index: 0, kind: input, shape index: {}]
  %s1 = inlined_call_operand.hbm [shape: bf16[16,384], index: 1, kind: input, shape index: {}]
  %s2 = inlined_call_operand.hbm [shape: bf16[384,1536], index: 2, kind: input, shape index: {}]
  %s3 = inlined_call_operand.hbm [shape: f32[1,1536], index: 3, kind: input, shape index: {}]
  %s4 = inlined_call_operand.hbm [shape: bf16[1536,384], index: 4, kind: input, shape index: {}]
  %s5 = inlined_call_operand.hbm [shape: f32[1,384], index: 5, kind: input, shape index: {}]
  %s6 = inlined_call_operand.hbm [shape: f32[16,384], index: 6, kind: output, shape index: {}]
  %s7 = sld [smem:[#allocation0]]
  $region50: #{tpu_custom_call.1} parent=0
    _
  %s9 = ssub.s32 1, %s7
  %s10 = scalar_select 0, %s9, %s7
  %11 = sst [smem:[#allocation3]] %s0
  $region1: #{tpu_custom_call.1} parent=0
    #allocation4 [shape = 'u8[12288]{0}', space=vmem, size = 0x3000, scoped, tag = 'input window, operand 1, single buffered']
    #allocation5 [shape = 's32[1]{0}', space=sflag, size = 0x4, scoped, tag = 'scoped memory for tpu_custom_call.1']
    #allocation6 [shape = 's32[1]{0}', space=sflag, size = 0x4, scoped, tag = 'scoped memory for tpu_custom_call.1']
    #allocation7 [shape = 'u8[1179648]{0}', space=vmem, size = 0x120000, scoped, tag = 'input window, operand 2, single buffered']
    #allocation8 [shape = 's32[1]{0}', space=sflag, size = 0x4, scoped, tag = 'scoped memory for tpu_custom_call.1']
    #allocation9 [shape = 'u8[6144]{0}', space=vmem, size = 0x1800, scoped, tag = 'input window, operand 3, single buffered']
    #allocation10 [shape = 'u8[1179648]{0}', space=vmem, size = 0x120000, scoped, tag = 'input window, operand 4, single buffered']
    #allocation11 [shape = 's32[1]{0}', space=sflag, size = 0x4, scoped, tag = 'scoped memory for tpu_custom_call.1']
    #allocation12 [shape = 'u8[1536]{0}', space=vmem, size = 0x800, scoped, tag = 'input window, operand 5, single buffered']
    #allocation13 [shape = 'u8[24576]{0}', space=vmem, size = 0x6000, scoped, tag = 'output window, operand 0, single buffered']
    %12 = vsyncpa [#allocation5], 0
    %13 = vsyncpa [#allocation8], 0
    %14 = vsyncpa [#allocation11], 0
    %15 = vsyncpa [#allocation6], 0
    // Predicated region
    $region2: #{tpu_custom_call.1} parent=1 // pred_check
      _
    $region3: #{tpu_custom_call.1} parent=1 // pred_check_branch
      %17 = sbr.rel (0) target = $region5
    $region4: #{tpu_custom_call.1} parent=1 // pred_region
      %19 = vsyncadd [#allocation5], 0
      %s20 = sshll.u32 %s1, 4
      %s21 = int_to_ptr.hbm [resolvable:$true] %s20
      %s22 = sshll.u32 [#allocation4], 4
      %s23 = int_to_ptr.vmem [resolvable:$true] %s22
      %28 = dma.hbm_to_vmem [thread:$0]  %s21, 384, %s23, [#allocation5], 192, 192, 12
    $region5: #{tpu_custom_call.1} parent=1 // pred_fallthru
      _
    // Predicated region
    $region6: #{tpu_custom_call.1} parent=1 // pred_check
      _
    $region7: #{tpu_custom_call.1} parent=1 // pred_check_branch
      %30 = sbr.rel (0) target = $region9
    $region8: #{tpu_custom_call.1} parent=1 // pred_region
      %32 = vsyncadd [#allocation8], 0
      %s33 = sshll.u32 %s2, 4
      %s34 = int_to_ptr.hbm [resolvable:$true] %s33
      %s35 = sshll.u32 [#allocation7], 4
      %s36 = int_to_ptr.vmem [resolvable:$true] %s35
      %41 = dma.hbm_to_vmem [thread:$0]  %s34, 36864, %s36, [#allocation8], 768, 768, 48
    $region9: #{tpu_custom_call.1} parent=1 // pred_fallthru
      _
    // Predicated region
    $region10: #{tpu_custom_call.1} parent=1 // pred_check
      _
    $region11: #{tpu_custom_call.1} parent=1 // pred_check_branch
      %43 = sbr.rel (0) target = $region13
    $region12: #{tpu_custom_call.1} parent=1 // pred_region
      %45 = vsyncadd [#allocation8], 0
      %s47 = sshll.u32 %s3, 4
      %s48 = int_to_ptr.hbm [resolvable:$true] %s47
      %s49 = sshll.u32 [#allocation9], 4
      %s50 = int_to_ptr.vmem [resolvable:$true] %s49
      %52 = dma.hbm_to_vmem [thread:$0]  %s48, 192, %s50, [#allocation8]
    $region13: #{tpu_custom_call.1} parent=1 // pred_fallthru
      _
    // Predicated region
    $region14: #{tpu_custom_call.1} parent=1 // pred_check
      _
    $region15: #{tpu_custom_call.1} parent=1 // pred_check_branch
      %54 = sbr.rel (0) target = $region17
    $region16: #{tpu_custom_call.1} parent=1 // pred_region
      %56 = vsyncadd [#allocation11], 0
      %s57 = sshll.u32 %s4, 4
      %s58 = int_to_ptr.hbm [resolvable:$true] %s57
      %s59 = sshll.u32 [#allocation10], 4
      %s60 = int_to_ptr.vmem [resolvable:$true] %s59
      %65 = dma.hbm_to_vmem [thread:$0]  %s58, 36864, %s60, [#allocation11], 192, 192, 12
    $region17: #{tpu_custom_call.1} parent=1 // pred_fallthru
      _
    // Predicated region
    $region18: #{tpu_custom_call.1} parent=1 // pred_check
      _
    $region19: #{tpu_custom_call.1} parent=1 // pred_check_branch
      %67 = sbr.rel (0) target = $region21
    $region20: #{tpu_custom_call.1} parent=1 // pred_region
      %69 = vsyncadd [#allocation11], 0
      %s71 = sshll.u32 %s5, 4
      %s72 = int_to_ptr.hbm [resolvable:$true] %s71
      %s73 = sshll.u32 [#allocation12], 4
      %s74 = int_to_ptr.vmem [resolvable:$true] %s73
      %76 = dma.hbm_to_vmem [thread:$0]  %s72, 48, %s74, [#allocation11]
    $region21: #{tpu_custom_call.1} parent=1 // pred_fallthru
      _
    // Predicated region
    $region22: #{tpu_custom_call.1} parent=1 // pred_check
      _
    $region23: #{tpu_custom_call.1} parent=1 // pred_check_branch
      %78 = sbr.rel (0) target = $region25
    $region24: #{tpu_custom_call.1} parent=1 // pred_region
      %80 = dma.done [#allocation5], 384
    $region25: #{tpu_custom_call.1} parent=1 // pred_fallthru
      _
    // Predicated region
    $region26: #{tpu_custom_call.1} parent=1 // pred_check
      _
    $region27: #{tpu_custom_call.1} parent=1 // pred_check_branch
      %82 = sbr.rel (0) target = $region29
    $region28: #{tpu_custom_call.1} parent=1 // pred_region
      %84 = dma.done [#allocation8], 36864
    $region29: #{tpu_custom_call.1} parent=1 // pred_fallthru
      _
    // Predicated region
    $region30: #{tpu_custom_call.1} parent=1 // pred_check
      _
    $region31: #{tpu_custom_call.1} parent=1 // pred_check_branch
      %86 = sbr.rel (0) target = $region33
    $region32: #{tpu_custom_call.1} parent=1 // pred_region
      %88 = dma.done [#allocation8], 192
    $region33: #{tpu_custom_call.1} parent=1 // pred_fallthru
      _
    // Predicated region
    $region34: #{tpu_custom_call.1} parent=1 // pred_check
      _
    $region35: #{tpu_custom_call.1} parent=1 // pred_check_branch
      %90 = sbr.rel (0) target = $region37
    $region36: #{tpu_custom_call.1} parent=1 // pred_region
      %92 = dma.done [#allocation11], 36864
    $region37: #{tpu_custom_call.1} parent=1 // pred_fallthru
      _
    // Predicated region
    $region38: #{tpu_custom_call.1} parent=1 // pred_check
      _
    $region39: #{tpu_custom_call.1} parent=1 // pred_check_branch
      %94 = sbr.rel (0) target = $region41
    $region40: #{tpu_custom_call.1} parent=1 // pred_region
      %96 = dma.done [#allocation11], 48
    $region41: #{tpu_custom_call.1} parent=1 // pred_fallthru
      _
    %v97 = vld [vmem:[#allocation4] sm:$0xff]
    %v98 = vld [vmem:[#allocation4 + $0x8] sm:$0xf]
    %v99 = vld [vmem:[#allocation4 + $0xc] sm:$0xff]
    %v100 = vld [vmem:[#allocation4 + $0x14] sm:$0xf]
    %v101 = vld [vmem:[#allocation7] sm:$0xff]
    %v102 = vld [vmem:[#allocation7 + $0x8] sm:$0xff]
    %v103 = vld [vmem:[#allocation7 + $0x10] sm:$0xff]
    %v104 = vld [vmem:[#allocation7 + $0x18] sm:$0xff]
    %v105 = vld [vmem:[#allocation7 + $0x20] sm:$0xff]
    %v106 = vld [vmem:[#allocation7 + $0x28] sm:$0xff]
    %v107 = vld [vmem:[#allocation7 + $0x30] sm:$0xff]
    %v108 = vld [vmem:[#allocation7 + $0x38] sm:$0xff]
    %v109 = vld [vmem:[#allocation7 + $0x40] sm:$0xff]
    %v110 = vld [vmem:[#allocation7 + $0x48] sm:$0xff]
    %v111 = vld [vmem:[#allocation7 + $0x50] sm:$0xff]
    %v112 = vld [vmem:[#allocation7 + $0x58] sm:$0xff]
    %v113 = vld [vmem:[#allocation7 + $0x60] sm:$0xff]
    %v114 = vld [vmem:[#allocation7 + $0x68] sm:$0xff]
    %v115 = vld [vmem:[#allocation7 + $0x70] sm:$0xff]
    %v116 = vld [vmem:[#allocation7 + $0x78] sm:$0xff]
    %v117 = vld [vmem:[#allocation7 + $0x80] sm:$0xff]
    %v118 = vld [vmem:[#allocation7 + $0x88] sm:$0xff]
    %v119 = vld [vmem:[#allocation7 + $0x90] sm:$0xff]
    %v120 = vld [vmem:[#allocation7 + $0x98] sm:$0xff]
    %v121 = vld [vmem:[#allocation7 + $0xa0] sm:$0xff]
    %v122 = vld [vmem:[#allocation7 + $0xa8] sm:$0xff]
    %v123 = vld [vmem:[#allocation7 + $0xb0] sm:$0xff]
    %v124 = vld [vmem:[#allocation7 + $0xb8] sm:$0xff]
    %v125 = vld [vmem:[#allocation7 + $0xc0] sm:$0xff]
    %v126 = vld [vmem:[#allocation7 + $0xc8] sm:$0xff]
    %v127 = vld [vmem:[#allocation7 + $0xd0] sm:$0xff]
    %v128 = vld [vmem:[#allocation7 + $0xd8] sm:$0xff]
    %v129 = vld [vmem:[#allocation7 + $0xe0] sm:$0xff]
    %v130 = vld [vmem:[#allocation7 + $0xe8] sm:$0xff]
    %v131 = vld [vmem:[#allocation7 + $0xf0] sm:$0xff]
    %v132 = vld [vmem:[#allocation7 + $0xf8] sm:$0xff]
    %v133 = vld [vmem:[#allocation7 + $0x100] sm:$0xff]
    %v134 = vld [vmem:[#allocation7 + $0x108] sm:$0xff]
    %v135 = vld [vmem:[#allocation7 + $0x110] sm:$0xff]
    %v136 = vld [vmem:[#allocation7 + $0x118] sm:$0xff]
    %v137 = vld [vmem:[#allocation7 + $0x120] sm:$0xff]
    %v138 = vld [vmem:[#allocation7 + $0x128] sm:$0xff]
    %v139 = vld [vmem:[#allocation7 + $0x130] sm:$0xff]
    %v140 = vld [vmem:[#allocation7 + $0x138] sm:$0xff]
    %v141 = vld [vmem:[#allocation7 + $0x140] sm:$0xff]
    %v142 = vld [vmem:[#allocation7 + $0x148] sm:$0xff]
    %v143 = vld [vmem:[#allocation7 + $0x150] sm:$0xff]
    %v144 = vld [vmem:[#allocation7 + $0x158] sm:$0xff]
    %v145 = vld [vmem:[#allocation7 + $0x160] sm:$0xff]
    %v146 = vld [vmem:[#allocation7 + $0x168] sm:$0xff]
    %v147 = vld [vmem:[#allocation7 + $0x170] sm:$0xff]
    %v148 = vld [vmem:[#allocation7 + $0x178] sm:$0xff]
    %v149 = vld [vmem:[#allocation7 + $0x180] sm:$0xff]
    %v150 = vld [vmem:[#allocation7 + $0x188] sm:$0xff]
    %v151 = vld [vmem:[#allocation7 + $0x190] sm:$0xff]
    %v152 = vld [vmem:[#allocation7 + $0x198] sm:$0xff]
    %v153 = vld [vmem:[#allocation7 + $0x1a0] sm:$0xff]
    %v154 = vld [vmem:[#allocation7 + $0x1a8] sm:$0xff]
    %v155 = vld [vmem:[#allocation7 + $0x1b0] sm:$0xff]
    %v156 = vld [vmem:[#allocation7 + $0x1b8] sm:$0xff]
    %v157 = vld [vmem:[#allocation7 + $0x1c0] sm:$0xff]
    %v158 = vld [vmem:[#allocation7 + $0x1c8] sm:$0xff]
    %v159 = vld [vmem:[#allocation7 + $0x1d0] sm:$0xff]
    %v160 = vld [vmem:[#allocation7 + $0x1d8] sm:$0xff]
    %v161 = vld [vmem:[#allocation7 + $0x1e0] sm:$0xff]
    %v162 = vld [vmem:[#allocation7 + $0x1e8] sm:$0xff]
    %v163 = vld [vmem:[#allocation7 + $0x1f0] sm:$0xff]
    %v164 = vld [vmem:[#allocation7 + $0x1f8] sm:$0xff]
    %v165 = vld [vmem:[#allocation7 + $0x200] sm:$0xff]
    %v166 = vld [vmem:[#allocation7 + $0x208] sm:$0xff]
    %v167 = vld [vmem:[#allocation7 + $0x210] sm:$0xff]
    %v168 = vld [vmem:[#allocation7 + $0x218] sm:$0xff]
    %v169 = vld [vmem:[#allocation7 + $0x220] sm:$0xff]
    %v170 = vld [vmem:[#allocation7 + $0x228] sm:$0xff]
    %v171 = vld [vmem:[#allocation7 + $0x230] sm:$0xff]
    %v172 = vld [vmem:[#allocation7 + $0x238] sm:$0xff]
    %v173 = vld [vmem:[#allocation7 + $0x240] sm:$0xff]
    %v174 = vld [vmem:[#allocation7 + $0x248] sm:$0xff]
    %v175 = vld [vmem:[#allocation7 + $0x250] sm:$0xff]
    %v176 = vld [vmem:[#allocation7 + $0x258] sm:$0xff]
    %v177 = vld [vmem:[#allocation7 + $0x260] sm:$0xff]
    %v178 = vld [vmem:[#allocation7 + $0x268] sm:$0xff]
    %v179 = vld [vmem:[#allocation7 + $0x270] sm:$0xff]
    %v180 = vld [vmem:[#allocation7 + $0x278] sm:$0xff]
    %v181 = vld [vmem:[#allocation7 + $0x280] sm:$0xff]
    %v182 = vld [vmem:[#allocation7 + $0x288] sm:$0xff]
    %v183 = vld [vmem:[#allocation7 + $0x290] sm:$0xff]
    %v184 = vld [vmem:[#allocation7 + $0x298] sm:$0xff]
    %v185 = vld [vmem:[#allocation7 + $0x2a0] sm:$0xff]
    %v186 = vld [vmem:[#allocation7 + $0x2a8] sm:$0xff]
    %v187 = vld [vmem:[#allocation7 + $0x2b0] sm:$0xff]
    %v188 = vld [vmem:[#allocation7 + $0x2b8] sm:$0xff]
    %v189 = vld [vmem:[#allocation7 + $0x2c0] sm:$0xff]
    %v190 = vld [vmem:[#allocation7 + $0x2c8] sm:$0xff]
    %v191 = vld [vmem:[#allocation7 + $0x2d0] sm:$0xff]
    %v192 = vld [vmem:[#allocation7 + $0x2d8] sm:$0xff]
    %v193 = vld [vmem:[#allocation7 + $0x2e0] sm:$0xff]
    %v194 = vld [vmem:[#allocation7 + $0x2e8] sm:$0xff]
    %v195 = vld [vmem:[#allocation7 + $0x2f0] sm:$0xff]
    %v196 = vld [vmem:[#allocation7 + $0x2f8] sm:$0xff]
    %v197 = vld [vmem:[#allocation7 + $0x300] sm:$0xff]
    %v198 = vld [vmem:[#allocation7 + $0x308] sm:$0xff]
    %v199 = vld [vmem:[#allocation7 + $0x310] sm:$0xff]
    %v200 = vld [vmem:[#allocation7 + $0x318] sm:$0xff]
    %v201 = vld [vmem:[#allocation7 + $0x320] sm:$0xff]
    %v202 = vld [vmem:[#allocation7 + $0x328] sm:$0xff]
    %v203 = vld [vmem:[#allocation7 + $0x330] sm:$0xff]
    %v204 = vld [vmem:[#allocation7 + $0x338] sm:$0xff]
    %v205 = vld [vmem:[#allocation7 + $0x340] sm:$0xff]
    %v206 = vld [vmem:[#allocation7 + $0x348] sm:$0xff]
    %v207 = vld [vmem:[#allocation7 + $0x350] sm:$0xff]
    %v208 = vld [vmem:[#allocation7 + $0x358] sm:$0xff]
    %v209 = vld [vmem:[#allocation7 + $0x360] sm:$0xff]
    %v210 = vld [vmem:[#allocation7 + $0x368] sm:$0xff]
    %v211 = vld [vmem:[#allocation7 + $0x370] sm:$0xff]
    %v212 = vld [vmem:[#allocation7 + $0x378] sm:$0xff]
    %v213 = vld [vmem:[#allocation7 + $0x380] sm:$0xff]
    %v214 = vld [vmem:[#allocation7 + $0x388] sm:$0xff]
    %v215 = vld [vmem:[#allocation7 + $0x390] sm:$0xff]
    %v216 = vld [vmem:[#allocation7 + $0x398] sm:$0xff]
    %v217 = vld [vmem:[#allocation7 + $0x3a0] sm:$0xff]
    %v218 = vld [vmem:[#allocation7 + $0x3a8] sm:$0xff]
    %v219 = vld [vmem:[#allocation7 + $0x3b0] sm:$0xff]
    %v220 = vld [vmem:[#allocation7 + $0x3b8] sm:$0xff]
    %v221 = vld [vmem:[#allocation7 + $0x3c0] sm:$0xff]
    %v222 = vld [vmem:[#allocation7 + $0x3c8] sm:$0xff]
    %v223 = vld [vmem:[#allocation7 + $0x3d0] sm:$0xff]
    %v224 = vld [vmem:[#allocation7 + $0x3d8] sm:$0xff]
    %v225 = vld [vmem:[#allocation7 + $0x3e0] sm:$0xff]
    %v226 = vld [vmem:[#allocation7 + $0x3e8] sm:$0xff]
    %v227 = vld [vmem:[#allocation7 + $0x3f0] sm:$0xff]
    %v228 = vld [vmem:[#allocation7 + $0x3f8] sm:$0xff]
    %v229 = vld [vmem:[#allocation7 + $0x400] sm:$0xff]
    %v230 = vld [vmem:[#allocation7 + $0x408] sm:$0xff]
    %v231 = vld [vmem:[#allocation7 + $0x410] sm:$0xff]
    %v232 = vld [vmem:[#allocation7 + $0x418] sm:$0xff]
    %v233 = vld [vmem:[#allocation7 + $0x420] sm:$0xff]
    %v234 = vld [vmem:[#allocation7 + $0x428] sm:$0xff]
    %v235 = vld [vmem:[#allocation7 + $0x430] sm:$0xff]
    %v236 = vld [vmem:[#allocation7 + $0x438] sm:$0xff]
    %v237 = vld [vmem:[#allocation7 + $0x440] sm:$0xff]
    %v238 = vld [vmem:[#allocation7 + $0x448] sm:$0xff]
    %v239 = vld [vmem:[#allocation7 + $0x450] sm:$0xff]
    %v240 = vld [vmem:[#allocation7 + $0x458] sm:$0xff]
    %v241 = vld [vmem:[#allocation7 + $0x460] sm:$0xff]
    %v242 = vld [vmem:[#allocation7 + $0x468] sm:$0xff]
    %v243 = vld [vmem:[#allocation7 + $0x470] sm:$0xff]
    %v244 = vld [vmem:[#allocation7 + $0x478] sm:$0xff]
    %v245 = vld [vmem:[#allocation7 + $0x480] sm:$0xff]
    %v246 = vld [vmem:[#allocation7 + $0x488] sm:$0xff]
    %v247 = vld [vmem:[#allocation7 + $0x490] sm:$0xff]
    %v248 = vld [vmem:[#allocation7 + $0x498] sm:$0xff]
    %v249 = vld [vmem:[#allocation7 + $0x4a0] sm:$0xff]
    %v250 = vld [vmem:[#allocation7 + $0x4a8] sm:$0xff]
    %v251 = vld [vmem:[#allocation7 + $0x4b0] sm:$0xff]
    %v252 = vld [vmem:[#allocation7 + $0x4b8] sm:$0xff]
    %v253 = vld [vmem:[#allocation7 + $0x4c0] sm:$0xff]
    %v254 = vld [vmem:[#allocation7 + $0x4c8] sm:$0xff]
    %v255 = vld [vmem:[#allocation7 + $0x4d0] sm:$0xff]
    %v256 = vld [vmem:[#allocation7 + $0x4d8] sm:$0xff]
    %v257 = vld [vmem:[#allocation7 + $0x4e0] sm:$0xff]
    %v258 = vld [vmem:[#allocation7 + $0x4e8] sm:$0xff]
    %v259 = vld [vmem:[#allocation7 + $0x4f0] sm:$0xff]
    %v260 = vld [vmem:[#allocation7 + $0x4f8] sm:$0xff]
    %v261 = vld [vmem:[#allocation7 + $0x500] sm:$0xff]
    %v262 = vld [vmem:[#allocation7 + $0x508] sm:$0xff]
    %v263 = vld [vmem:[#allocation7 + $0x510] sm:$0xff]
    %v264 = vld [vmem:[#allocation7 + $0x518] sm:$0xff]
    %v265 = vld [vmem:[#allocation7 + $0x520] sm:$0xff]
    %v266 = vld [vmem:[#allocation7 + $0x528] sm:$0xff]
    %v267 = vld [vmem:[#allocation7 + $0x530] sm:$0xff]
    %v268 = vld [vmem:[#allocation7 + $0x538] sm:$0xff]
    %v269 = vld [vmem:[#allocation7 + $0x540] sm:$0xff]
    %v270 = vld [vmem:[#allocation7 + $0x548] sm:$0xff]
    %v271 = vld [vmem:[#allocation7 + $0x550] sm:$0xff]
    %v272 = vld [vmem:[#allocation7 + $0x558] sm:$0xff]
    %v273 = vld [vmem:[#allocation7 + $0x560] sm:$0xff]
    %v274 = vld [vmem:[#allocation7 + $0x568] sm:$0xff]
    %v275 = vld [vmem:[#allocation7 + $0x570] sm:$0xff]
    %v276 = vld [vmem:[#allocation7 + $0x578] sm:$0xff]
    %v277 = vld [vmem:[#allocation7 + $0x580] sm:$0xff]
    %v278 = vld [vmem:[#allocation7 + $0x588] sm:$0xff]
    %v279 = vld [vmem:[#allocation7 + $0x590] sm:$0xff]
    %v280 = vld [vmem:[#allocation7 + $0x598] sm:$0xff]
    %v281 = vld [vmem:[#allocation7 + $0x5a0] sm:$0xff]
    %v282 = vld [vmem:[#allocation7 + $0x5a8] sm:$0xff]
    %v283 = vld [vmem:[#allocation7 + $0x5b0] sm:$0xff]
    %v284 = vld [vmem:[#allocation7 + $0x5b8] sm:$0xff]
    %v285 = vld [vmem:[#allocation7 + $0x5c0] sm:$0xff]
    %v286 = vld [vmem:[#allocation7 + $0x5c8] sm:$0xff]
    %v287 = vld [vmem:[#allocation7 + $0x5d0] sm:$0xff]
    %v288 = vld [vmem:[#allocation7 + $0x5d8] sm:$0xff]
    %v289 = vld [vmem:[#allocation7 + $0x5e0] sm:$0xff]
    %v290 = vld [vmem:[#allocation7 + $0x5e8] sm:$0xff]
    %v291 = vld [vmem:[#allocation7 + $0x5f0] sm:$0xff]
    %v292 = vld [vmem:[#allocation7 + $0x5f8] sm:$0xff]
    %v293 = vld [vmem:[#allocation7 + $0x600] sm:$0xff]
    %v294 = vld [vmem:[#allocation7 + $0x608] sm:$0xff]
    %v295 = vld [vmem:[#allocation7 + $0x610] sm:$0xff]
    %v296 = vld [vmem:[#allocation7 + $0x618] sm:$0xff]
    %v297 = vld [vmem:[#allocation7 + $0x620] sm:$0xff]
    %v298 = vld [vmem:[#allocation7 + $0x628] sm:$0xff]
    %v299 = vld [vmem:[#allocation7 + $0x630] sm:$0xff]
    %v300 = vld [vmem:[#allocation7 + $0x638] sm:$0xff]
    %v301 = vld [vmem:[#allocation7 + $0x640] sm:$0xff]
    %v302 = vld [vmem:[#allocation7 + $0x648] sm:$0xff]
    %v303 = vld [vmem:[#allocation7 + $0x650] sm:$0xff]
    %v304 = vld [vmem:[#allocation7 + $0x658] sm:$0xff]
    %v305 = vld [vmem:[#allocation7 + $0x660] sm:$0xff]
    %v306 = vld [vmem:[#allocation7 + $0x668] sm:$0xff]
    %v307 = vld [vmem:[#allocation7 + $0x670] sm:$0xff]
    %v308 = vld [vmem:[#allocation7 + $0x678] sm:$0xff]
    %v309 = vld [vmem:[#allocation7 + $0x680] sm:$0xff]
    %v310 = vld [vmem:[#allocation7 + $0x688] sm:$0xff]
    %v311 = vld [vmem:[#allocation7 + $0x690] sm:$0xff]
    %v312 = vld [vmem:[#allocation7 + $0x698] sm:$0xff]
    %v313 = vld [vmem:[#allocation7 + $0x6a0] sm:$0xff]
    %v314 = vld [vmem:[#allocation7 + $0x6a8] sm:$0xff]
    %v315 = vld [vmem:[#allocation7 + $0x6b0] sm:$0xff]
    %v316 = vld [vmem:[#allocation7 + $0x6b8] sm:$0xff]
    %v317 = vld [vmem:[#allocation7 + $0x6c0] sm:$0xff]
    %v318 = vld [vmem:[#allocation7 + $0x6c8] sm:$0xff]
    %v319 = vld [vmem:[#allocation7 + $0x6d0] sm:$0xff]
    %v320 = vld [vmem:[#allocation7 + $0x6d8] sm:$0xff]
    %v321 = vld [vmem:[#allocation7 + $0x6e0] sm:$0xff]
    %v322 = vld [vmem:[#allocation7 + $0x6e8] sm:$0xff]
    %v323 = vld [vmem:[#allocation7 + $0x6f0] sm:$0xff]
    %v324 = vld [vmem:[#allocation7 + $0x6f8] sm:$0xff]
    %v325 = vld [vmem:[#allocation7 + $0x700] sm:$0xff]
    %v326 = vld [vmem:[#allocation7 + $0x708] sm:$0xff]
    %v327 = vld [vmem:[#allocation7 + $0x710] sm:$0xff]
    %v328 = vld [vmem:[#allocation7 + $0x718] sm:$0xff]
    %v329 = vld [vmem:[#allocation7 + $0x720] sm:$0xff]
    %v330 = vld [vmem:[#allocation7 + $0x728] sm:$0xff]
    %v331 = vld [vmem:[#allocation7 + $0x730] sm:$0xff]
    %v332 = vld [vmem:[#allocation7 + $0x738] sm:$0xff]
    %v333 = vld [vmem:[#allocation7 + $0x740] sm:$0xff]
    %v334 = vld [vmem:[#allocation7 + $0x748] sm:$0xff]
    %v335 = vld [vmem:[#allocation7 + $0x750] sm:$0xff]
    %v336 = vld [vmem:[#allocation7 + $0x758] sm:$0xff]
    %v337 = vld [vmem:[#allocation7 + $0x760] sm:$0xff]
    %v338 = vld [vmem:[#allocation7 + $0x768] sm:$0xff]
    %v339 = vld [vmem:[#allocation7 + $0x770] sm:$0xff]
    %v340 = vld [vmem:[#allocation7 + $0x778] sm:$0xff]
    %v341 = vld [vmem:[#allocation7 + $0x780] sm:$0xff]
    %v342 = vld [vmem:[#allocation7 + $0x788] sm:$0xff]
    %v343 = vld [vmem:[#allocation7 + $0x790] sm:$0xff]
    %v344 = vld [vmem:[#allocation7 + $0x798] sm:$0xff]
    %v345 = vld [vmem:[#allocation7 + $0x7a0] sm:$0xff]
    %v346 = vld [vmem:[#allocation7 + $0x7a8] sm:$0xff]
    %v347 = vld [vmem:[#allocation7 + $0x7b0] sm:$0xff]
    %v348 = vld [vmem:[#allocation7 + $0x7b8] sm:$0xff]
    %v349 = vld [vmem:[#allocation7 + $0x7c0] sm:$0xff]
    %v350 = vld [vmem:[#allocation7 + $0x7c8] sm:$0xff]
    %v351 = vld [vmem:[#allocation7 + $0x7d0] sm:$0xff]
    %v352 = vld [vmem:[#allocation7 + $0x7d8] sm:$0xff]
    %v353 = vld [vmem:[#allocation7 + $0x7e0] sm:$0xff]
    %v354 = vld [vmem:[#allocation7 + $0x7e8] sm:$0xff]
    %v355 = vld [vmem:[#allocation7 + $0x7f0] sm:$0xff]
    %v356 = vld [vmem:[#allocation7 + $0x7f8] sm:$0xff]
    %v357 = vld [vmem:[#allocation7 + $0x800] sm:$0xff]
    %v358 = vld [vmem:[#allocation7 + $0x808] sm:$0xff]
    %v359 = vld [vmem:[#allocation7 + $0x810] sm:$0xff]
    %v360 = vld [vmem:[#allocation7 + $0x818] sm:$0xff]
    %v361 = vld [vmem:[#allocation7 + $0x820] sm:$0xff]
    %v362 = vld [vmem:[#allocation7 + $0x828] sm:$0xff]
    %v363 = vld [vmem:[#allocation7 + $0x830] sm:$0xff]
    %v364 = vld [vmem:[#allocation7 + $0x838] sm:$0xff]
    %v365 = vld [vmem:[#allocation7 + $0x840] sm:$0xff]
    %v366 = vld [vmem:[#allocation7 + $0x848] sm:$0xff]
    %v367 = vld [vmem:[#allocation7 + $0x850] sm:$0xff]
    %v368 = vld [vmem:[#allocation7 + $0x858] sm:$0xff]
    %v369 = vld [vmem:[#allocation7 + $0x860] sm:$0xff]
    %v370 = vld [vmem:[#allocation7 + $0x868] sm:$0xff]
    %v371 = vld [vmem:[#allocation7 + $0x870] sm:$0xff]
    %v372 = vld [vmem:[#allocation7 + $0x878] sm:$0xff]
    %v373 = vld [vmem:[#allocation7 + $0x880] sm:$0xff]
    %v374 = vld [vmem:[#allocation7 + $0x888] sm:$0xff]
    %v375 = vld [vmem:[#allocation7 + $0x890] sm:$0xff]
    %v376 = vld [vmem:[#allocation7 + $0x898] sm:$0xff]
    %v377 = vld [vmem:[#allocation7 + $0x8a0] sm:$0xff]
    %v378 = vld [vmem:[#allocation7 + $0x8a8] sm:$0xff]
    %v379 = vld [vmem:[#allocation7 + $0x8b0] sm:$0xff]
    %v380 = vld [vmem:[#allocation7 + $0x8b8] sm:$0xff]
    %v381 = vld [vmem:[#allocation7 + $0x8c0] sm:$0xff]
    %v382 = vld [vmem:[#allocation7 + $0x8c8] sm:$0xff]
    %v383 = vld [vmem:[#allocation7 + $0x8d0] sm:$0xff]
    %v384 = vld [vmem:[#allocation7 + $0x8d8] sm:$0xff]
    %v385 = vld [vmem:[#allocation7 + $0x8e0] sm:$0xff]
    %v386 = vld [vmem:[#allocation7 + $0x8e8] sm:$0xff]
    %v387 = vld [vmem:[#allocation7 + $0x8f0] sm:$0xff]
    %v388 = vld [vmem:[#allocation7 + $0x8f8] sm:$0xff]
    %v389 = vld [vmem:[#allocation9] sm:$0xff]
    %v390 = vld [vmem:[#allocation9 + $0x8] sm:$0xf]
    %v393 = vperm.slane %v389, 0
    %v394 = vperm.slane %v389, 1
    %v395 = vperm.slane %v389, 2
    %v396 = vperm.slane %v389, 3
    %v397 = vperm.slane %v389, 4
    %v398 = vperm.slane %v389, 5
    %v399 = vperm.slane %v389, 6
    %v400 = vperm.slane %v389, 7
    %v401 = vperm.slane %v390, 0
    %v402 = vperm.slane %v390, 1
    %v403 = vperm.slane %v390, 2
    %v404 = vperm.slane %v390, 3
    %v421 = vunpack.c.l.b16 %v97
    %v422 = vunpack.c.h.b16 %v97
    %v423 = vunpack.c.l.b16 %v98
    %v424 = vunpack.c.l.b16 %v99
    %v425 = vunpack.c.h.b16 %v99
    %v426 = vunpack.c.l.b16 %v100
    %v427 = vpack.c.b16 %v424, %v421
    %v428 = vpack.c.b16 %v425, %v422
    %v429 = vpack.c.b16 %v426, %v423
    %v721 = vunpack.c.l.b16 %v101
    %v722 = vunpack.c.h.b16 %v101
    %v723 = vunpack.c.l.b16 %v102
    %v724 = vunpack.c.h.b16 %v102
    %v725 = vunpack.c.l.b16 %v103
    %v726 = vunpack.c.h.b16 %v103
    %v727 = vunpack.c.l.b16 %v104
    %v728 = vunpack.c.h.b16 %v104
    %v729 = vunpack.c.l.b16 %v105
    %v730 = vunpack.c.h.b16 %v105
    %v731 = vunpack.c.l.b16 %v106
    %v732 = vunpack.c.h.b16 %v106
    %v733 = vunpack.c.l.b16 %v107
    %v734 = vunpack.c.h.b16 %v107
    %v735 = vunpack.c.l.b16 %v108
    %v736 = vunpack.c.h.b16 %v108
    %v737 = vunpack.c.l.b16 %v109
    %v738 = vunpack.c.h.b16 %v109
    %v739 = vunpack.c.l.b16 %v110
    %v740 = vunpack.c.h.b16 %v110
    %v741 = vunpack.c.l.b16 %v111
    %v742 = vunpack.c.h.b16 %v111
    %v743 = vunpack.c.l.b16 %v112
    %v744 = vunpack.c.h.b16 %v112
    %v745 = vunpack.c.l.b16 %v113
    %v746 = vunpack.c.h.b16 %v113
    %v747 = vunpack.c.l.b16 %v114
    %v748 = vunpack.c.h.b16 %v114
    %v749 = vunpack.c.l.b16 %v115
    %v750 = vunpack.c.h.b16 %v115
    %v751 = vunpack.c.l.b16 %v116
    %v752 = vunpack.c.h.b16 %v116
    %v753 = vunpack.c.l.b16 %v117
    %v754 = vunpack.c.h.b16 %v117
    %v755 = vunpack.c.l.b16 %v118
    %v756 = vunpack.c.h.b16 %v118
    %v757 = vunpack.c.l.b16 %v119
    %v758 = vunpack.c.h.b16 %v119
    %v759 = vunpack.c.l.b16 %v120
    %v760 = vunpack.c.h.b16 %v120
    %v761 = vunpack.c.l.b16 %v121
    %v762 = vunpack.c.h.b16 %v121
    %v763 = vunpack.c.l.b16 %v122
    %v764 = vunpack.c.h.b16 %v122
    %v765 = vunpack.c.l.b16 %v123
    %v766 = vunpack.c.h.b16 %v123
    %v767 = vunpack.c.l.b16 %v124
    %v768 = vunpack.c.h.b16 %v124
    %v769 = vunpack.c.l.b16 %v125
    %v770 = vunpack.c.h.b16 %v125
    %v771 = vunpack.c.l.b16 %v126
    %v772 = vunpack.c.h.b16 %v126
    %v773 = vunpack.c.l.b16 %v127
    %v774 = vunpack.c.h.b16 %v127
    %v775 = vunpack.c.l.b16 %v128
    %v776 = vunpack.c.h.b16 %v128
    %v777 = vunpack.c.l.b16 %v129
    %v778 = vunpack.c.h.b16 %v129
    %v779 = vunpack.c.l.b16 %v130
    %v780 = vunpack.c.h.b16 %v130
    %v781 = vunpack.c.l.b16 %v131
    %v782 = vunpack.c.h.b16 %v131
    %v783 = vunpack.c.l.b16 %v132
    %v784 = vunpack.c.h.b16 %v132
    %v785 = vunpack.c.l.b16 %v133
    %v786 = vunpack.c.h.b16 %v133
    %v787 = vunpack.c.l.b16 %v134
    %v788 = vunpack.c.h.b16 %v134
    %v789 = vunpack.c.l.b16 %v135
    %v790 = vunpack.c.h.b16 %v135
    %v791 = vunpack.c.l.b16 %v136
    %v792 = vunpack.c.h.b16 %v136
    %v793 = vunpack.c.l.b16 %v137
    %v794 = vunpack.c.h.b16 %v137
    %v795 = vunpack.c.l.b16 %v138
    %v796 = vunpack.c.h.b16 %v138
    %v797 = vunpack.c.l.b16 %v139
    %v798 = vunpack.c.h.b16 %v139
    %v799 = vunpack.c.l.b16 %v140
    %v800 = vunpack.c.h.b16 %v140
    %v801 = vunpack.c.l.b16 %v141
    %v802 = vunpack.c.h.b16 %v141
    %v803 = vunpack.c.l.b16 %v142
    %v804 = vunpack.c.h.b16 %v142
    %v805 = vunpack.c.l.b16 %v143
    %v806 = vunpack.c.h.b16 %v143
    %v807 = vunpack.c.l.b16 %v144
    %v808 = vunpack.c.h.b16 %v144
    %v809 = vunpack.c.l.b16 %v145
    %v810 = vunpack.c.h.b16 %v145
    %v811 = vunpack.c.l.b16 %v146
    %v812 = vunpack.c.h.b16 %v146
    %v813 = vunpack.c.l.b16 %v147
    %v814 = vunpack.c.h.b16 %v147
    %v815 = vunpack.c.l.b16 %v148
    %v816 = vunpack.c.h.b16 %v148
    %v817 = vunpack.c.l.b16 %v149
    %v818 = vunpack.c.h.b16 %v149
    %v819 = vunpack.c.l.b16 %v150
    %v820 = vunpack.c.h.b16 %v150
    %v821 = vunpack.c.l.b16 %v151
    %v822 = vunpack.c.h.b16 %v151
    %v823 = vunpack.c.l.b16 %v152
    %v824 = vunpack.c.h.b16 %v152
    %v825 = vunpack.c.l.b16 %v153
    %v826 = vunpack.c.h.b16 %v153
    %v827 = vunpack.c.l.b16 %v154
    %v828 = vunpack.c.h.b16 %v154
    %v829 = vunpack.c.l.b16 %v155
    %v830 = vunpack.c.h.b16 %v155
    %v831 = vunpack.c.l.b16 %v156
    %v832 = vunpack.c.h.b16 %v156
    %v833 = vunpack.c.l.b16 %v157
    %v834 = vunpack.c.h.b16 %v157
    %v835 = vunpack.c.l.b16 %v158
    %v836 = vunpack.c.h.b16 %v158
    %v837 = vunpack.c.l.b16 %v159
    %v838 = vunpack.c.h.b16 %v159
    %v839 = vunpack.c.l.b16 %v160
    %v840 = vunpack.c.h.b16 %v160
    %v841 = vunpack.c.l.b16 %v161
    %v842 = vunpack.c.h.b16 %v161
    %v843 = vunpack.c.l.b16 %v162
    %v844 = vunpack.c.h.b16 %v162
    %v845 = vunpack.c.l.b16 %v163
    %v846 = vunpack.c.h.b16 %v163
    %v847 = vunpack.c.l.b16 %v164
    %v848 = vunpack.c.h.b16 %v164
    %v849 = vunpack.c.l.b16 %v165
    %v850 = vunpack.c.h.b16 %v165
    %v851 = vunpack.c.l.b16 %v166
    %v852 = vunpack.c.h.b16 %v166
    %v853 = vunpack.c.l.b16 %v167
    %v854 = vunpack.c.h.b16 %v167
    %v855 = vunpack.c.l.b16 %v168
    %v856 = vunpack.c.h.b16 %v168
    %v857 = vunpack.c.l.b16 %v169
    %v858 = vunpack.c.h.b16 %v169
    %v859 = vunpack.c.l.b16 %v170
    %v860 = vunpack.c.h.b16 %v170
    %v861 = vunpack.c.l.b16 %v171
    %v862 = vunpack.c.h.b16 %v171
    %v863 = vunpack.c.l.b16 %v172
    %v864 = vunpack.c.h.b16 %v172
    %v865 = vunpack.c.l.b16 %v173
    %v866 = vunpack.c.h.b16 %v173
    %v867 = vunpack.c.l.b16 %v174
    %v868 = vunpack.c.h.b16 %v174
    %v869 = vunpack.c.l.b16 %v175
    %v870 = vunpack.c.h.b16 %v175
    %v871 = vunpack.c.l.b16 %v176
    %v872 = vunpack.c.h.b16 %v176
    %v873 = vunpack.c.l.b16 %v177
    %v874 = vunpack.c.h.b16 %v177
    %v875 = vunpack.c.l.b16 %v178
    %v876 = vunpack.c.h.b16 %v178
    %v877 = vunpack.c.l.b16 %v179
    %v878 = vunpack.c.h.b16 %v179
    %v879 = vunpack.c.l.b16 %v180
    %v880 = vunpack.c.h.b16 %v180
    %v881 = vunpack.c.l.b16 %v181
    %v882 = vunpack.c.h.b16 %v181
    %v883 = vunpack.c.l.b16 %v182
    %v884 = vunpack.c.h.b16 %v182
    %v885 = vunpack.c.l.b16 %v183
    %v886 = vunpack.c.h.b16 %v183
    %v887 = vunpack.c.l.b16 %v184
    %v888 = vunpack.c.h.b16 %v184
    %v889 = vunpack.c.l.b16 %v185
    %v890 = vunpack.c.h.b16 %v185
    %v891 = vunpack.c.l.b16 %v186
    %v892 = vunpack.c.h.b16 %v186
    %v893 = vunpack.c.l.b16 %v187
    %v894 = vunpack.c.h.b16 %v187
    %v895 = vunpack.c.l.b16 %v188
    %v896 = vunpack.c.h.b16 %v188
    %v897 = vunpack.c.l.b16 %v189
    %v898 = vunpack.c.h.b16 %v189
    %v899 = vunpack.c.l.b16 %v190
    %v900 = vunpack.c.h.b16 %v190
    %v901 = vunpack.c.l.b16 %v191
    %v902 = vunpack.c.h.b16 %v191
    %v903 = vunpack.c.l.b16 %v192
    %v904 = vunpack.c.h.b16 %v192
    %v905 = vunpack.c.l.b16 %v193
    %v906 = vunpack.c.h.b16 %v193
    %v907 = vunpack.c.l.b16 %v194
    %v908 = vunpack.c.h.b16 %v194
    %v909 = vunpack.c.l.b16 %v195
    %v910 = vunpack.c.h.b16 %v195
    %v911 = vunpack.c.l.b16 %v196
    %v912 = vunpack.c.h.b16 %v196
    %v913 = vunpack.c.l.b16 %v197
    %v914 = vunpack.c.h.b16 %v197
    %v915 = vunpack.c.l.b16 %v198
    %v916 = vunpack.c.h.b16 %v198
    %v917 = vunpack.c.l.b16 %v199
    %v918 = vunpack.c.h.b16 %v199
    %v919 = vunpack.c.l.b16 %v200
    %v920 = vunpack.c.h.b16 %v200
    %v921 = vunpack.c.l.b16 %v201
    %v922 = vunpack.c.h.b16 %v201
    %v923 = vunpack.c.l.b16 %v202
    %v924 = vunpack.c.h.b16 %v202
    %v925 = vunpack.c.l.b16 %v203
    %v926 = vunpack.c.h.b16 %v203
    %v927 = vunpack.c.l.b16 %v204
    %v928 = vunpack.c.h.b16 %v204
    %v929 = vunpack.c.l.b16 %v205
    %v930 = vunpack.c.h.b16 %v205
    %v931 = vunpack.c.l.b16 %v206
    %v932 = vunpack.c.h.b16 %v206
    %v933 = vunpack.c.l.b16 %v207
    %v934 = vunpack.c.h.b16 %v207
    %v935 = vunpack.c.l.b16 %v208
    %v936 = vunpack.c.h.b16 %v208
    %v937 = vunpack.c.l.b16 %v209
    %v938 = vunpack.c.h.b16 %v209
    %v939 = vunpack.c.l.b16 %v210
    %v940 = vunpack.c.h.b16 %v210
    %v941 = vunpack.c.l.b16 %v211
    %v942 = vunpack.c.h.b16 %v211
    %v943 = vunpack.c.l.b16 %v212
    %v944 = vunpack.c.h.b16 %v212
    %v945 = vunpack.c.l.b16 %v213
    %v946 = vunpack.c.h.b16 %v213
    %v947 = vunpack.c.l.b16 %v214
    %v948 = vunpack.c.h.b16 %v214
    %v949 = vunpack.c.l.b16 %v215
    %v950 = vunpack.c.h.b16 %v215
    %v951 = vunpack.c.l.b16 %v216
    %v952 = vunpack.c.h.b16 %v216
    %v953 = vunpack.c.l.b16 %v217
    %v954 = vunpack.c.h.b16 %v217
    %v955 = vunpack.c.l.b16 %v218
    %v956 = vunpack.c.h.b16 %v218
    %v957 = vunpack.c.l.b16 %v219
    %v958 = vunpack.c.h.b16 %v219
    %v959 = vunpack.c.l.b16 %v220
    %v960 = vunpack.c.h.b16 %v220
    %v961 = vunpack.c.l.b16 %v221
    %v962 = vunpack.c.h.b16 %v221
    %v963 = vunpack.c.l.b16 %v222
    %v964 = vunpack.c.h.b16 %v222
    %v965 = vunpack.c.l.b16 %v223
    %v966 = vunpack.c.h.b16 %v223
    %v967 = vunpack.c.l.b16 %v224
    %v968 = vunpack.c.h.b16 %v224
    %v969 = vunpack.c.l.b16 %v225
    %v970 = vunpack.c.h.b16 %v225
    %v971 = vunpack.c.l.b16 %v226
    %v972 = vunpack.c.h.b16 %v226
    %v973 = vunpack.c.l.b16 %v227
    %v974 = vunpack.c.h.b16 %v227
    %v975 = vunpack.c.l.b16 %v228
    %v976 = vunpack.c.h.b16 %v228
    %v977 = vunpack.c.l.b16 %v229
    %v978 = vunpack.c.h.b16 %v229
    %v979 = vunpack.c.l.b16 %v230
    %v980 = vunpack.c.h.b16 %v230
    %v981 = vunpack.c.l.b16 %v231
    %v982 = vunpack.c.h.b16 %v231
    %v983 = vunpack.c.l.b16 %v232
    %v984 = vunpack.c.h.b16 %v232
    %v985 = vunpack.c.l.b16 %v233
    %v986 = vunpack.c.h.b16 %v233
    %v987 = vunpack.c.l.b16 %v234
    %v988 = vunpack.c.h.b16 %v234
    %v989 = vunpack.c.l.b16 %v235
    %v990 = vunpack.c.h.b16 %v235
    %v991 = vunpack.c.l.b16 %v236
    %v992 = vunpack.c.h.b16 %v236
    %v993 = vunpack.c.l.b16 %v237
    %v994 = vunpack.c.h.b16 %v237
    %v995 = vunpack.c.l.b16 %v238
    %v996 = vunpack.c.h.b16 %v238
    %v997 = vunpack.c.l.b16 %v239
    %v998 = vunpack.c.h.b16 %v239
    %v999 = vunpack.c.l.b16 %v240
    %v1000 = vunpack.c.h.b16 %v240
    %v1001 = vunpack.c.l.b16 %v241
    %v1002 = vunpack.c.h.b16 %v241
    %v1003 = vunpack.c.l.b16 %v242
    %v1004 = vunpack.c.h.b16 %v242
    %v1005 = vunpack.c.l.b16 %v243
    %v1006 = vunpack.c.h.b16 %v243
    %v1007 = vunpack.c.l.b16 %v244
    %v1008 = vunpack.c.h.b16 %v244
    %v1009 = vunpack.c.l.b16 %v245
    %v1010 = vunpack.c.h.b16 %v245
    %v1011 = vunpack.c.l.b16 %v246
    %v1012 = vunpack.c.h.b16 %v246
    %v1013 = vunpack.c.l.b16 %v247
    %v1014 = vunpack.c.h.b16 %v247
    %v1015 = vunpack.c.l.b16 %v248
    %v1016 = vunpack.c.h.b16 %v248
    %v1017 = vunpack.c.l.b16 %v249
    %v1018 = vunpack.c.h.b16 %v249
    %v1019 = vunpack.c.l.b16 %v250
    %v1020 = vunpack.c.h.b16 %v250
    %v1021 = vunpack.c.l.b16 %v251
    %v1022 = vunpack.c.h.b16 %v251
    %v1023 = vunpack.c.l.b16 %v252
    %v1024 = vunpack.c.h.b16 %v252
    %v1025 = vunpack.c.l.b16 %v253
    %v1026 = vunpack.c.h.b16 %v253
    %v1027 = vunpack.c.l.b16 %v254
    %v1028 = vunpack.c.h.b16 %v254
    %v1029 = vunpack.c.l.b16 %v255
    %v1030 = vunpack.c.h.b16 %v255
    %v1031 = vunpack.c.l.b16 %v256
    %v1032 = vunpack.c.h.b16 %v256
    %v1033 = vunpack.c.l.b16 %v257
    %v1034 = vunpack.c.h.b16 %v257
    %v1035 = vunpack.c.l.b16 %v258
    %v1036 = vunpack.c.h.b16 %v258
    %v1037 = vunpack.c.l.b16 %v259
    %v1038 = vunpack.c.h.b16 %v259
    %v1039 = vunpack.c.l.b16 %v260
    %v1040 = vunpack.c.h.b16 %v260
    %v1041 = vunpack.c.l.b16 %v261
    %v1042 = vunpack.c.h.b16 %v261
    %v1043 = vunpack.c.l.b16 %v262
    %v1044 = vunpack.c.h.b16 %v262
    %v1045 = vunpack.c.l.b16 %v263
    %v1046 = vunpack.c.h.b16 %v263
    %v1047 = vunpack.c.l.b16 %v264
    %v1048 = vunpack.c.h.b16 %v264
    %v1049 = vunpack.c.l.b16 %v265
    %v1050 = vunpack.c.h.b16 %v265
    %v1051 = vunpack.c.l.b16 %v266
    %v1052 = vunpack.c.h.b16 %v266
    %v1053 = vunpack.c.l.b16 %v267
    %v1054 = vunpack.c.h.b16 %v267
    %v1055 = vunpack.c.l.b16 %v268
    %v1056 = vunpack.c.h.b16 %v268
    %v1057 = vunpack.c.l.b16 %v269
    %v1058 = vunpack.c.h.b16 %v269
    %v1059 = vunpack.c.l.b16 %v270
    %v1060 = vunpack.c.h.b16 %v270
    %v1061 = vunpack.c.l.b16 %v271
    %v1062 = vunpack.c.h.b16 %v271
    %v1063 = vunpack.c.l.b16 %v272
    %v1064 = vunpack.c.h.b16 %v272
    %v1065 = vunpack.c.l.b16 %v273
    %v1066 = vunpack.c.h.b16 %v273
    %v1067 = vunpack.c.l.b16 %v274
    %v1068 = vunpack.c.h.b16 %v274
    %v1069 = vunpack.c.l.b16 %v275
    %v1070 = vunpack.c.h.b16 %v275
    %v1071 = vunpack.c.l.b16 %v276
    %v1072 = vunpack.c.h.b16 %v276
    %v1073 = vunpack.c.l.b16 %v277
    %v1074 = vunpack.c.h.b16 %v277
    %v1075 = vunpack.c.l.b16 %v278
    %v1076 = vunpack.c.h.b16 %v278
    %v1077 = vunpack.c.l.b16 %v279
    %v1078 = vunpack.c.h.b16 %v279
    %v1079 = vunpack.c.l.b16 %v280
    %v1080 = vunpack.c.h.b16 %v280
    %v1081 = vunpack.c.l.b16 %v281
    %v1082 = vunpack.c.h.b16 %v281
    %v1083 = vunpack.c.l.b16 %v282
    %v1084 = vunpack.c.h.b16 %v282
    %v1085 = vunpack.c.l.b16 %v283
    %v1086 = vunpack.c.h.b16 %v283
    %v1087 = vunpack.c.l.b16 %v284
    %v1088 = vunpack.c.h.b16 %v284
    %v1089 = vunpack.c.l.b16 %v285
    %v1090 = vunpack.c.h.b16 %v285
    %v1091 = vunpack.c.l.b16 %v286
    %v1092 = vunpack.c.h.b16 %v286
    %v1093 = vunpack.c.l.b16 %v287
    %v1094 = vunpack.c.h.b16 %v287
    %v1095 = vunpack.c.l.b16 %v288
    %v1096 = vunpack.c.h.b16 %v288
    %v1097 = vunpack.c.l.b16 %v289
    %v1098 = vunpack.c.h.b16 %v289
    %v1099 = vunpack.c.l.b16 %v290
    %v1100 = vunpack.c.h.b16 %v290
    %v1101 = vunpack.c.l.b16 %v291
    %v1102 = vunpack.c.h.b16 %v291
    %v1103 = vunpack.c.l.b16 %v292
    %v1104 = vunpack.c.h.b16 %v292
    %v1105 = vunpack.c.l.b16 %v293
    %v1106 = vunpack.c.h.b16 %v293
    %v1107 = vunpack.c.l.b16 %v294
    %v1108 = vunpack.c.h.b16 %v294
    %v1109 = vunpack.c.l.b16 %v295
    %v1110 = vunpack.c.h.b16 %v295
    %v1111 = vunpack.c.l.b16 %v296
    %v1112 = vunpack.c.h.b16 %v296
    %v1113 = vunpack.c.l.b16 %v297
    %v1114 = vunpack.c.h.b16 %v297
    %v1115 = vunpack.c.l.b16 %v298
    %v1116 = vunpack.c.h.b16 %v298
    %v1117 = vunpack.c.l.b16 %v299
    %v1118 = vunpack.c.h.b16 %v299
    %v1119 = vunpack.c.l.b16 %v300
    %v1120 = vunpack.c.h.b16 %v300
    %v1121 = vunpack.c.l.b16 %v301
    %v1122 = vunpack.c.h.b16 %v301
    %v1123 = vunpack.c.l.b16 %v302
    %v1124 = vunpack.c.h.b16 %v302
    %v1125 = vunpack.c.l.b16 %v303
    %v1126 = vunpack.c.h.b16 %v303
    %v1127 = vunpack.c.l.b16 %v304
    %v1128 = vunpack.c.h.b16 %v304
    %v1129 = vunpack.c.l.b16 %v305
    %v1130 = vunpack.c.h.b16 %v305
    %v1131 = vunpack.c.l.b16 %v306
    %v1132 = vunpack.c.h.b16 %v306
    %v1133 = vunpack.c.l.b16 %v307
    %v1134 = vunpack.c.h.b16 %v307
    %v1135 = vunpack.c.l.b16 %v308
    %v1136 = vunpack.c.h.b16 %v308
    %v1137 = vunpack.c.l.b16 %v309
    %v1138 = vunpack.c.h.b16 %v309
    %v1139 = vunpack.c.l.b16 %v310
    %v1140 = vunpack.c.h.b16 %v310
    %v1141 = vunpack.c.l.b16 %v311
    %v1142 = vunpack.c.h.b16 %v311
    %v1143 = vunpack.c.l.b16 %v312
    %v1144 = vunpack.c.h.b16 %v312
    %v1145 = vunpack.c.l.b16 %v313
    %v1146 = vunpack.c.h.b16 %v313
    %v1147 = vunpack.c.l.b16 %v314
    %v1148 = vunpack.c.h.b16 %v314
    %v1149 = vunpack.c.l.b16 %v315
    %v1150 = vunpack.c.h.b16 %v315
    %v1151 = vunpack.c.l.b16 %v316
    %v1152 = vunpack.c.h.b16 %v316
    %v1153 = vunpack.c.l.b16 %v317
    %v1154 = vunpack.c.h.b16 %v317
    %v1155 = vunpack.c.l.b16 %v318
    %v1156 = vunpack.c.h.b16 %v318
    %v1157 = vunpack.c.l.b16 %v319
    %v1158 = vunpack.c.h.b16 %v319
    %v1159 = vunpack.c.l.b16 %v320
    %v1160 = vunpack.c.h.b16 %v320
    %v1161 = vunpack.c.l.b16 %v321
    %v1162 = vunpack.c.h.b16 %v321
    %v1163 = vunpack.c.l.b16 %v322
    %v1164 = vunpack.c.h.b16 %v322
    %v1165 = vunpack.c.l.b16 %v323
    %v1166 = vunpack.c.h.b16 %v323
    %v1167 = vunpack.c.l.b16 %v324
    %v1168 = vunpack.c.h.b16 %v324
    %v1169 = vunpack.c.l.b16 %v325
    %v1170 = vunpack.c.h.b16 %v325
    %v1171 = vunpack.c.l.b16 %v326
    %v1172 = vunpack.c.h.b16 %v326
    %v1173 = vunpack.c.l.b16 %v327
    %v1174 = vunpack.c.h.b16 %v327
    %v1175 = vunpack.c.l.b16 %v328
    %v1176 = vunpack.c.h.b16 %v328
    %v1177 = vunpack.c.l.b16 %v329
    %v1178 = vunpack.c.h.b16 %v329
    %v1179 = vunpack.c.l.b16 %v330
    %v1180 = vunpack.c.h.b16 %v330
    %v1181 = vunpack.c.l.b16 %v331
    %v1182 = vunpack.c.h.b16 %v331
    %v1183 = vunpack.c.l.b16 %v332
    %v1184 = vunpack.c.h.b16 %v332
    %v1185 = vunpack.c.l.b16 %v333
    %v1186 = vunpack.c.h.b16 %v333
    %v1187 = vunpack.c.l.b16 %v334
    %v1188 = vunpack.c.h.b16 %v334
    %v1189 = vunpack.c.l.b16 %v335
    %v1190 = vunpack.c.h.b16 %v335
    %v1191 = vunpack.c.l.b16 %v336
    %v1192 = vunpack.c.h.b16 %v336
    %v1193 = vunpack.c.l.b16 %v337
    %v1194 = vunpack.c.h.b16 %v337
    %v1195 = vunpack.c.l.b16 %v338
    %v1196 = vunpack.c.h.b16 %v338
    %v1197 = vunpack.c.l.b16 %v339
    %v1198 = vunpack.c.h.b16 %v339
    %v1199 = vunpack.c.l.b16 %v340
    %v1200 = vunpack.c.h.b16 %v340
    %v1201 = vunpack.c.l.b16 %v341
    %v1202 = vunpack.c.h.b16 %v341
    %v1203 = vunpack.c.l.b16 %v342
    %v1204 = vunpack.c.h.b16 %v342
    %v1205 = vunpack.c.l.b16 %v343
    %v1206 = vunpack.c.h.b16 %v343
    %v1207 = vunpack.c.l.b16 %v344
    %v1208 = vunpack.c.h.b16 %v344
    %v1209 = vunpack.c.l.b16 %v345
    %v1210 = vunpack.c.h.b16 %v345
    %v1211 = vunpack.c.l.b16 %v346
    %v1212 = vunpack.c.h.b16 %v346
    %v1213 = vunpack.c.l.b16 %v347
    %v1214 = vunpack.c.h.b16 %v347
    %v1215 = vunpack.c.l.b16 %v348
    %v1216 = vunpack.c.h.b16 %v348
    %v1217 = vunpack.c.l.b16 %v349
    %v1218 = vunpack.c.h.b16 %v349
    %v1219 = vunpack.c.l.b16 %v350
    %v1220 = vunpack.c.h.b16 %v350
    %v1221 = vunpack.c.l.b16 %v351
    %v1222 = vunpack.c.h.b16 %v351
    %v1223 = vunpack.c.l.b16 %v352
    %v1224 = vunpack.c.h.b16 %v352
    %v1225 = vunpack.c.l.b16 %v353
    %v1226 = vunpack.c.h.b16 %v353
    %v1227 = vunpack.c.l.b16 %v354
    %v1228 = vunpack.c.h.b16 %v354
    %v1229 = vunpack.c.l.b16 %v355
    %v1230 = vunpack.c.h.b16 %v355
    %v1231 = vunpack.c.l.b16 %v356
    %v1232 = vunpack.c.h.b16 %v356
    %v1233 = vunpack.c.l.b16 %v357
    %v1234 = vunpack.c.h.b16 %v357
    %v1235 = vunpack.c.l.b16 %v358
    %v1236 = vunpack.c.h.b16 %v358
    %v1237 = vunpack.c.l.b16 %v359
    %v1238 = vunpack.c.h.b16 %v359
    %v1239 = vunpack.c.l.b16 %v360
    %v1240 = vunpack.c.h.b16 %v360
    %v1241 = vunpack.c.l.b16 %v361
    %v1242 = vunpack.c.h.b16 %v361
    %v1243 = vunpack.c.l.b16 %v362
    %v1244 = vunpack.c.h.b16 %v362
    %v1245 = vunpack.c.l.b16 %v363
    %v1246 = vunpack.c.h.b16 %v363
    %v1247 = vunpack.c.l.b16 %v364
    %v1248 = vunpack.c.h.b16 %v364
    %v1249 = vunpack.c.l.b16 %v365
    %v1250 = vunpack.c.h.b16 %v365
    %v1251 = vunpack.c.l.b16 %v366
    %v1252 = vunpack.c.h.b16 %v366
    %v1253 = vunpack.c.l.b16 %v367
    %v1254 = vunpack.c.h.b16 %v367
    %v1255 = vunpack.c.l.b16 %v368
    %v1256 = vunpack.c.h.b16 %v368
    %v1257 = vunpack.c.l.b16 %v369
    %v1258 = vunpack.c.h.b16 %v369
    %v1259 = vunpack.c.l.b16 %v370
    %v1260 = vunpack.c.h.b16 %v370
    %v1261 = vunpack.c.l.b16 %v371
    %v1262 = vunpack.c.h.b16 %v371
    %v1263 = vunpack.c.l.b16 %v372
    %v1264 = vunpack.c.h.b16 %v372
    %v1265 = vunpack.c.l.b16 %v373
    %v1266 = vunpack.c.h.b16 %v373
    %v1267 = vunpack.c.l.b16 %v374
    %v1268 = vunpack.c.h.b16 %v374
    %v1269 = vunpack.c.l.b16 %v375
    %v1270 = vunpack.c.h.b16 %v375
    %v1271 = vunpack.c.l.b16 %v376
    %v1272 = vunpack.c.h.b16 %v376
    %v1273 = vunpack.c.l.b16 %v377
    %v1274 = vunpack.c.h.b16 %v377
    %v1275 = vunpack.c.l.b16 %v378
    %v1276 = vunpack.c.h.b16 %v378
    %v1277 = vunpack.c.l.b16 %v379
    %v1278 = vunpack.c.h.b16 %v379
    %v1279 = vunpack.c.l.b16 %v380
    %v1280 = vunpack.c.h.b16 %v380
    %v1281 = vunpack.c.l.b16 %v381
    %v1282 = vunpack.c.h.b16 %v381
    %v1283 = vunpack.c.l.b16 %v382
    %v1284 = vunpack.c.h.b16 %v382
    %v1285 = vunpack.c.l.b16 %v383
    %v1286 = vunpack.c.h.b16 %v383
    %v1287 = vunpack.c.l.b16 %v384
    %v1288 = vunpack.c.h.b16 %v384
    %v1289 = vunpack.c.l.b16 %v385
    %v1290 = vunpack.c.h.b16 %v385
    %v1291 = vunpack.c.l.b16 %v386
    %v1292 = vunpack.c.h.b16 %v386
    %v1293 = vunpack.c.l.b16 %v387
    %v1294 = vunpack.c.h.b16 %v387
    %v1295 = vunpack.c.l.b16 %v388
    %v1296 = vunpack.c.h.b16 %v388
    %v1297 = vpack.c.b16 %v733, %v721
    %v1298 = vpack.c.b16 %v734, %v722
    %v1299 = vpack.c.b16 %v735, %v723
    %v1300 = vpack.c.b16 %v736, %v724
    %v1301 = vpack.c.b16 %v737, %v725
    %v1302 = vpack.c.b16 %v738, %v726
    %v1303 = vpack.c.b16 %v739, %v727
    %v1304 = vpack.c.b16 %v740, %v728
    %v1305 = vpack.c.b16 %v741, %v729
    %v1306 = vpack.c.b16 %v742, %v730
    %v1307 = vpack.c.b16 %v743, %v731
    %v1308 = vpack.c.b16 %v744, %v732
    %v1309 = vpack.c.b16 %v757, %v745
    %v1310 = vpack.c.b16 %v758, %v746
    %v1311 = vpack.c.b16 %v759, %v747
    %v1312 = vpack.c.b16 %v760, %v748
    %v1313 = vpack.c.b16 %v761, %v749
    %v1314 = vpack.c.b16 %v762, %v750
    %v1315 = vpack.c.b16 %v763, %v751
    %v1316 = vpack.c.b16 %v764, %v752
    %v1317 = vpack.c.b16 %v765, %v753
    %v1318 = vpack.c.b16 %v766, %v754
    %v1319 = vpack.c.b16 %v767, %v755
    %v1320 = vpack.c.b16 %v768, %v756
    %v1321 = vpack.c.b16 %v781, %v769
    %v1322 = vpack.c.b16 %v782, %v770
    %v1323 = vpack.c.b16 %v783, %v771
    %v1324 = vpack.c.b16 %v784, %v772
    %v1325 = vpack.c.b16 %v785, %v773
    %v1326 = vpack.c.b16 %v786, %v774
    %v1327 = vpack.c.b16 %v787, %v775
    %v1328 = vpack.c.b16 %v788, %v776
    %v1329 = vpack.c.b16 %v789, %v777
    %v1330 = vpack.c.b16 %v790, %v778
    %v1331 = vpack.c.b16 %v791, %v779
    %v1332 = vpack.c.b16 %v792, %v780
    %v1333 = vpack.c.b16 %v805, %v793
    %v1334 = vpack.c.b16 %v806, %v794
    %v1335 = vpack.c.b16 %v807, %v795
    %v1336 = vpack.c.b16 %v808, %v796
    %v1337 = vpack.c.b16 %v809, %v797
    %v1338 = vpack.c.b16 %v810, %v798
    %v1339 = vpack.c.b16 %v811, %v799
    %v1340 = vpack.c.b16 %v812, %v800
    %v1341 = vpack.c.b16 %v813, %v801
    %v1342 = vpack.c.b16 %v814, %v802
    %v1343 = vpack.c.b16 %v815, %v803
    %v1344 = vpack.c.b16 %v816, %v804
    %v1345 = vpack.c.b16 %v829, %v817
    %v1346 = vpack.c.b16 %v830, %v818
    %v1347 = vpack.c.b16 %v831, %v819
    %v1348 = vpack.c.b16 %v832, %v820
    %v1349 = vpack.c.b16 %v833, %v821
    %v1350 = vpack.c.b16 %v834, %v822
    %v1351 = vpack.c.b16 %v835, %v823
    %v1352 = vpack.c.b16 %v836, %v824
    %v1353 = vpack.c.b16 %v837, %v825
    %v1354 = vpack.c.b16 %v838, %v826
    %v1355 = vpack.c.b16 %v839, %v827
    %v1356 = vpack.c.b16 %v840, %v828
    %v1357 = vpack.c.b16 %v853, %v841
    %v1358 = vpack.c.b16 %v854, %v842
    %v1359 = vpack.c.b16 %v855, %v843
    %v1360 = vpack.c.b16 %v856, %v844
    %v1361 = vpack.c.b16 %v857, %v845
    %v1362 = vpack.c.b16 %v858, %v846
    %v1363 = vpack.c.b16 %v859, %v847
    %v1364 = vpack.c.b16 %v860, %v848
    %v1365 = vpack.c.b16 %v861, %v849
    %v1366 = vpack.c.b16 %v862, %v850
    %v1367 = vpack.c.b16 %v863, %v851
    %v1368 = vpack.c.b16 %v864, %v852
    %v1369 = vpack.c.b16 %v877, %v865
    %v1370 = vpack.c.b16 %v878, %v866
    %v1371 = vpack.c.b16 %v879, %v867
    %v1372 = vpack.c.b16 %v880, %v868
    %v1373 = vpack.c.b16 %v881, %v869
    %v1374 = vpack.c.b16 %v882, %v870
    %v1375 = vpack.c.b16 %v883, %v871
    %v1376 = vpack.c.b16 %v884, %v872
    %v1377 = vpack.c.b16 %v885, %v873
    %v1378 = vpack.c.b16 %v886, %v874
    %v1379 = vpack.c.b16 %v887, %v875
    %v1380 = vpack.c.b16 %v888, %v876
    %v1381 = vpack.c.b16 %v901, %v889
    %v1382 = vpack.c.b16 %v902, %v890
    %v1383 = vpack.c.b16 %v903, %v891
    %v1384 = vpack.c.b16 %v904, %v892
    %v1385 = vpack.c.b16 %v905, %v893
    %v1386 = vpack.c.b16 %v906, %v894
    %v1387 = vpack.c.b16 %v907, %v895
    %v1388 = vpack.c.b16 %v908, %v896
    %v1389 = vpack.c.b16 %v909, %v897
    %v1390 = vpack.c.b16 %v910, %v898
    %v1391 = vpack.c.b16 %v911, %v899
    %v1392 = vpack.c.b16 %v912, %v900
    %v1393 = vpack.c.b16 %v925, %v913
    %v1394 = vpack.c.b16 %v926, %v914
    %v1395 = vpack.c.b16 %v927, %v915
    %v1396 = vpack.c.b16 %v928, %v916
    %v1397 = vpack.c.b16 %v929, %v917
    %v1398 = vpack.c.b16 %v930, %v918
    %v1399 = vpack.c.b16 %v931, %v919
    %v1400 = vpack.c.b16 %v932, %v920
    %v1401 = vpack.c.b16 %v933, %v921
    %v1402 = vpack.c.b16 %v934, %v922
    %v1403 = vpack.c.b16 %v935, %v923
    %v1404 = vpack.c.b16 %v936, %v924
    %v1405 = vpack.c.b16 %v949, %v937
    %v1406 = vpack.c.b16 %v950, %v938
    %v1407 = vpack.c.b16 %v951, %v939
    %v1408 = vpack.c.b16 %v952, %v940
    %v1409 = vpack.c.b16 %v953, %v941
    %v1410 = vpack.c.b16 %v954, %v942
    %v1411 = vpack.c.b16 %v955, %v943
    %v1412 = vpack.c.b16 %v956, %v944
    %v1413 = vpack.c.b16 %v957, %v945
    %v1414 = vpack.c.b16 %v958, %v946
    %v1415 = vpack.c.b16 %v959, %v947
    %v1416 = vpack.c.b16 %v960, %v948
    %v1417 = vpack.c.b16 %v973, %v961
    %v1418 = vpack.c.b16 %v974, %v962
    %v1419 = vpack.c.b16 %v975, %v963
    %v1420 = vpack.c.b16 %v976, %v964
    %v1421 = vpack.c.b16 %v977, %v965
    %v1422 = vpack.c.b16 %v978, %v966
    %v1423 = vpack.c.b16 %v979, %v967
    %v1424 = vpack.c.b16 %v980, %v968
    %v1425 = vpack.c.b16 %v981, %v969
    %v1426 = vpack.c.b16 %v982, %v970
    %v1427 = vpack.c.b16 %v983, %v971
    %v1428 = vpack.c.b16 %v984, %v972
    %v1429 = vpack.c.b16 %v997, %v985
    %v1430 = vpack.c.b16 %v998, %v986
    %v1431 = vpack.c.b16 %v999, %v987
    %v1432 = vpack.c.b16 %v1000, %v988
    %v1433 = vpack.c.b16 %v1001, %v989
    %v1434 = vpack.c.b16 %v1002, %v990
    %v1435 = vpack.c.b16 %v1003, %v991
    %v1436 = vpack.c.b16 %v1004, %v992
    %v1437 = vpack.c.b16 %v1005, %v993
    %v1438 = vpack.c.b16 %v1006, %v994
    %v1439 = vpack.c.b16 %v1007, %v995
    %v1440 = vpack.c.b16 %v1008, %v996
    %v1441 = vpack.c.b16 %v1021, %v1009
    %v1442 = vpack.c.b16 %v1022, %v1010
    %v1443 = vpack.c.b16 %v1023, %v1011
    %v1444 = vpack.c.b16 %v1024, %v1012
    %v1445 = vpack.c.b16 %v1025, %v1013
    %v1446 = vpack.c.b16 %v1026, %v1014
    %v1447 = vpack.c.b16 %v1027, %v1015
    %v1448 = vpack.c.b16 %v1028, %v1016
    %v1449 = vpack.c.b16 %v1029, %v1017
    %v1450 = vpack.c.b16 %v1030, %v1018
    %v1451 = vpack.c.b16 %v1031, %v1019
    %v1452 = vpack.c.b16 %v1032, %v1020
    %v1453 = vpack.c.b16 %v1045, %v1033
    %v1454 = vpack.c.b16 %v1046, %v1034
    %v1455 = vpack.c.b16 %v1047, %v1035
    %v1456 = vpack.c.b16 %v1048, %v1036
    %v1457 = vpack.c.b16 %v1049, %v1037
    %v1458 = vpack.c.b16 %v1050, %v1038
    %v1459 = vpack.c.b16 %v1051, %v1039
    %v1460 = vpack.c.b16 %v1052, %v1040
    %v1461 = vpack.c.b16 %v1053, %v1041
    %v1462 = vpack.c.b16 %v1054, %v1042
    %v1463 = vpack.c.b16 %v1055, %v1043
    %v1464 = vpack.c.b16 %v1056, %v1044
    %v1465 = vpack.c.b16 %v1069, %v1057
    %v1466 = vpack.c.b16 %v1070, %v1058
    %v1467 = vpack.c.b16 %v1071, %v1059
    %v1468 = vpack.c.b16 %v1072, %v1060
    %v1469 = vpack.c.b16 %v1073, %v1061
    %v1470 = vpack.c.b16 %v1074, %v1062
    %v1471 = vpack.c.b16 %v1075, %v1063
    %v1472 = vpack.c.b16 %v1076, %v1064
    %v1473 = vpack.c.b16 %v1077, %v1065
    %v1474 = vpack.c.b16 %v1078, %v1066
    %v1475 = vpack.c.b16 %v1079, %v1067
    %v1476 = vpack.c.b16 %v1080, %v1068
    %v1477 = vpack.c.b16 %v1093, %v1081
    %v1478 = vpack.c.b16 %v1094, %v1082
    %v1479 = vpack.c.b16 %v1095, %v1083
    %v1480 = vpack.c.b16 %v1096, %v1084
    %v1481 = vpack.c.b16 %v1097, %v1085
    %v1482 = vpack.c.b16 %v1098, %v1086
    %v1483 = vpack.c.b16 %v1099, %v1087
    %v1484 = vpack.c.b16 %v1100, %v1088
    %v1485 = vpack.c.b16 %v1101, %v1089
    %v1486 = vpack.c.b16 %v1102, %v1090
    %v1487 = vpack.c.b16 %v1103, %v1091
    %v1488 = vpack.c.b16 %v1104, %v1092
    %v1489 = vpack.c.b16 %v1117, %v1105
    %v1490 = vpack.c.b16 %v1118, %v1106
    %v1491 = vpack.c.b16 %v1119, %v1107
    %v1492 = vpack.c.b16 %v1120, %v1108
    %v1493 = vpack.c.b16 %v1121, %v1109
    %v1494 = vpack.c.b16 %v1122, %v1110
    %v1495 = vpack.c.b16 %v1123, %v1111
    %v1496 = vpack.c.b16 %v1124, %v1112
    %v1497 = vpack.c.b16 %v1125, %v1113
    %v1498 = vpack.c.b16 %v1126, %v1114
    %v1499 = vpack.c.b16 %v1127, %v1115
    %v1500 = vpack.c.b16 %v1128, %v1116
    %v1501 = vpack.c.b16 %v1141, %v1129
    %v1502 = vpack.c.b16 %v1142, %v1130
    %v1503 = vpack.c.b16 %v1143, %v1131
    %v1504 = vpack.c.b16 %v1144, %v1132
    %v1505 = vpack.c.b16 %v1145, %v1133
    %v1506 = vpack.c.b16 %v1146, %v1134
    %v1507 = vpack.c.b16 %v1147, %v1135
    %v1508 = vpack.c.b16 %v1148, %v1136
    %v1509 = vpack.c.b16 %v1149, %v1137
    %v1510 = vpack.c.b16 %v1150, %v1138
    %v1511 = vpack.c.b16 %v1151, %v1139
    %v1512 = vpack.c.b16 %v1152, %v1140
    %v1513 = vpack.c.b16 %v1165, %v1153
    %v1514 = vpack.c.b16 %v1166, %v1154
    %v1515 = vpack.c.b16 %v1167, %v1155
    %v1516 = vpack.c.b16 %v1168, %v1156
    %v1517 = vpack.c.b16 %v1169, %v1157
    %v1518 = vpack.c.b16 %v1170, %v1158
    %v1519 = vpack.c.b16 %v1171, %v1159
    %v1520 = vpack.c.b16 %v1172, %v1160
    %v1521 = vpack.c.b16 %v1173, %v1161
    %v1522 = vpack.c.b16 %v1174, %v1162
    %v1523 = vpack.c.b16 %v1175, %v1163
    %v1524 = vpack.c.b16 %v1176, %v1164
    %v1525 = vpack.c.b16 %v1189, %v1177
    %v1526 = vpack.c.b16 %v1190, %v1178
    %v1527 = vpack.c.b16 %v1191, %v1179
    %v1528 = vpack.c.b16 %v1192, %v1180
    %v1529 = vpack.c.b16 %v1193, %v1181
    %v1530 = vpack.c.b16 %v1194, %v1182
    %v1531 = vpack.c.b16 %v1195, %v1183
    %v1532 = vpack.c.b16 %v1196, %v1184
    %v1533 = vpack.c.b16 %v1197, %v1185
    %v1534 = vpack.c.b16 %v1198, %v1186
    %v1535 = vpack.c.b16 %v1199, %v1187
    %v1536 = vpack.c.b16 %v1200, %v1188
    %v1537 = vpack.c.b16 %v1213, %v1201
    %v1538 = vpack.c.b16 %v1214, %v1202
    %v1539 = vpack.c.b16 %v1215, %v1203
    %v1540 = vpack.c.b16 %v1216, %v1204
    %v1541 = vpack.c.b16 %v1217, %v1205
    %v1542 = vpack.c.b16 %v1218, %v1206
    %v1543 = vpack.c.b16 %v1219, %v1207
    %v1544 = vpack.c.b16 %v1220, %v1208
    %v1545 = vpack.c.b16 %v1221, %v1209
    %v1546 = vpack.c.b16 %v1222, %v1210
    %v1547 = vpack.c.b16 %v1223, %v1211
    %v1548 = vpack.c.b16 %v1224, %v1212
    %v1549 = vpack.c.b16 %v1237, %v1225
    %v1550 = vpack.c.b16 %v1238, %v1226
    %v1551 = vpack.c.b16 %v1239, %v1227
    %v1552 = vpack.c.b16 %v1240, %v1228
    %v1553 = vpack.c.b16 %v1241, %v1229
    %v1554 = vpack.c.b16 %v1242, %v1230
    %v1555 = vpack.c.b16 %v1243, %v1231
    %v1556 = vpack.c.b16 %v1244, %v1232
    %v1557 = vpack.c.b16 %v1245, %v1233
    %v1558 = vpack.c.b16 %v1246, %v1234
    %v1559 = vpack.c.b16 %v1247, %v1235
    %v1560 = vpack.c.b16 %v1248, %v1236
    %v1561 = vpack.c.b16 %v1261, %v1249
    %v1562 = vpack.c.b16 %v1262, %v1250
    %v1563 = vpack.c.b16 %v1263, %v1251
    %v1564 = vpack.c.b16 %v1264, %v1252
    %v1565 = vpack.c.b16 %v1265, %v1253
    %v1566 = vpack.c.b16 %v1266, %v1254
    %v1567 = vpack.c.b16 %v1267, %v1255
    %v1568 = vpack.c.b16 %v1268, %v1256
    %v1569 = vpack.c.b16 %v1269, %v1257
    %v1570 = vpack.c.b16 %v1270, %v1258
    %v1571 = vpack.c.b16 %v1271, %v1259
    %v1572 = vpack.c.b16 %v1272, %v1260
    %v1573 = vpack.c.b16 %v1285, %v1273
    %v1574 = vpack.c.b16 %v1286, %v1274
    %v1575 = vpack.c.b16 %v1287, %v1275
    %v1576 = vpack.c.b16 %v1288, %v1276
    %v1577 = vpack.c.b16 %v1289, %v1277
    %v1578 = vpack.c.b16 %v1290, %v1278
    %v1579 = vpack.c.b16 %v1291, %v1279
    %v1580 = vpack.c.b16 %v1292, %v1280
    %v1581 = vpack.c.b16 %v1293, %v1281
    %v1582 = vpack.c.b16 %v1294, %v1282
    %v1583 = vpack.c.b16 %v1295, %v1283
    %v1584 = vpack.c.b16 %v1296, %v1284
    %1873 = vmatpush.bf16.msra.mxu0 %v1381
    %1874 = vmatpush.bf16.msra.mxu0 %v1369
    %1875 = vmatpush.bf16.msra.mxu0 %v1357
    %1876 = vmatpush.bf16.msra.mxu0 %v1345
    %1877 = vmatpush.bf16.msra.mxu0 %v1333
    %1878 = vmatpush.bf16.msra.mxu0 %v1321
    %1879 = vmatpush.bf16.msra.mxu0 %v1309
    %1880 = vmatpush.bf16.msra.mxu0 %v1297
    %1881 = vmatmul.bf16.gmra.mxu0 %v427
    %v1882 = vpop.f32.mrf.mxu0
    %v1883 = vadd.f32 %v393, %v1882
    %v1884 = vpop.f32.mrf.mxu0
    %v1885 = vadd.f32 %v393, %v1884
    %1886 = vdwg.mxu0
    %1887 = vmatpush.bf16.msra.mxu0 %v1477
    %1888 = vmatpush.bf16.msra.mxu0 %v1465
    %1889 = vmatpush.bf16.msra.mxu0 %v1453
    %1890 = vmatpush.bf16.msra.mxu0 %v1441
    %1891 = vmatpush.bf16.msra.mxu0 %v1429
    %1892 = vmatpush.bf16.msra.mxu0 %v1417
    %1893 = vmatpush.bf16.msra.mxu0 %v1405
    %1894 = vmatpush.bf16.msra.mxu0 %v1393
    %1895 = vmatmul.bf16.gmra.mxu0 %v428
    %v1896 = vpop.f32.mrf.mxu0
    %v1897 = vadd.f32 %v1883, %v1896
    %v1898 = vpop.f32.mrf.mxu0
    %v1899 = vadd.f32 %v1885, %v1898
    %1900 = vdwg.mxu0
    %1901 = vmatpush.bf16.msra.mxu0 %v1573
    %1902 = vmatpush.bf16.msra.mxu0 %v1561
    %1903 = vmatpush.bf16.msra.mxu0 %v1549
    %1904 = vmatpush.bf16.msra.mxu0 %v1537
    %1905 = vmatpush.bf16.msra.mxu0 %v1525
    %1906 = vmatpush.bf16.msra.mxu0 %v1513
    %1907 = vmatpush.bf16.msra.mxu0 %v1501
    %1908 = vmatpush.bf16.msra.mxu0 %v1489
    %1909 = vmatmul.bf16.gmra.mxu0 %v429
    %v1910 = vpop.f32.mrf.mxu0
    %v1911 = vadd.f32 %v1897, %v1910
    %v1912 = vpop.f32.mrf.mxu0
    %v1913 = vadd.f32 %v1899, %v1912
    %1914 = vdwg.mxu0
    %1915 = vmatpush.bf16.msra.mxu0 %v1382
    %1916 = vmatpush.bf16.msra.mxu0 %v1370
    %1917 = vmatpush.bf16.msra.mxu0 %v1358
    %1918 = vmatpush.bf16.msra.mxu0 %v1346
    %1919 = vmatpush.bf16.msra.mxu0 %v1334
    %1920 = vmatpush.bf16.msra.mxu0 %v1322
    %1921 = vmatpush.bf16.msra.mxu0 %v1310
    %1922 = vmatpush.bf16.msra.mxu0 %v1298
    %1923 = vmatmul.bf16.gmra.mxu0 %v427
    %v1924 = vpop.f32.mrf.mxu0
    %v1925 = vadd.f32 %v394, %v1924
    %v1926 = vpop.f32.mrf.mxu0
    %v1927 = vadd.f32 %v394, %v1926
    %1928 = vdwg.mxu0
    %1929 = vmatpush.bf16.msra.mxu0 %v1478
    %1930 = vmatpush.bf16.msra.mxu0 %v1466
    %1931 = vmatpush.bf16.msra.mxu0 %v1454
    %1932 = vmatpush.bf16.msra.mxu0 %v1442
    %1933 = vmatpush.bf16.msra.mxu0 %v1430
    %1934 = vmatpush.bf16.msra.mxu0 %v1418
    %1935 = vmatpush.bf16.msra.mxu0 %v1406
    %1936 = vmatpush.bf16.msra.mxu0 %v1394
    %1937 = vmatmul.bf16.gmra.mxu0 %v428
    %v1938 = vpop.f32.mrf.mxu0
    %v1939 = vadd.f32 %v1925, %v1938
    %v1940 = vpop.f32.mrf.mxu0
    %v1941 = vadd.f32 %v1927, %v1940
    %1942 = vdwg.mxu0
    %1943 = vmatpush.bf16.msra.mxu0 %v1574
    %1944 = vmatpush.bf16.msra.mxu0 %v1562
    %1945 = vmatpush.bf16.msra.mxu0 %v1550
    %1946 = vmatpush.bf16.msra.mxu0 %v1538
    %1947 = vmatpush.bf16.msra.mxu0 %v1526
    %1948 = vmatpush.bf16.msra.mxu0 %v1514
    %1949 = vmatpush.bf16.msra.mxu0 %v1502
    %1950 = vmatpush.bf16.msra.mxu0 %v1490
    %1951 = vmatmul.bf16.gmra.mxu0 %v429
    %v1952 = vpop.f32.mrf.mxu0
    %v1953 = vadd.f32 %v1939, %v1952
    %v1954 = vpop.f32.mrf.mxu0
    %v1955 = vadd.f32 %v1941, %v1954
    %1956 = vdwg.mxu0
    %1957 = vmatpush.bf16.msra.mxu0 %v1383
    %1958 = vmatpush.bf16.msra.mxu0 %v1371
    %1959 = vmatpush.bf16.msra.mxu0 %v1359
    %1960 = vmatpush.bf16.msra.mxu0 %v1347
    %1961 = vmatpush.bf16.msra.mxu0 %v1335
    %1962 = vmatpush.bf16.msra.mxu0 %v1323
    %1963 = vmatpush.bf16.msra.mxu0 %v1311
    %1964 = vmatpush.bf16.msra.mxu0 %v1299
    %1965 = vmatmul.bf16.gmra.mxu0 %v427
    %v1966 = vpop.f32.mrf.mxu0
    %v1967 = vadd.f32 %v395, %v1966
    %v1968 = vpop.f32.mrf.mxu0
    %v1969 = vadd.f32 %v395, %v1968
    %1970 = vdwg.mxu0
    %1971 = vmatpush.bf16.msra.mxu0 %v1479
    %1972 = vmatpush.bf16.msra.mxu0 %v1467
    %1973 = vmatpush.bf16.msra.mxu0 %v1455
    %1974 = vmatpush.bf16.msra.mxu0 %v1443
    %1975 = vmatpush.bf16.msra.mxu0 %v1431
    %1976 = vmatpush.bf16.msra.mxu0 %v1419
    %1977 = vmatpush.bf16.msra.mxu0 %v1407
    %1978 = vmatpush.bf16.msra.mxu0 %v1395
    %1979 = vmatmul.bf16.gmra.mxu0 %v428
    %v1980 = vpop.f32.mrf.mxu0
    %v1981 = vadd.f32 %v1967, %v1980
    %v1982 = vpop.f32.mrf.mxu0
    %v1983 = vadd.f32 %v1969, %v1982
    %1984 = vdwg.mxu0
    %1985 = vmatpush.bf16.msra.mxu0 %v1575
    %1986 = vmatpush.bf16.msra.mxu0 %v1563
    %1987 = vmatpush.bf16.msra.mxu0 %v1551
    %1988 = vmatpush.bf16.msra.mxu0 %v1539
    %1989 = vmatpush.bf16.msra.mxu0 %v1527
    %1990 = vmatpush.bf16.msra.mxu0 %v1515
    %1991 = vmatpush.bf16.msra.mxu0 %v1503
    %1992 = vmatpush.bf16.msra.mxu0 %v1491
    %1993 = vmatmul.bf16.gmra.mxu0 %v429
    %v1994 = vpop.f32.mrf.mxu0
    %v1995 = vadd.f32 %v1981, %v1994
    %v1996 = vpop.f32.mrf.mxu0
    %v1997 = vadd.f32 %v1983, %v1996
    %1998 = vdwg.mxu0
    %1999 = vmatpush.bf16.msra.mxu0 %v1384
    %2000 = vmatpush.bf16.msra.mxu0 %v1372
    %2001 = vmatpush.bf16.msra.mxu0 %v1360
    %2002 = vmatpush.bf16.msra.mxu0 %v1348
    %2003 = vmatpush.bf16.msra.mxu0 %v1336
    %2004 = vmatpush.bf16.msra.mxu0 %v1324
    %2005 = vmatpush.bf16.msra.mxu0 %v1312
    %2006 = vmatpush.bf16.msra.mxu0 %v1300
    %2007 = vmatmul.bf16.gmra.mxu0 %v427
    %v2008 = vpop.f32.mrf.mxu0
    %v2009 = vadd.f32 %v396, %v2008
    %v2010 = vpop.f32.mrf.mxu0
    %v2011 = vadd.f32 %v396, %v2010
    %2012 = vdwg.mxu0
    %2013 = vmatpush.bf16.msra.mxu0 %v1480
    %2014 = vmatpush.bf16.msra.mxu0 %v1468
    %2015 = vmatpush.bf16.msra.mxu0 %v1456
    %2016 = vmatpush.bf16.msra.mxu0 %v1444
    %2017 = vmatpush.bf16.msra.mxu0 %v1432
    %2018 = vmatpush.bf16.msra.mxu0 %v1420
    %2019 = vmatpush.bf16.msra.mxu0 %v1408
    %2020 = vmatpush.bf16.msra.mxu0 %v1396
    %2021 = vmatmul.bf16.gmra.mxu0 %v428
    %v2022 = vpop.f32.mrf.mxu0
    %v2023 = vadd.f32 %v2009, %v2022
    %v2024 = vpop.f32.mrf.mxu0
    %v2025 = vadd.f32 %v2011, %v2024
    %2026 = vdwg.mxu0
    %2027 = vmatpush.bf16.msra.mxu0 %v1576
    %2028 = vmatpush.bf16.msra.mxu0 %v1564
    %2029 = vmatpush.bf16.msra.mxu0 %v1552
    %2030 = vmatpush.bf16.msra.mxu0 %v1540
    %2031 = vmatpush.bf16.msra.mxu0 %v1528
    %2032 = vmatpush.bf16.msra.mxu0 %v1516
    %2033 = vmatpush.bf16.msra.mxu0 %v1504
    %2034 = vmatpush.bf16.msra.mxu0 %v1492
    %2035 = vmatmul.bf16.gmra.mxu0 %v429
    %v2036 = vpop.f32.mrf.mxu0
    %v2037 = vadd.f32 %v2023, %v2036
    %v2038 = vpop.f32.mrf.mxu0
    %v2039 = vadd.f32 %v2025, %v2038
    %2040 = vdwg.mxu0
    %2041 = vmatpush.bf16.msra.mxu0 %v1385
    %2042 = vmatpush.bf16.msra.mxu0 %v1373
    %2043 = vmatpush.bf16.msra.mxu0 %v1361
    %2044 = vmatpush.bf16.msra.mxu0 %v1349
    %2045 = vmatpush.bf16.msra.mxu0 %v1337
    %2046 = vmatpush.bf16.msra.mxu0 %v1325
    %2047 = vmatpush.bf16.msra.mxu0 %v1313
    %2048 = vmatpush.bf16.msra.mxu0 %v1301
    %2049 = vmatmul.bf16.gmra.mxu0 %v427
    %v2050 = vpop.f32.mrf.mxu0
    %v2051 = vadd.f32 %v397, %v2050
    %v2052 = vpop.f32.mrf.mxu0
    %v2053 = vadd.f32 %v397, %v2052
    %2054 = vdwg.mxu0
    %2055 = vmatpush.bf16.msra.mxu0 %v1481
    %2056 = vmatpush.bf16.msra.mxu0 %v1469
    %2057 = vmatpush.bf16.msra.mxu0 %v1457
    %2058 = vmatpush.bf16.msra.mxu0 %v1445
    %2059 = vmatpush.bf16.msra.mxu0 %v1433
    %2060 = vmatpush.bf16.msra.mxu0 %v1421
    %2061 = vmatpush.bf16.msra.mxu0 %v1409
    %2062 = vmatpush.bf16.msra.mxu0 %v1397
    %2063 = vmatmul.bf16.gmra.mxu0 %v428
    %v2064 = vpop.f32.mrf.mxu0
    %v2065 = vadd.f32 %v2051, %v2064
    %v2066 = vpop.f32.mrf.mxu0
    %v2067 = vadd.f32 %v2053, %v2066
    %2068 = vdwg.mxu0
    %2069 = vmatpush.bf16.msra.mxu0 %v1577
    %2070 = vmatpush.bf16.msra.mxu0 %v1565
    %2071 = vmatpush.bf16.msra.mxu0 %v1553
    %2072 = vmatpush.bf16.msra.mxu0 %v1541
    %2073 = vmatpush.bf16.msra.mxu0 %v1529
    %2074 = vmatpush.bf16.msra.mxu0 %v1517
    %2075 = vmatpush.bf16.msra.mxu0 %v1505
    %2076 = vmatpush.bf16.msra.mxu0 %v1493
    %2077 = vmatmul.bf16.gmra.mxu0 %v429
    %v2078 = vpop.f32.mrf.mxu0
    %v2079 = vadd.f32 %v2065, %v2078
    %v2080 = vpop.f32.mrf.mxu0
    %v2081 = vadd.f32 %v2067, %v2080
    %2082 = vdwg.mxu0
    %2083 = vmatpush.bf16.msra.mxu0 %v1386
    %2084 = vmatpush.bf16.msra.mxu0 %v1374
    %2085 = vmatpush.bf16.msra.mxu0 %v1362
    %2086 = vmatpush.bf16.msra.mxu0 %v1350
    %2087 = vmatpush.bf16.msra.mxu0 %v1338
    %2088 = vmatpush.bf16.msra.mxu0 %v1326
    %2089 = vmatpush.bf16.msra.mxu0 %v1314
    %2090 = vmatpush.bf16.msra.mxu0 %v1302
    %2091 = vmatmul.bf16.gmra.mxu0 %v427
    %v2092 = vpop.f32.mrf.mxu0
    %v2093 = vadd.f32 %v398, %v2092
    %v2094 = vpop.f32.mrf.mxu0
    %v2095 = vadd.f32 %v398, %v2094
    %2096 = vdwg.mxu0
    %2097 = vmatpush.bf16.msra.mxu0 %v1482
    %2098 = vmatpush.bf16.msra.mxu0 %v1470
    %2099 = vmatpush.bf16.msra.mxu0 %v1458
    %2100 = vmatpush.bf16.msra.mxu0 %v1446
    %2101 = vmatpush.bf16.msra.mxu0 %v1434
    %2102 = vmatpush.bf16.msra.mxu0 %v1422
    %2103 = vmatpush.bf16.msra.mxu0 %v1410
    %2104 = vmatpush.bf16.msra.mxu0 %v1398
    %2105 = vmatmul.bf16.gmra.mxu0 %v428
    %v2106 = vpop.f32.mrf.mxu0
    %v2107 = vadd.f32 %v2093, %v2106
    %v2108 = vpop.f32.mrf.mxu0
    %v2109 = vadd.f32 %v2095, %v2108
    %2110 = vdwg.mxu0
    %2111 = vmatpush.bf16.msra.mxu0 %v1578
    %2112 = vmatpush.bf16.msra.mxu0 %v1566
    %2113 = vmatpush.bf16.msra.mxu0 %v1554
    %2114 = vmatpush.bf16.msra.mxu0 %v1542
    %2115 = vmatpush.bf16.msra.mxu0 %v1530
    %2116 = vmatpush.bf16.msra.mxu0 %v1518
    %2117 = vmatpush.bf16.msra.mxu0 %v1506
    %2118 = vmatpush.bf16.msra.mxu0 %v1494
    %2119 = vmatmul.bf16.gmra.mxu0 %v429
    %v2120 = vpop.f32.mrf.mxu0
    %v2121 = vadd.f32 %v2107, %v2120
    %v2122 = vpop.f32.mrf.mxu0
    %v2123 = vadd.f32 %v2109, %v2122
    %2124 = vdwg.mxu0
    %2125 = vmatpush.bf16.msra.mxu0 %v1387
    %2126 = vmatpush.bf16.msra.mxu0 %v1375
    %2127 = vmatpush.bf16.msra.mxu0 %v1363
    %2128 = vmatpush.bf16.msra.mxu0 %v1351
    %2129 = vmatpush.bf16.msra.mxu0 %v1339
    %2130 = vmatpush.bf16.msra.mxu0 %v1327
    %2131 = vmatpush.bf16.msra.mxu0 %v1315
    %2132 = vmatpush.bf16.msra.mxu0 %v1303
    %2133 = vmatmul.bf16.gmra.mxu0 %v427
    %v2134 = vpop.f32.mrf.mxu0
    %v2135 = vadd.f32 %v399, %v2134
    %v2136 = vpop.f32.mrf.mxu0
    %v2137 = vadd.f32 %v399, %v2136
    %2138 = vdwg.mxu0
    %2139 = vmatpush.bf16.msra.mxu0 %v1483
    %2140 = vmatpush.bf16.msra.mxu0 %v1471
    %2141 = vmatpush.bf16.msra.mxu0 %v1459
    %2142 = vmatpush.bf16.msra.mxu0 %v1447
    %2143 = vmatpush.bf16.msra.mxu0 %v1435
    %2144 = vmatpush.bf16.msra.mxu0 %v1423
    %2145 = vmatpush.bf16.msra.mxu0 %v1411
    %2146 = vmatpush.bf16.msra.mxu0 %v1399
    %2147 = vmatmul.bf16.gmra.mxu0 %v428
    %v2148 = vpop.f32.mrf.mxu0
    %v2149 = vadd.f32 %v2135, %v2148
    %v2150 = vpop.f32.mrf.mxu0
    %v2151 = vadd.f32 %v2137, %v2150
    %2152 = vdwg.mxu0
    %2153 = vmatpush.bf16.msra.mxu0 %v1579
    %2154 = vmatpush.bf16.msra.mxu0 %v1567
    %2155 = vmatpush.bf16.msra.mxu0 %v1555
    %2156 = vmatpush.bf16.msra.mxu0 %v1543
    %2157 = vmatpush.bf16.msra.mxu0 %v1531
    %2158 = vmatpush.bf16.msra.mxu0 %v1519
    %2159 = vmatpush.bf16.msra.mxu0 %v1507
    %2160 = vmatpush.bf16.msra.mxu0 %v1495
    %2161 = vmatmul.bf16.gmra.mxu0 %v429
    %v2162 = vpop.f32.mrf.mxu0
    %v2163 = vadd.f32 %v2149, %v2162
    %v2164 = vpop.f32.mrf.mxu0
    %v2165 = vadd.f32 %v2151, %v2164
    %2166 = vdwg.mxu0
    %2167 = vmatpush.bf16.msra.mxu0 %v1388
    %2168 = vmatpush.bf16.msra.mxu0 %v1376
    %2169 = vmatpush.bf16.msra.mxu0 %v1364
    %2170 = vmatpush.bf16.msra.mxu0 %v1352
    %2171 = vmatpush.bf16.msra.mxu0 %v1340
    %2172 = vmatpush.bf16.msra.mxu0 %v1328
    %2173 = vmatpush.bf16.msra.mxu0 %v1316
    %2174 = vmatpush.bf16.msra.mxu0 %v1304
    %2175 = vmatmul.bf16.gmra.mxu0 %v427
    %v2176 = vpop.f32.mrf.mxu0
    %v2177 = vadd.f32 %v400, %v2176
    %v2178 = vpop.f32.mrf.mxu0
    %v2179 = vadd.f32 %v400, %v2178
    %2180 = vdwg.mxu0
    %2181 = vmatpush.bf16.msra.mxu0 %v1484
    %2182 = vmatpush.bf16.msra.mxu0 %v1472
    %2183 = vmatpush.bf16.msra.mxu0 %v1460
    %2184 = vmatpush.bf16.msra.mxu0 %v1448
    %2185 = vmatpush.bf16.msra.mxu0 %v1436
    %2186 = vmatpush.bf16.msra.mxu0 %v1424
    %2187 = vmatpush.bf16.msra.mxu0 %v1412
    %2188 = vmatpush.bf16.msra.mxu0 %v1400
    %2189 = vmatmul.bf16.gmra.mxu0 %v428
    %v2190 = vpop.f32.mrf.mxu0
    %v2191 = vadd.f32 %v2177, %v2190
    %v2192 = vpop.f32.mrf.mxu0
    %v2193 = vadd.f32 %v2179, %v2192
    %2194 = vdwg.mxu0
    %2195 = vmatpush.bf16.msra.mxu0 %v1580
    %2196 = vmatpush.bf16.msra.mxu0 %v1568
    %2197 = vmatpush.bf16.msra.mxu0 %v1556
    %2198 = vmatpush.bf16.msra.mxu0 %v1544
    %2199 = vmatpush.bf16.msra.mxu0 %v1532
    %2200 = vmatpush.bf16.msra.mxu0 %v1520
    %2201 = vmatpush.bf16.msra.mxu0 %v1508
    %2202 = vmatpush.bf16.msra.mxu0 %v1496
    %2203 = vmatmul.bf16.gmra.mxu0 %v429
    %v2204 = vpop.f32.mrf.mxu0
    %v2205 = vadd.f32 %v2191, %v2204
    %v2206 = vpop.f32.mrf.mxu0
    %v2207 = vadd.f32 %v2193, %v2206
    %2208 = vdwg.mxu0
    %2209 = vmatpush.bf16.msra.mxu0 %v1389
    %2210 = vmatpush.bf16.msra.mxu0 %v1377
    %2211 = vmatpush.bf16.msra.mxu0 %v1365
    %2212 = vmatpush.bf16.msra.mxu0 %v1353
    %2213 = vmatpush.bf16.msra.mxu0 %v1341
    %2214 = vmatpush.bf16.msra.mxu0 %v1329
    %2215 = vmatpush.bf16.msra.mxu0 %v1317
    %2216 = vmatpush.bf16.msra.mxu0 %v1305
    %2217 = vmatmul.bf16.gmra.mxu0 %v427
    %v2218 = vpop.f32.mrf.mxu0
    %v2219 = vadd.f32 %v401, %v2218
    %v2220 = vpop.f32.mrf.mxu0
    %v2221 = vadd.f32 %v401, %v2220
    %2222 = vdwg.mxu0
    %2223 = vmatpush.bf16.msra.mxu0 %v1485
    %2224 = vmatpush.bf16.msra.mxu0 %v1473
    %2225 = vmatpush.bf16.msra.mxu0 %v1461
    %2226 = vmatpush.bf16.msra.mxu0 %v1449
    %2227 = vmatpush.bf16.msra.mxu0 %v1437
    %2228 = vmatpush.bf16.msra.mxu0 %v1425
    %2229 = vmatpush.bf16.msra.mxu0 %v1413
    %2230 = vmatpush.bf16.msra.mxu0 %v1401
    %2231 = vmatmul.bf16.gmra.mxu0 %v428
    %v2232 = vpop.f32.mrf.mxu0
    %v2233 = vadd.f32 %v2219, %v2232
    %v2234 = vpop.f32.mrf.mxu0
    %v2235 = vadd.f32 %v2221, %v2234
    %2236 = vdwg.mxu0
    %2237 = vmatpush.bf16.msra.mxu0 %v1581
    %2238 = vmatpush.bf16.msra.mxu0 %v1569
    %2239 = vmatpush.bf16.msra.mxu0 %v1557
    %2240 = vmatpush.bf16.msra.mxu0 %v1545
    %2241 = vmatpush.bf16.msra.mxu0 %v1533
    %2242 = vmatpush.bf16.msra.mxu0 %v1521
    %2243 = vmatpush.bf16.msra.mxu0 %v1509
    %2244 = vmatpush.bf16.msra.mxu0 %v1497
    %2245 = vmatmul.bf16.gmra.mxu0 %v429
    %v2246 = vpop.f32.mrf.mxu0
    %v2247 = vadd.f32 %v2233, %v2246
    %v2248 = vpop.f32.mrf.mxu0
    %v2249 = vadd.f32 %v2235, %v2248
    %2250 = vdwg.mxu0
    %2251 = vmatpush.bf16.msra.mxu0 %v1390
    %2252 = vmatpush.bf16.msra.mxu0 %v1378
    %2253 = vmatpush.bf16.msra.mxu0 %v1366
    %2254 = vmatpush.bf16.msra.mxu0 %v1354
    %2255 = vmatpush.bf16.msra.mxu0 %v1342
    %2256 = vmatpush.bf16.msra.mxu0 %v1330
    %2257 = vmatpush.bf16.msra.mxu0 %v1318
    %2258 = vmatpush.bf16.msra.mxu0 %v1306
    %2259 = vmatmul.bf16.gmra.mxu0 %v427
    %v2260 = vpop.f32.mrf.mxu0
    %v2261 = vadd.f32 %v402, %v2260
    %v2262 = vpop.f32.mrf.mxu0
    %v2263 = vadd.f32 %v402, %v2262
    %2264 = vdwg.mxu0
    %2265 = vmatpush.bf16.msra.mxu0 %v1486
    %2266 = vmatpush.bf16.msra.mxu0 %v1474
    %2267 = vmatpush.bf16.msra.mxu0 %v1462
    %2268 = vmatpush.bf16.msra.mxu0 %v1450
    %2269 = vmatpush.bf16.msra.mxu0 %v1438
    %2270 = vmatpush.bf16.msra.mxu0 %v1426
    %2271 = vmatpush.bf16.msra.mxu0 %v1414
    %2272 = vmatpush.bf16.msra.mxu0 %v1402
    %2273 = vmatmul.bf16.gmra.mxu0 %v428
    %v2274 = vpop.f32.mrf.mxu0
    %v2275 = vadd.f32 %v2261, %v2274
    %v2276 = vpop.f32.mrf.mxu0
    %v2277 = vadd.f32 %v2263, %v2276
    %2278 = vdwg.mxu0
    %2279 = vmatpush.bf16.msra.mxu0 %v1582
    %2280 = vmatpush.bf16.msra.mxu0 %v1570
    %2281 = vmatpush.bf16.msra.mxu0 %v1558
    %2282 = vmatpush.bf16.msra.mxu0 %v1546
    %2283 = vmatpush.bf16.msra.mxu0 %v1534
    %2284 = vmatpush.bf16.msra.mxu0 %v1522
    %2285 = vmatpush.bf16.msra.mxu0 %v1510
    %2286 = vmatpush.bf16.msra.mxu0 %v1498
    %2287 = vmatmul.bf16.gmra.mxu0 %v429
    %v2288 = vpop.f32.mrf.mxu0
    %v2289 = vadd.f32 %v2275, %v2288
    %v2290 = vpop.f32.mrf.mxu0
    %v2291 = vadd.f32 %v2277, %v2290
    %2292 = vdwg.mxu0
    %2293 = vmatpush.bf16.msra.mxu0 %v1391
    %2294 = vmatpush.bf16.msra.mxu0 %v1379
    %2295 = vmatpush.bf16.msra.mxu0 %v1367
    %2296 = vmatpush.bf16.msra.mxu0 %v1355
    %2297 = vmatpush.bf16.msra.mxu0 %v1343
    %2298 = vmatpush.bf16.msra.mxu0 %v1331
    %2299 = vmatpush.bf16.msra.mxu0 %v1319
    %2300 = vmatpush.bf16.msra.mxu0 %v1307
    %2301 = vmatmul.bf16.gmra.mxu0 %v427
    %v2302 = vpop.f32.mrf.mxu0
    %v2303 = vadd.f32 %v403, %v2302
    %v2304 = vpop.f32.mrf.mxu0
    %v2305 = vadd.f32 %v403, %v2304
    %2306 = vdwg.mxu0
    %2307 = vmatpush.bf16.msra.mxu0 %v1487
    %2308 = vmatpush.bf16.msra.mxu0 %v1475
    %2309 = vmatpush.bf16.msra.mxu0 %v1463
    %2310 = vmatpush.bf16.msra.mxu0 %v1451
    %2311 = vmatpush.bf16.msra.mxu0 %v1439
    %2312 = vmatpush.bf16.msra.mxu0 %v1427
    %2313 = vmatpush.bf16.msra.mxu0 %v1415
    %2314 = vmatpush.bf16.msra.mxu0 %v1403
    %2315 = vmatmul.bf16.gmra.mxu0 %v428
    %v2316 = vpop.f32.mrf.mxu0
    %v2317 = vadd.f32 %v2303, %v2316
    %v2318 = vpop.f32.mrf.mxu0
    %v2319 = vadd.f32 %v2305, %v2318
    %2320 = vdwg.mxu0
    %2321 = vmatpush.bf16.msra.mxu0 %v1583
    %2322 = vmatpush.bf16.msra.mxu0 %v1571
    %2323 = vmatpush.bf16.msra.mxu0 %v1559
    %2324 = vmatpush.bf16.msra.mxu0 %v1547
    %2325 = vmatpush.bf16.msra.mxu0 %v1535
    %2326 = vmatpush.bf16.msra.mxu0 %v1523
    %2327 = vmatpush.bf16.msra.mxu0 %v1511
    %2328 = vmatpush.bf16.msra.mxu0 %v1499
    %2329 = vmatmul.bf16.gmra.mxu0 %v429
    %v2330 = vpop.f32.mrf.mxu0
    %v2331 = vadd.f32 %v2317, %v2330
    %v2332 = vpop.f32.mrf.mxu0
    %v2333 = vadd.f32 %v2319, %v2332
    %2334 = vdwg.mxu0
    %2335 = vmatpush.bf16.msra.mxu0 %v1392
    %2336 = vmatpush.bf16.msra.mxu0 %v1380
    %2337 = vmatpush.bf16.msra.mxu0 %v1368
    %2338 = vmatpush.bf16.msra.mxu0 %v1356
    %2339 = vmatpush.bf16.msra.mxu0 %v1344
    %2340 = vmatpush.bf16.msra.mxu0 %v1332
    %2341 = vmatpush.bf16.msra.mxu0 %v1320
    %2342 = vmatpush.bf16.msra.mxu0 %v1308
    %2343 = vmatmul.bf16.gmra.mxu0 %v427
    %v2344 = vpop.f32.mrf.mxu0
    %v2345 = vadd.f32 %v404, %v2344
    %v2346 = vpop.f32.mrf.mxu0
    %v2347 = vadd.f32 %v404, %v2346
    %2348 = vdwg.mxu0
    %2349 = vmatpush.bf16.msra.mxu0 %v1488
    %2350 = vmatpush.bf16.msra.mxu0 %v1476
    %2351 = vmatpush.bf16.msra.mxu0 %v1464
    %2352 = vmatpush.bf16.msra.mxu0 %v1452
    %2353 = vmatpush.bf16.msra.mxu0 %v1440
    %2354 = vmatpush.bf16.msra.mxu0 %v1428
    %2355 = vmatpush.bf16.msra.mxu0 %v1416
    %2356 = vmatpush.bf16.msra.mxu0 %v1404
    %2357 = vmatmul.bf16.gmra.mxu0 %v428
    %v2358 = vpop.f32.mrf.mxu0
    %v2359 = vadd.f32 %v2345, %v2358
    %v2360 = vpop.f32.mrf.mxu0
    %v2361 = vadd.f32 %v2347, %v2360
    %2362 = vdwg.mxu0
    %2363 = vmatpush.bf16.msra.mxu0 %v1584
    %2364 = vmatpush.bf16.msra.mxu0 %v1572
    %2365 = vmatpush.bf16.msra.mxu0 %v1560
    %2366 = vmatpush.bf16.msra.mxu0 %v1548
    %2367 = vmatpush.bf16.msra.mxu0 %v1536
    %2368 = vmatpush.bf16.msra.mxu0 %v1524
    %2369 = vmatpush.bf16.msra.mxu0 %v1512
    %2370 = vmatpush.bf16.msra.mxu0 %v1500
    %2371 = vmatmul.bf16.gmra.mxu0 %v429
    %v2372 = vpop.f32.mrf.mxu0
    %v2373 = vadd.f32 %v2359, %v2372
    %v2374 = vpop.f32.mrf.mxu0
    %v2375 = vadd.f32 %v2361, %v2374
    %2376 = vdwg.mxu0
    %v2377 = vmax.f32 %v1911, 0.0
    %v2378 = vmax.f32 %v1953, 0.0
    %v2379 = vmax.f32 %v1995, 0.0
    %v2380 = vmax.f32 %v2037, 0.0
    %v2381 = vmax.f32 %v2079, 0.0
    %v2382 = vmax.f32 %v2121, 0.0
    %v2383 = vmax.f32 %v2163, 0.0
    %v2384 = vmax.f32 %v2205, 0.0
    %v2385 = vmax.f32 %v2247, 0.0
    %v2386 = vmax.f32 %v2289, 0.0
    %v2387 = vmax.f32 %v2331, 0.0
    %v2388 = vmax.f32 %v2373, 0.0
    %v2389 = vmax.f32 %v1913, 0.0
    %v2390 = vmax.f32 %v1955, 0.0
    %v2391 = vmax.f32 %v1997, 0.0
    %v2392 = vmax.f32 %v2039, 0.0
    %v2393 = vmax.f32 %v2081, 0.0
    %v2394 = vmax.f32 %v2123, 0.0
    %v2395 = vmax.f32 %v2165, 0.0
    %v2396 = vmax.f32 %v2207, 0.0
    %v2397 = vmax.f32 %v2249, 0.0
    %v2398 = vmax.f32 %v2291, 0.0
    %v2399 = vmax.f32 %v2333, 0.0
    %v2400 = vmax.f32 %v2375, 0.0
    %v2401 = vpack.c.bf16 %v2389, %v2377
    %v2402 = vpack.c.bf16 %v2390, %v2378
    %v2403 = vpack.c.bf16 %v2391, %v2379
    %v2404 = vpack.c.bf16 %v2392, %v2380
    %v2405 = vpack.c.bf16 %v2393, %v2381
    %v2406 = vpack.c.bf16 %v2394, %v2382
    %v2407 = vpack.c.bf16 %v2395, %v2383
    %v2408 = vpack.c.bf16 %v2396, %v2384
    %v2409 = vpack.c.bf16 %v2397, %v2385
    %v2410 = vpack.c.bf16 %v2398, %v2386
    %v2411 = vpack.c.bf16 %v2399, %v2387
    %v2412 = vpack.c.bf16 %v2400, %v2388
    %v2413 = vld [vmem:[#allocation10] sm:$0xff]
    %v2414 = vld [vmem:[#allocation10 + $0x8] sm:$0xf]
    %v2415 = vld [vmem:[#allocation10 + $0xc] sm:$0xff]
    %v2416 = vld [vmem:[#allocation10 + $0x14] sm:$0xf]
    %v2417 = vld [vmem:[#allocation10 + $0x18] sm:$0xff]
    %v2418 = vld [vmem:[#allocation10 + $0x20] sm:$0xf]
    %v2419 = vld [vmem:[#allocation10 + $0x24] sm:$0xff]
    %v2420 = vld [vmem:[#allocation10 + $0x2c] sm:$0xf]
    %v2421 = vld [vmem:[#allocation10 + $0x30] sm:$0xff]
    %v2422 = vld [vmem:[#allocation10 + $0x38] sm:$0xf]
    %v2423 = vld [vmem:[#allocation10 + $0x3c] sm:$0xff]
    %v2424 = vld [vmem:[#allocation10 + $0x44] sm:$0xf]
    %v2425 = vld [vmem:[#allocation10 + $0x48] sm:$0xff]
    %v2426 = vld [vmem:[#allocation10 + $0x50] sm:$0xf]
    %v2427 = vld [vmem:[#allocation10 + $0x54] sm:$0xff]
    %v2428 = vld [vmem:[#allocation10 + $0x5c] sm:$0xf]
    %v2429 = vld [vmem:[#allocation10 + $0x60] sm:$0xff]
    %v2430 = vld [vmem:[#allocation10 + $0x68] sm:$0xf]
    %v2431 = vld [vmem:[#allocation10 + $0x6c] sm:$0xff]
    %v2432 = vld [vmem:[#allocation10 + $0x74] sm:$0xf]
    %v2433 = vld [vmem:[#allocation10 + $0x78] sm:$0xff]
    %v2434 = vld [vmem:[#allocation10 + $0x80] sm:$0xf]
    %v2435 = vld [vmem:[#allocation10 + $0x84] sm:$0xff]
    %v2436 = vld [vmem:[#allocation10 + $0x8c] sm:$0xf]
    %v2437 = vld [vmem:[#allocation10 + $0x90] sm:$0xff]
    %v2438 = vld [vmem:[#allocation10 + $0x98] sm:$0xf]
    %v2439 = vld [vmem:[#allocation10 + $0x9c] sm:$0xff]
    %v2440 = vld [vmem:[#allocation10 + $0xa4] sm:$0xf]
    %v2441 = vld [vmem:[#allocation10 + $0xa8] sm:$0xff]
    %v2442 = vld [vmem:[#allocation10 + $0xb0] sm:$0xf]
    %v2443 = vld [vmem:[#allocation10 + $0xb4] sm:$0xff]
    %v2444 = vld [vmem:[#allocation10 + $0xbc] sm:$0xf]
    %v2445 = vld [vmem:[#allocation10 + $0xc0] sm:$0xff]
    %v2446 = vld [vmem:[#allocation10 + $0xc8] sm:$0xf]
    %v2447 = vld [vmem:[#allocation10 + $0xcc] sm:$0xff]
    %v2448 = vld [vmem:[#allocation10 + $0xd4] sm:$0xf]
    %v2449 = vld [vmem:[#allocation10 + $0xd8] sm:$0xff]
    %v2450 = vld [vmem:[#allocation10 + $0xe0] sm:$0xf]
    %v2451 = vld [vmem:[#allocation10 + $0xe4] sm:$0xff]
    %v2452 = vld [vmem:[#allocation10 + $0xec] sm:$0xf]
    %v2453 = vld [vmem:[#allocation10 + $0xf0] sm:$0xff]
    %v2454 = vld [vmem:[#allocation10 + $0xf8] sm:$0xf]
    %v2455 = vld [vmem:[#allocation10 + $0xfc] sm:$0xff]
    %v2456 = vld [vmem:[#allocation10 + $0x104] sm:$0xf]
    %v2457 = vld [vmem:[#allocation10 + $0x108] sm:$0xff]
    %v2458 = vld [vmem:[#allocation10 + $0x110] sm:$0xf]
    %v2459 = vld [vmem:[#allocation10 + $0x114] sm:$0xff]
    %v2460 = vld [vmem:[#allocation10 + $0x11c] sm:$0xf]
    %v2461 = vld [vmem:[#allocation10 + $0x120] sm:$0xff]
    %v2462 = vld [vmem:[#allocation10 + $0x128] sm:$0xf]
    %v2463 = vld [vmem:[#allocation10 + $0x12c] sm:$0xff]
    %v2464 = vld [vmem:[#allocation10 + $0x134] sm:$0xf]
    %v2465 = vld [vmem:[#allocation10 + $0x138] sm:$0xff]
    %v2466 = vld [vmem:[#allocation10 + $0x140] sm:$0xf]
    %v2467 = vld [vmem:[#allocation10 + $0x144] sm:$0xff]
    %v2468 = vld [vmem:[#allocation10 + $0x14c] sm:$0xf]
    %v2469 = vld [vmem:[#allocation10 + $0x150] sm:$0xff]
    %v2470 = vld [vmem:[#allocation10 + $0x158] sm:$0xf]
    %v2471 = vld [vmem:[#allocation10 + $0x15c] sm:$0xff]
    %v2472 = vld [vmem:[#allocation10 + $0x164] sm:$0xf]
    %v2473 = vld [vmem:[#allocation10 + $0x168] sm:$0xff]
    %v2474 = vld [vmem:[#allocation10 + $0x170] sm:$0xf]
    %v2475 = vld [vmem:[#allocation10 + $0x174] sm:$0xff]
    %v2476 = vld [vmem:[#allocation10 + $0x17c] sm:$0xf]
    %v2477 = vld [vmem:[#allocation10 + $0x180] sm:$0xff]
    %v2478 = vld [vmem:[#allocation10 + $0x188] sm:$0xf]
    %v2479 = vld [vmem:[#allocation10 + $0x18c] sm:$0xff]
    %v2480 = vld [vmem:[#allocation10 + $0x194] sm:$0xf]
    %v2481 = vld [vmem:[#allocation10 + $0x198] sm:$0xff]
    %v2482 = vld [vmem:[#allocation10 + $0x1a0] sm:$0xf]
    %v2483 = vld [vmem:[#allocation10 + $0x1a4] sm:$0xff]
    %v2484 = vld [vmem:[#allocation10 + $0x1ac] sm:$0xf]
    %v2485 = vld [vmem:[#allocation10 + $0x1b0] sm:$0xff]
    %v2486 = vld [vmem:[#allocation10 + $0x1b8] sm:$0xf]
    %v2487 = vld [vmem:[#allocation10 + $0x1bc] sm:$0xff]
    %v2488 = vld [vmem:[#allocation10 + $0x1c4] sm:$0xf]
    %v2489 = vld [vmem:[#allocation10 + $0x1c8] sm:$0xff]
    %v2490 = vld [vmem:[#allocation10 + $0x1d0] sm:$0xf]
    %v2491 = vld [vmem:[#allocation10 + $0x1d4] sm:$0xff]
    %v2492 = vld [vmem:[#allocation10 + $0x1dc] sm:$0xf]
    %v2493 = vld [vmem:[#allocation10 + $0x1e0] sm:$0xff]
    %v2494 = vld [vmem:[#allocation10 + $0x1e8] sm:$0xf]
    %v2495 = vld [vmem:[#allocation10 + $0x1ec] sm:$0xff]
    %v2496 = vld [vmem:[#allocation10 + $0x1f4] sm:$0xf]
    %v2497 = vld [vmem:[#allocation10 + $0x1f8] sm:$0xff]
    %v2498 = vld [vmem:[#allocation10 + $0x200] sm:$0xf]
    %v2499 = vld [vmem:[#allocation10 + $0x204] sm:$0xff]
    %v2500 = vld [vmem:[#allocation10 + $0x20c] sm:$0xf]
    %v2501 = vld [vmem:[#allocation10 + $0x210] sm:$0xff]
    %v2502 = vld [vmem:[#allocation10 + $0x218] sm:$0xf]
    %v2503 = vld [vmem:[#allocation10 + $0x21c] sm:$0xff]
    %v2504 = vld [vmem:[#allocation10 + $0x224] sm:$0xf]
    %v2505 = vld [vmem:[#allocation10 + $0x228] sm:$0xff]
    %v2506 = vld [vmem:[#allocation10 + $0x230] sm:$0xf]
    %v2507 = vld [vmem:[#allocation10 + $0x234] sm:$0xff]
    %v2508 = vld [vmem:[#allocation10 + $0x23c] sm:$0xf]
    %v2509 = vld [vmem:[#allocation10 + $0x240] sm:$0xff]
    %v2510 = vld [vmem:[#allocation10 + $0x248] sm:$0xf]
    %v2511 = vld [vmem:[#allocation10 + $0x24c] sm:$0xff]
    %v2512 = vld [vmem:[#allocation10 + $0x254] sm:$0xf]
    %v2513 = vld [vmem:[#allocation10 + $0x258] sm:$0xff]
    %v2514 = vld [vmem:[#allocation10 + $0x260] sm:$0xf]
    %v2515 = vld [vmem:[#allocation10 + $0x264] sm:$0xff]
    %v2516 = vld [vmem:[#allocation10 + $0x26c] sm:$0xf]
    %v2517 = vld [vmem:[#allocation10 + $0x270] sm:$0xff]
    %v2518 = vld [vmem:[#allocation10 + $0x278] sm:$0xf]
    %v2519 = vld [vmem:[#allocation10 + $0x27c] sm:$0xff]
    %v2520 = vld [vmem:[#allocation10 + $0x284] sm:$0xf]
    %v2521 = vld [vmem:[#allocation10 + $0x288] sm:$0xff]
    %v2522 = vld [vmem:[#allocation10 + $0x290] sm:$0xf]
    %v2523 = vld [vmem:[#allocation10 + $0x294] sm:$0xff]
    %v2524 = vld [vmem:[#allocation10 + $0x29c] sm:$0xf]
    %v2525 = vld [vmem:[#allocation10 + $0x2a0] sm:$0xff]
    %v2526 = vld [vmem:[#allocation10 + $0x2a8] sm:$0xf]
    %v2527 = vld [vmem:[#allocation10 + $0x2ac] sm:$0xff]
    %v2528 = vld [vmem:[#allocation10 + $0x2b4] sm:$0xf]
    %v2529 = vld [vmem:[#allocation10 + $0x2b8] sm:$0xff]
    %v2530 = vld [vmem:[#allocation10 + $0x2c0] sm:$0xf]
    %v2531 = vld [vmem:[#allocation10 + $0x2c4] sm:$0xff]
    %v2532 = vld [vmem:[#allocation10 + $0x2cc] sm:$0xf]
    %v2533 = vld [vmem:[#allocation10 + $0x2d0] sm:$0xff]
    %v2534 = vld [vmem:[#allocation10 + $0x2d8] sm:$0xf]
    %v2535 = vld [vmem:[#allocation10 + $0x2dc] sm:$0xff]
    %v2536 = vld [vmem:[#allocation10 + $0x2e4] sm:$0xf]
    %v2537 = vld [vmem:[#allocation10 + $0x2e8] sm:$0xff]
    %v2538 = vld [vmem:[#allocation10 + $0x2f0] sm:$0xf]
    %v2539 = vld [vmem:[#allocation10 + $0x2f4] sm:$0xff]
    %v2540 = vld [vmem:[#allocation10 + $0x2fc] sm:$0xf]
    %v2541 = vld [vmem:[#allocation10 + $0x300] sm:$0xff]
    %v2542 = vld [vmem:[#allocation10 + $0x308] sm:$0xf]
    %v2543 = vld [vmem:[#allocation10 + $0x30c] sm:$0xff]
    %v2544 = vld [vmem:[#allocation10 + $0x314] sm:$0xf]
    %v2545 = vld [vmem:[#allocation10 + $0x318] sm:$0xff]
    %v2546 = vld [vmem:[#allocation10 + $0x320] sm:$0xf]
    %v2547 = vld [vmem:[#allocation10 + $0x324] sm:$0xff]
    %v2548 = vld [vmem:[#allocation10 + $0x32c] sm:$0xf]
    %v2549 = vld [vmem:[#allocation10 + $0x330] sm:$0xff]
    %v2550 = vld [vmem:[#allocation10 + $0x338] sm:$0xf]
    %v2551 = vld [vmem:[#allocation10 + $0x33c] sm:$0xff]
    %v2552 = vld [vmem:[#allocation10 + $0x344] sm:$0xf]
    %v2553 = vld [vmem:[#allocation10 + $0x348] sm:$0xff]
    %v2554 = vld [vmem:[#allocation10 + $0x350] sm:$0xf]
    %v2555 = vld [vmem:[#allocation10 + $0x354] sm:$0xff]
    %v2556 = vld [vmem:[#allocation10 + $0x35c] sm:$0xf]
    %v2557 = vld [vmem:[#allocation10 + $0x360] sm:$0xff]
    %v2558 = vld [vmem:[#allocation10 + $0x368] sm:$0xf]
    %v2559 = vld [vmem:[#allocation10 + $0x36c] sm:$0xff]
    %v2560 = vld [vmem:[#allocation10 + $0x374] sm:$0xf]
    %v2561 = vld [vmem:[#allocation10 + $0x378] sm:$0xff]
    %v2562 = vld [vmem:[#allocation10 + $0x380] sm:$0xf]
    %v2563 = vld [vmem:[#allocation10 + $0x384] sm:$0xff]
    %v2564 = vld [vmem:[#allocation10 + $0x38c] sm:$0xf]
    %v2565 = vld [vmem:[#allocation10 + $0x390] sm:$0xff]
    %v2566 = vld [vmem:[#allocation10 + $0x398] sm:$0xf]
    %v2567 = vld [vmem:[#allocation10 + $0x39c] sm:$0xff]
    %v2568 = vld [vmem:[#allocation10 + $0x3a4] sm:$0xf]
    %v2569 = vld [vmem:[#allocation10 + $0x3a8] sm:$0xff]
    %v2570 = vld [vmem:[#allocation10 + $0x3b0] sm:$0xf]
    %v2571 = vld [vmem:[#allocation10 + $0x3b4] sm:$0xff]
    %v2572 = vld [vmem:[#allocation10 + $0x3bc] sm:$0xf]
    %v2573 = vld [vmem:[#allocation10 + $0x3c0] sm:$0xff]
    %v2574 = vld [vmem:[#allocation10 + $0x3c8] sm:$0xf]
    %v2575 = vld [vmem:[#allocation10 + $0x3cc] sm:$0xff]
    %v2576 = vld [vmem:[#allocation10 + $0x3d4] sm:$0xf]
    %v2577 = vld [vmem:[#allocation10 + $0x3d8] sm:$0xff]
    %v2578 = vld [vmem:[#allocation10 + $0x3e0] sm:$0xf]
    %v2579 = vld [vmem:[#allocation10 + $0x3e4] sm:$0xff]
    %v2580 = vld [vmem:[#allocation10 + $0x3ec] sm:$0xf]
    %v2581 = vld [vmem:[#allocation10 + $0x3f0] sm:$0xff]
    %v2582 = vld [vmem:[#allocation10 + $0x3f8] sm:$0xf]
    %v2583 = vld [vmem:[#allocation10 + $0x3fc] sm:$0xff]
    %v2584 = vld [vmem:[#allocation10 + $0x404] sm:$0xf]
    %v2585 = vld [vmem:[#allocation10 + $0x408] sm:$0xff]
    %v2586 = vld [vmem:[#allocation10 + $0x410] sm:$0xf]
    %v2587 = vld [vmem:[#allocation10 + $0x414] sm:$0xff]
    %v2588 = vld [vmem:[#allocation10 + $0x41c] sm:$0xf]
    %v2589 = vld [vmem:[#allocation10 + $0x420] sm:$0xff]
    %v2590 = vld [vmem:[#allocation10 + $0x428] sm:$0xf]
    %v2591 = vld [vmem:[#allocation10 + $0x42c] sm:$0xff]
    %v2592 = vld [vmem:[#allocation10 + $0x434] sm:$0xf]
    %v2593 = vld [vmem:[#allocation10 + $0x438] sm:$0xff]
    %v2594 = vld [vmem:[#allocation10 + $0x440] sm:$0xf]
    %v2595 = vld [vmem:[#allocation10 + $0x444] sm:$0xff]
    %v2596 = vld [vmem:[#allocation10 + $0x44c] sm:$0xf]
    %v2597 = vld [vmem:[#allocation10 + $0x450] sm:$0xff]
    %v2598 = vld [vmem:[#allocation10 + $0x458] sm:$0xf]
    %v2599 = vld [vmem:[#allocation10 + $0x45c] sm:$0xff]
    %v2600 = vld [vmem:[#allocation10 + $0x464] sm:$0xf]
    %v2601 = vld [vmem:[#allocation10 + $0x468] sm:$0xff]
    %v2602 = vld [vmem:[#allocation10 + $0x470] sm:$0xf]
    %v2603 = vld [vmem:[#allocation10 + $0x474] sm:$0xff]
    %v2604 = vld [vmem:[#allocation10 + $0x47c] sm:$0xf]
    %v2605 = vld [vmem:[#allocation10 + $0x480] sm:$0xff]
    %v2606 = vld [vmem:[#allocation10 + $0x488] sm:$0xf]
    %v2607 = vld [vmem:[#allocation10 + $0x48c] sm:$0xff]
    %v2608 = vld [vmem:[#allocation10 + $0x494] sm:$0xf]
    %v2609 = vld [vmem:[#allocation10 + $0x498] sm:$0xff]
    %v2610 = vld [vmem:[#allocation10 + $0x4a0] sm:$0xf]
    %v2611 = vld [vmem:[#allocation10 + $0x4a4] sm:$0xff]
    %v2612 = vld [vmem:[#allocation10 + $0x4ac] sm:$0xf]
    %v2613 = vld [vmem:[#allocation10 + $0x4b0] sm:$0xff]
    %v2614 = vld [vmem:[#allocation10 + $0x4b8] sm:$0xf]
    %v2615 = vld [vmem:[#allocation10 + $0x4bc] sm:$0xff]
    %v2616 = vld [vmem:[#allocation10 + $0x4c4] sm:$0xf]
    %v2617 = vld [vmem:[#allocation10 + $0x4c8] sm:$0xff]
    %v2618 = vld [vmem:[#allocation10 + $0x4d0] sm:$0xf]
    %v2619 = vld [vmem:[#allocation10 + $0x4d4] sm:$0xff]
    %v2620 = vld [vmem:[#allocation10 + $0x4dc] sm:$0xf]
    %v2621 = vld [vmem:[#allocation10 + $0x4e0] sm:$0xff]
    %v2622 = vld [vmem:[#allocation10 + $0x4e8] sm:$0xf]
    %v2623 = vld [vmem:[#allocation10 + $0x4ec] sm:$0xff]
    %v2624 = vld [vmem:[#allocation10 + $0x4f4] sm:$0xf]
    %v2625 = vld [vmem:[#allocation10 + $0x4f8] sm:$0xff]
    %v2626 = vld [vmem:[#allocation10 + $0x500] sm:$0xf]
    %v2627 = vld [vmem:[#allocation10 + $0x504] sm:$0xff]
    %v2628 = vld [vmem:[#allocation10 + $0x50c] sm:$0xf]
    %v2629 = vld [vmem:[#allocation10 + $0x510] sm:$0xff]
    %v2630 = vld [vmem:[#allocation10 + $0x518] sm:$0xf]
    %v2631 = vld [vmem:[#allocation10 + $0x51c] sm:$0xff]
    %v2632 = vld [vmem:[#allocation10 + $0x524] sm:$0xf]
    %v2633 = vld [vmem:[#allocation10 + $0x528] sm:$0xff]
    %v2634 = vld [vmem:[#allocation10 + $0x530] sm:$0xf]
    %v2635 = vld [vmem:[#allocation10 + $0x534] sm:$0xff]
    %v2636 = vld [vmem:[#allocation10 + $0x53c] sm:$0xf]
    %v2637 = vld [vmem:[#allocation10 + $0x540] sm:$0xff]
    %v2638 = vld [vmem:[#allocation10 + $0x548] sm:$0xf]
    %v2639 = vld [vmem:[#allocation10 + $0x54c] sm:$0xff]
    %v2640 = vld [vmem:[#allocation10 + $0x554] sm:$0xf]
    %v2641 = vld [vmem:[#allocation10 + $0x558] sm:$0xff]
    %v2642 = vld [vmem:[#allocation10 + $0x560] sm:$0xf]
    %v2643 = vld [vmem:[#allocation10 + $0x564] sm:$0xff]
    %v2644 = vld [vmem:[#allocation10 + $0x56c] sm:$0xf]
    %v2645 = vld [vmem:[#allocation10 + $0x570] sm:$0xff]
    %v2646 = vld [vmem:[#allocation10 + $0x578] sm:$0xf]
    %v2647 = vld [vmem:[#allocation10 + $0x57c] sm:$0xff]
    %v2648 = vld [vmem:[#allocation10 + $0x584] sm:$0xf]
    %v2649 = vld [vmem:[#allocation10 + $0x588] sm:$0xff]
    %v2650 = vld [vmem:[#allocation10 + $0x590] sm:$0xf]
    %v2651 = vld [vmem:[#allocation10 + $0x594] sm:$0xff]
    %v2652 = vld [vmem:[#allocation10 + $0x59c] sm:$0xf]
    %v2653 = vld [vmem:[#allocation10 + $0x5a0] sm:$0xff]
    %v2654 = vld [vmem:[#allocation10 + $0x5a8] sm:$0xf]
    %v2655 = vld [vmem:[#allocation10 + $0x5ac] sm:$0xff]
    %v2656 = vld [vmem:[#allocation10 + $0x5b4] sm:$0xf]
    %v2657 = vld [vmem:[#allocation10 + $0x5b8] sm:$0xff]
    %v2658 = vld [vmem:[#allocation10 + $0x5c0] sm:$0xf]
    %v2659 = vld [vmem:[#allocation10 + $0x5c4] sm:$0xff]
    %v2660 = vld [vmem:[#allocation10 + $0x5cc] sm:$0xf]
    %v2661 = vld [vmem:[#allocation10 + $0x5d0] sm:$0xff]
    %v2662 = vld [vmem:[#allocation10 + $0x5d8] sm:$0xf]
    %v2663 = vld [vmem:[#allocation10 + $0x5dc] sm:$0xff]
    %v2664 = vld [vmem:[#allocation10 + $0x5e4] sm:$0xf]
    %v2665 = vld [vmem:[#allocation10 + $0x5e8] sm:$0xff]
    %v2666 = vld [vmem:[#allocation10 + $0x5f0] sm:$0xf]
    %v2667 = vld [vmem:[#allocation10 + $0x5f4] sm:$0xff]
    %v2668 = vld [vmem:[#allocation10 + $0x5fc] sm:$0xf]
    %v2669 = vld [vmem:[#allocation10 + $0x600] sm:$0xff]
    %v2670 = vld [vmem:[#allocation10 + $0x608] sm:$0xf]
    %v2671 = vld [vmem:[#allocation10 + $0x60c] sm:$0xff]
    %v2672 = vld [vmem:[#allocation10 + $0x614] sm:$0xf]
    %v2673 = vld [vmem:[#allocation10 + $0x618] sm:$0xff]
    %v2674 = vld [vmem:[#allocation10 + $0x620] sm:$0xf]
    %v2675 = vld [vmem:[#allocation10 + $0x624] sm:$0xff]
    %v2676 = vld [vmem:[#allocation10 + $0x62c] sm:$0xf]
    %v2677 = vld [vmem:[#allocation10 + $0x630] sm:$0xff]
    %v2678 = vld [vmem:[#allocation10 + $0x638] sm:$0xf]
    %v2679 = vld [vmem:[#allocation10 + $0x63c] sm:$0xff]
    %v2680 = vld [vmem:[#allocation10 + $0x644] sm:$0xf]
    %v2681 = vld [vmem:[#allocation10 + $0x648] sm:$0xff]
    %v2682 = vld [vmem:[#allocation10 + $0x650] sm:$0xf]
    %v2683 = vld [vmem:[#allocation10 + $0x654] sm:$0xff]
    %v2684 = vld [vmem:[#allocation10 + $0x65c] sm:$0xf]
    %v2685 = vld [vmem:[#allocation10 + $0x660] sm:$0xff]
    %v2686 = vld [vmem:[#allocation10 + $0x668] sm:$0xf]
    %v2687 = vld [vmem:[#allocation10 + $0x66c] sm:$0xff]
    %v2688 = vld [vmem:[#allocation10 + $0x674] sm:$0xf]
    %v2689 = vld [vmem:[#allocation10 + $0x678] sm:$0xff]
    %v2690 = vld [vmem:[#allocation10 + $0x680] sm:$0xf]
    %v2691 = vld [vmem:[#allocation10 + $0x684] sm:$0xff]
    %v2692 = vld [vmem:[#allocation10 + $0x68c] sm:$0xf]
    %v2693 = vld [vmem:[#allocation10 + $0x690] sm:$0xff]
    %v2694 = vld [vmem:[#allocation10 + $0x698] sm:$0xf]
    %v2695 = vld [vmem:[#allocation10 + $0x69c] sm:$0xff]
    %v2696 = vld [vmem:[#allocation10 + $0x6a4] sm:$0xf]
    %v2697 = vld [vmem:[#allocation10 + $0x6a8] sm:$0xff]
    %v2698 = vld [vmem:[#allocation10 + $0x6b0] sm:$0xf]
    %v2699 = vld [vmem:[#allocation10 + $0x6b4] sm:$0xff]
    %v2700 = vld [vmem:[#allocation10 + $0x6bc] sm:$0xf]
    %v2701 = vld [vmem:[#allocation10 + $0x6c0] sm:$0xff]
    %v2702 = vld [vmem:[#allocation10 + $0x6c8] sm:$0xf]
    %v2703 = vld [vmem:[#allocation10 + $0x6cc] sm:$0xff]
    %v2704 = vld [vmem:[#allocation10 + $0x6d4] sm:$0xf]
    %v2705 = vld [vmem:[#allocation10 + $0x6d8] sm:$0xff]
    %v2706 = vld [vmem:[#allocation10 + $0x6e0] sm:$0xf]
    %v2707 = vld [vmem:[#allocation10 + $0x6e4] sm:$0xff]
    %v2708 = vld [vmem:[#allocation10 + $0x6ec] sm:$0xf]
    %v2709 = vld [vmem:[#allocation10 + $0x6f0] sm:$0xff]
    %v2710 = vld [vmem:[#allocation10 + $0x6f8] sm:$0xf]
    %v2711 = vld [vmem:[#allocation10 + $0x6fc] sm:$0xff]
    %v2712 = vld [vmem:[#allocation10 + $0x704] sm:$0xf]
    %v2713 = vld [vmem:[#allocation10 + $0x708] sm:$0xff]
    %v2714 = vld [vmem:[#allocation10 + $0x710] sm:$0xf]
    %v2715 = vld [vmem:[#allocation10 + $0x714] sm:$0xff]
    %v2716 = vld [vmem:[#allocation10 + $0x71c] sm:$0xf]
    %v2717 = vld [vmem:[#allocation10 + $0x720] sm:$0xff]
    %v2718 = vld [vmem:[#allocation10 + $0x728] sm:$0xf]
    %v2719 = vld [vmem:[#allocation10 + $0x72c] sm:$0xff]
    %v2720 = vld [vmem:[#allocation10 + $0x734] sm:$0xf]
    %v2721 = vld [vmem:[#allocation10 + $0x738] sm:$0xff]
    %v2722 = vld [vmem:[#allocation10 + $0x740] sm:$0xf]
    %v2723 = vld [vmem:[#allocation10 + $0x744] sm:$0xff]
    %v2724 = vld [vmem:[#allocation10 + $0x74c] sm:$0xf]
    %v2725 = vld [vmem:[#allocation10 + $0x750] sm:$0xff]
    %v2726 = vld [vmem:[#allocation10 + $0x758] sm:$0xf]
    %v2727 = vld [vmem:[#allocation10 + $0x75c] sm:$0xff]
    %v2728 = vld [vmem:[#allocation10 + $0x764] sm:$0xf]
    %v2729 = vld [vmem:[#allocation10 + $0x768] sm:$0xff]
    %v2730 = vld [vmem:[#allocation10 + $0x770] sm:$0xf]
    %v2731 = vld [vmem:[#allocation10 + $0x774] sm:$0xff]
    %v2732 = vld [vmem:[#allocation10 + $0x77c] sm:$0xf]
    %v2733 = vld [vmem:[#allocation10 + $0x780] sm:$0xff]
    %v2734 = vld [vmem:[#allocation10 + $0x788] sm:$0xf]
    %v2735 = vld [vmem:[#allocation10 + $0x78c] sm:$0xff]
    %v2736 = vld [vmem:[#allocation10 + $0x794] sm:$0xf]
    %v2737 = vld [vmem:[#allocation10 + $0x798] sm:$0xff]
    %v2738 = vld [vmem:[#allocation10 + $0x7a0] sm:$0xf]
    %v2739 = vld [vmem:[#allocation10 + $0x7a4] sm:$0xff]
    %v2740 = vld [vmem:[#allocation10 + $0x7ac] sm:$0xf]
    %v2741 = vld [vmem:[#allocation10 + $0x7b0] sm:$0xff]
    %v2742 = vld [vmem:[#allocation10 + $0x7b8] sm:$0xf]
    %v2743 = vld [vmem:[#allocation10 + $0x7bc] sm:$0xff]
    %v2744 = vld [vmem:[#allocation10 + $0x7c4] sm:$0xf]
    %v2745 = vld [vmem:[#allocation10 + $0x7c8] sm:$0xff]
    %v2746 = vld [vmem:[#allocation10 + $0x7d0] sm:$0xf]
    %v2747 = vld [vmem:[#allocation10 + $0x7d4] sm:$0xff]
    %v2748 = vld [vmem:[#allocation10 + $0x7dc] sm:$0xf]
    %v2749 = vld [vmem:[#allocation10 + $0x7e0] sm:$0xff]
    %v2750 = vld [vmem:[#allocation10 + $0x7e8] sm:$0xf]
    %v2751 = vld [vmem:[#allocation10 + $0x7ec] sm:$0xff]
    %v2752 = vld [vmem:[#allocation10 + $0x7f4] sm:$0xf]
    %v2753 = vld [vmem:[#allocation10 + $0x7f8] sm:$0xff]
    %v2754 = vld [vmem:[#allocation10 + $0x800] sm:$0xf]
    %v2755 = vld [vmem:[#allocation10 + $0x804] sm:$0xff]
    %v2756 = vld [vmem:[#allocation10 + $0x80c] sm:$0xf]
    %v2757 = vld [vmem:[#allocation10 + $0x810] sm:$0xff]
    %v2758 = vld [vmem:[#allocation10 + $0x818] sm:$0xf]
    %v2759 = vld [vmem:[#allocation10 + $0x81c] sm:$0xff]
    %v2760 = vld [vmem:[#allocation10 + $0x824] sm:$0xf]
    %v2761 = vld [vmem:[#allocation10 + $0x828] sm:$0xff]
    %v2762 = vld [vmem:[#allocation10 + $0x830] sm:$0xf]
    %v2763 = vld [vmem:[#allocation10 + $0x834] sm:$0xff]
    %v2764 = vld [vmem:[#allocation10 + $0x83c] sm:$0xf]
    %v2765 = vld [vmem:[#allocation10 + $0x840] sm:$0xff]
    %v2766 = vld [vmem:[#allocation10 + $0x848] sm:$0xf]
    %v2767 = vld [vmem:[#allocation10 + $0x84c] sm:$0xff]
    %v2768 = vld [vmem:[#allocation10 + $0x854] sm:$0xf]
    %v2769 = vld [vmem:[#allocation10 + $0x858] sm:$0xff]
    %v2770 = vld [vmem:[#allocation10 + $0x860] sm:$0xf]
    %v2771 = vld [vmem:[#allocation10 + $0x864] sm:$0xff]
    %v2772 = vld [vmem:[#allocation10 + $0x86c] sm:$0xf]
    %v2773 = vld [vmem:[#allocation10 + $0x870] sm:$0xff]
    %v2774 = vld [vmem:[#allocation10 + $0x878] sm:$0xf]
    %v2775 = vld [vmem:[#allocation10 + $0x87c] sm:$0xff]
    %v2776 = vld [vmem:[#allocation10 + $0x884] sm:$0xf]
    %v2777 = vld [vmem:[#allocation10 + $0x888] sm:$0xff]
    %v2778 = vld [vmem:[#allocation10 + $0x890] sm:$0xf]
    %v2779 = vld [vmem:[#allocation10 + $0x894] sm:$0xff]
    %v2780 = vld [vmem:[#allocation10 + $0x89c] sm:$0xf]
    %v2781 = vld [vmem:[#allocation10 + $0x8a0] sm:$0xff]
    %v2782 = vld [vmem:[#allocation10 + $0x8a8] sm:$0xf]
    %v2783 = vld [vmem:[#allocation10 + $0x8ac] sm:$0xff]
    %v2784 = vld [vmem:[#allocation10 + $0x8b4] sm:$0xf]
    %v2785 = vld [vmem:[#allocation10 + $0x8b8] sm:$0xff]
    %v2786 = vld [vmem:[#allocation10 + $0x8c0] sm:$0xf]
    %v2787 = vld [vmem:[#allocation10 + $0x8c4] sm:$0xff]
    %v2788 = vld [vmem:[#allocation10 + $0x8cc] sm:$0xf]
    %v2789 = vld [vmem:[#allocation10 + $0x8d0] sm:$0xff]
    %v2790 = vld [vmem:[#allocation10 + $0x8d8] sm:$0xf]
    %v2791 = vld [vmem:[#allocation10 + $0x8dc] sm:$0xff]
    %v2792 = vld [vmem:[#allocation10 + $0x8e4] sm:$0xf]
    %v2793 = vld [vmem:[#allocation10 + $0x8e8] sm:$0xff]
    %v2794 = vld [vmem:[#allocation10 + $0x8f0] sm:$0xf]
    %v2795 = vld [vmem:[#allocation10 + $0x8f4] sm:$0xff]
    %v2796 = vld [vmem:[#allocation10 + $0x8fc] sm:$0xf]
    %v2797 = vld [vmem:[#allocation12] sm:$0x7]
    %v2799 = vperm.slane %v2797, 0
    %v2800 = vperm.slane %v2797, 1
    %v2801 = vperm.slane %v2797, 2
    %v3189 = vunpack.c.l.b16 %v2413
    %v3190 = vunpack.c.h.b16 %v2413
    %v3191 = vunpack.c.l.b16 %v2414
    %v3192 = vunpack.c.l.b16 %v2415
    %v3193 = vunpack.c.h.b16 %v2415
    %v3194 = vunpack.c.l.b16 %v2416
    %v3195 = vunpack.c.l.b16 %v2417
    %v3196 = vunpack.c.h.b16 %v2417
    %v3197 = vunpack.c.l.b16 %v2418
    %v3198 = vunpack.c.l.b16 %v2419
    %v3199 = vunpack.c.h.b16 %v2419
    %v3200 = vunpack.c.l.b16 %v2420
    %v3201 = vunpack.c.l.b16 %v2421
    %v3202 = vunpack.c.h.b16 %v2421
    %v3203 = vunpack.c.l.b16 %v2422
    %v3204 = vunpack.c.l.b16 %v2423
    %v3205 = vunpack.c.h.b16 %v2423
    %v3206 = vunpack.c.l.b16 %v2424
    %v3207 = vunpack.c.l.b16 %v2425
    %v3208 = vunpack.c.h.b16 %v2425
    %v3209 = vunpack.c.l.b16 %v2426
    %v3210 = vunpack.c.l.b16 %v2427
    %v3211 = vunpack.c.h.b16 %v2427
    %v3212 = vunpack.c.l.b16 %v2428
    %v3213 = vunpack.c.l.b16 %v2429
    %v3214 = vunpack.c.h.b16 %v2429
    %v3215 = vunpack.c.l.b16 %v2430
    %v3216 = vunpack.c.l.b16 %v2431
    %v3217 = vunpack.c.h.b16 %v2431
    %v3218 = vunpack.c.l.b16 %v2432
    %v3219 = vunpack.c.l.b16 %v2433
    %v3220 = vunpack.c.h.b16 %v2433
    %v3221 = vunpack.c.l.b16 %v2434
    %v3222 = vunpack.c.l.b16 %v2435
    %v3223 = vunpack.c.h.b16 %v2435
    %v3224 = vunpack.c.l.b16 %v2436
    %v3225 = vunpack.c.l.b16 %v2437
    %v3226 = vunpack.c.h.b16 %v2437
    %v3227 = vunpack.c.l.b16 %v2438
    %v3228 = vunpack.c.l.b16 %v2439
    %v3229 = vunpack.c.h.b16 %v2439
    %v3230 = vunpack.c.l.b16 %v2440
    %v3231 = vunpack.c.l.b16 %v2441
    %v3232 = vunpack.c.h.b16 %v2441
    %v3233 = vunpack.c.l.b16 %v2442
    %v3234 = vunpack.c.l.b16 %v2443
    %v3235 = vunpack.c.h.b16 %v2443
    %v3236 = vunpack.c.l.b16 %v2444
    %v3237 = vunpack.c.l.b16 %v2445
    %v3238 = vunpack.c.h.b16 %v2445
    %v3239 = vunpack.c.l.b16 %v2446
    %v3240 = vunpack.c.l.b16 %v2447
    %v3241 = vunpack.c.h.b16 %v2447
    %v3242 = vunpack.c.l.b16 %v2448
    %v3243 = vunpack.c.l.b16 %v2449
    %v3244 = vunpack.c.h.b16 %v2449
    %v3245 = vunpack.c.l.b16 %v2450
    %v3246 = vunpack.c.l.b16 %v2451
    %v3247 = vunpack.c.h.b16 %v2451
    %v3248 = vunpack.c.l.b16 %v2452
    %v3249 = vunpack.c.l.b16 %v2453
    %v3250 = vunpack.c.h.b16 %v2453
    %v3251 = vunpack.c.l.b16 %v2454
    %v3252 = vunpack.c.l.b16 %v2455
    %v3253 = vunpack.c.h.b16 %v2455
    %v3254 = vunpack.c.l.b16 %v2456
    %v3255 = vunpack.c.l.b16 %v2457
    %v3256 = vunpack.c.h.b16 %v2457
    %v3257 = vunpack.c.l.b16 %v2458
    %v3258 = vunpack.c.l.b16 %v2459
    %v3259 = vunpack.c.h.b16 %v2459
    %v3260 = vunpack.c.l.b16 %v2460
    %v3261 = vunpack.c.l.b16 %v2461
    %v3262 = vunpack.c.h.b16 %v2461
    %v3263 = vunpack.c.l.b16 %v2462
    %v3264 = vunpack.c.l.b16 %v2463
    %v3265 = vunpack.c.h.b16 %v2463
    %v3266 = vunpack.c.l.b16 %v2464
    %v3267 = vunpack.c.l.b16 %v2465
    %v3268 = vunpack.c.h.b16 %v2465
    %v3269 = vunpack.c.l.b16 %v2466
    %v3270 = vunpack.c.l.b16 %v2467
    %v3271 = vunpack.c.h.b16 %v2467
    %v3272 = vunpack.c.l.b16 %v2468
    %v3273 = vunpack.c.l.b16 %v2469
    %v3274 = vunpack.c.h.b16 %v2469
    %v3275 = vunpack.c.l.b16 %v2470
    %v3276 = vunpack.c.l.b16 %v2471
    %v3277 = vunpack.c.h.b16 %v2471
    %v3278 = vunpack.c.l.b16 %v2472
    %v3279 = vunpack.c.l.b16 %v2473
    %v3280 = vunpack.c.h.b16 %v2473
    %v3281 = vunpack.c.l.b16 %v2474
    %v3282 = vunpack.c.l.b16 %v2475
    %v3283 = vunpack.c.h.b16 %v2475
    %v3284 = vunpack.c.l.b16 %v2476
    %v3285 = vunpack.c.l.b16 %v2477
    %v3286 = vunpack.c.h.b16 %v2477
    %v3287 = vunpack.c.l.b16 %v2478
    %v3288 = vunpack.c.l.b16 %v2479
    %v3289 = vunpack.c.h.b16 %v2479
    %v3290 = vunpack.c.l.b16 %v2480
    %v3291 = vunpack.c.l.b16 %v2481
    %v3292 = vunpack.c.h.b16 %v2481
    %v3293 = vunpack.c.l.b16 %v2482
    %v3294 = vunpack.c.l.b16 %v2483
    %v3295 = vunpack.c.h.b16 %v2483
    %v3296 = vunpack.c.l.b16 %v2484
    %v3297 = vunpack.c.l.b16 %v2485
    %v3298 = vunpack.c.h.b16 %v2485
    %v3299 = vunpack.c.l.b16 %v2486
    %v3300 = vunpack.c.l.b16 %v2487
    %v3301 = vunpack.c.h.b16 %v2487
    %v3302 = vunpack.c.l.b16 %v2488
    %v3303 = vunpack.c.l.b16 %v2489
    %v3304 = vunpack.c.h.b16 %v2489
    %v3305 = vunpack.c.l.b16 %v2490
    %v3306 = vunpack.c.l.b16 %v2491
    %v3307 = vunpack.c.h.b16 %v2491
    %v3308 = vunpack.c.l.b16 %v2492
    %v3309 = vunpack.c.l.b16 %v2493
    %v3310 = vunpack.c.h.b16 %v2493
    %v3311 = vunpack.c.l.b16 %v2494
    %v3312 = vunpack.c.l.b16 %v2495
    %v3313 = vunpack.c.h.b16 %v2495
    %v3314 = vunpack.c.l.b16 %v2496
    %v3315 = vunpack.c.l.b16 %v2497
    %v3316 = vunpack.c.h.b16 %v2497
    %v3317 = vunpack.c.l.b16 %v2498
    %v3318 = vunpack.c.l.b16 %v2499
    %v3319 = vunpack.c.h.b16 %v2499
    %v3320 = vunpack.c.l.b16 %v2500
    %v3321 = vunpack.c.l.b16 %v2501
    %v3322 = vunpack.c.h.b16 %v2501
    %v3323 = vunpack.c.l.b16 %v2502
    %v3324 = vunpack.c.l.b16 %v2503
    %v3325 = vunpack.c.h.b16 %v2503
    %v3326 = vunpack.c.l.b16 %v2504
    %v3327 = vunpack.c.l.b16 %v2505
    %v3328 = vunpack.c.h.b16 %v2505
    %v3329 = vunpack.c.l.b16 %v2506
    %v3330 = vunpack.c.l.b16 %v2507
    %v3331 = vunpack.c.h.b16 %v2507
    %v3332 = vunpack.c.l.b16 %v2508
    %v3333 = vunpack.c.l.b16 %v2509
    %v3334 = vunpack.c.h.b16 %v2509
    %v3335 = vunpack.c.l.b16 %v2510
    %v3336 = vunpack.c.l.b16 %v2511
    %v3337 = vunpack.c.h.b16 %v2511
    %v3338 = vunpack.c.l.b16 %v2512
    %v3339 = vunpack.c.l.b16 %v2513
    %v3340 = vunpack.c.h.b16 %v2513
    %v3341 = vunpack.c.l.b16 %v2514
    %v3342 = vunpack.c.l.b16 %v2515
    %v3343 = vunpack.c.h.b16 %v2515
    %v3344 = vunpack.c.l.b16 %v2516
    %v3345 = vunpack.c.l.b16 %v2517
    %v3346 = vunpack.c.h.b16 %v2517
    %v3347 = vunpack.c.l.b16 %v2518
    %v3348 = vunpack.c.l.b16 %v2519
    %v3349 = vunpack.c.h.b16 %v2519
    %v3350 = vunpack.c.l.b16 %v2520
    %v3351 = vunpack.c.l.b16 %v2521
    %v3352 = vunpack.c.h.b16 %v2521
    %v3353 = vunpack.c.l.b16 %v2522
    %v3354 = vunpack.c.l.b16 %v2523
    %v3355 = vunpack.c.h.b16 %v2523
    %v3356 = vunpack.c.l.b16 %v2524
    %v3357 = vunpack.c.l.b16 %v2525
    %v3358 = vunpack.c.h.b16 %v2525
    %v3359 = vunpack.c.l.b16 %v2526
    %v3360 = vunpack.c.l.b16 %v2527
    %v3361 = vunpack.c.h.b16 %v2527
    %v3362 = vunpack.c.l.b16 %v2528
    %v3363 = vunpack.c.l.b16 %v2529
    %v3364 = vunpack.c.h.b16 %v2529
    %v3365 = vunpack.c.l.b16 %v2530
    %v3366 = vunpack.c.l.b16 %v2531
    %v3367 = vunpack.c.h.b16 %v2531
    %v3368 = vunpack.c.l.b16 %v2532
    %v3369 = vunpack.c.l.b16 %v2533
    %v3370 = vunpack.c.h.b16 %v2533
    %v3371 = vunpack.c.l.b16 %v2534
    %v3372 = vunpack.c.l.b16 %v2535
    %v3373 = vunpack.c.h.b16 %v2535
    %v3374 = vunpack.c.l.b16 %v2536
    %v3375 = vunpack.c.l.b16 %v2537
    %v3376 = vunpack.c.h.b16 %v2537
    %v3377 = vunpack.c.l.b16 %v2538
    %v3378 = vunpack.c.l.b16 %v2539
    %v3379 = vunpack.c.h.b16 %v2539
    %v3380 = vunpack.c.l.b16 %v2540
    %v3381 = vunpack.c.l.b16 %v2541
    %v3382 = vunpack.c.h.b16 %v2541
    %v3383 = vunpack.c.l.b16 %v2542
    %v3384 = vunpack.c.l.b16 %v2543
    %v3385 = vunpack.c.h.b16 %v2543
    %v3386 = vunpack.c.l.b16 %v2544
    %v3387 = vunpack.c.l.b16 %v2545
    %v3388 = vunpack.c.h.b16 %v2545
    %v3389 = vunpack.c.l.b16 %v2546
    %v3390 = vunpack.c.l.b16 %v2547
    %v3391 = vunpack.c.h.b16 %v2547
    %v3392 = vunpack.c.l.b16 %v2548
    %v3393 = vunpack.c.l.b16 %v2549
    %v3394 = vunpack.c.h.b16 %v2549
    %v3395 = vunpack.c.l.b16 %v2550
    %v3396 = vunpack.c.l.b16 %v2551
    %v3397 = vunpack.c.h.b16 %v2551
    %v3398 = vunpack.c.l.b16 %v2552
    %v3399 = vunpack.c.l.b16 %v2553
    %v3400 = vunpack.c.h.b16 %v2553
    %v3401 = vunpack.c.l.b16 %v2554
    %v3402 = vunpack.c.l.b16 %v2555
    %v3403 = vunpack.c.h.b16 %v2555
    %v3404 = vunpack.c.l.b16 %v2556
    %v3405 = vunpack.c.l.b16 %v2557
    %v3406 = vunpack.c.h.b16 %v2557
    %v3407 = vunpack.c.l.b16 %v2558
    %v3408 = vunpack.c.l.b16 %v2559
    %v3409 = vunpack.c.h.b16 %v2559
    %v3410 = vunpack.c.l.b16 %v2560
    %v3411 = vunpack.c.l.b16 %v2561
    %v3412 = vunpack.c.h.b16 %v2561
    %v3413 = vunpack.c.l.b16 %v2562
    %v3414 = vunpack.c.l.b16 %v2563
    %v3415 = vunpack.c.h.b16 %v2563
    %v3416 = vunpack.c.l.b16 %v2564
    %v3417 = vunpack.c.l.b16 %v2565
    %v3418 = vunpack.c.h.b16 %v2565
    %v3419 = vunpack.c.l.b16 %v2566
    %v3420 = vunpack.c.l.b16 %v2567
    %v3421 = vunpack.c.h.b16 %v2567
    %v3422 = vunpack.c.l.b16 %v2568
    %v3423 = vunpack.c.l.b16 %v2569
    %v3424 = vunpack.c.h.b16 %v2569
    %v3425 = vunpack.c.l.b16 %v2570
    %v3426 = vunpack.c.l.b16 %v2571
    %v3427 = vunpack.c.h.b16 %v2571
    %v3428 = vunpack.c.l.b16 %v2572
    %v3429 = vunpack.c.l.b16 %v2573
    %v3430 = vunpack.c.h.b16 %v2573
    %v3431 = vunpack.c.l.b16 %v2574
    %v3432 = vunpack.c.l.b16 %v2575
    %v3433 = vunpack.c.h.b16 %v2575
    %v3434 = vunpack.c.l.b16 %v2576
    %v3435 = vunpack.c.l.b16 %v2577
    %v3436 = vunpack.c.h.b16 %v2577
    %v3437 = vunpack.c.l.b16 %v2578
    %v3438 = vunpack.c.l.b16 %v2579
    %v3439 = vunpack.c.h.b16 %v2579
    %v3440 = vunpack.c.l.b16 %v2580
    %v3441 = vunpack.c.l.b16 %v2581
    %v3442 = vunpack.c.h.b16 %v2581
    %v3443 = vunpack.c.l.b16 %v2582
    %v3444 = vunpack.c.l.b16 %v2583
    %v3445 = vunpack.c.h.b16 %v2583
    %v3446 = vunpack.c.l.b16 %v2584
    %v3447 = vunpack.c.l.b16 %v2585
    %v3448 = vunpack.c.h.b16 %v2585
    %v3449 = vunpack.c.l.b16 %v2586
    %v3450 = vunpack.c.l.b16 %v2587
    %v3451 = vunpack.c.h.b16 %v2587
    %v3452 = vunpack.c.l.b16 %v2588
    %v3453 = vunpack.c.l.b16 %v2589
    %v3454 = vunpack.c.h.b16 %v2589
    %v3455 = vunpack.c.l.b16 %v2590
    %v3456 = vunpack.c.l.b16 %v2591
    %v3457 = vunpack.c.h.b16 %v2591
    %v3458 = vunpack.c.l.b16 %v2592
    %v3459 = vunpack.c.l.b16 %v2593
    %v3460 = vunpack.c.h.b16 %v2593
    %v3461 = vunpack.c.l.b16 %v2594
    %v3462 = vunpack.c.l.b16 %v2595
    %v3463 = vunpack.c.h.b16 %v2595
    %v3464 = vunpack.c.l.b16 %v2596
    %v3465 = vunpack.c.l.b16 %v2597
    %v3466 = vunpack.c.h.b16 %v2597
    %v3467 = vunpack.c.l.b16 %v2598
    %v3468 = vunpack.c.l.b16 %v2599
    %v3469 = vunpack.c.h.b16 %v2599
    %v3470 = vunpack.c.l.b16 %v2600
    %v3471 = vunpack.c.l.b16 %v2601
    %v3472 = vunpack.c.h.b16 %v2601
    %v3473 = vunpack.c.l.b16 %v2602
    %v3474 = vunpack.c.l.b16 %v2603
    %v3475 = vunpack.c.h.b16 %v2603
    %v3476 = vunpack.c.l.b16 %v2604
    %v3477 = vunpack.c.l.b16 %v2605
    %v3478 = vunpack.c.h.b16 %v2605
    %v3479 = vunpack.c.l.b16 %v2606
    %v3480 = vunpack.c.l.b16 %v2607
    %v3481 = vunpack.c.h.b16 %v2607
    %v3482 = vunpack.c.l.b16 %v2608
    %v3483 = vunpack.c.l.b16 %v2609
    %v3484 = vunpack.c.h.b16 %v2609
    %v3485 = vunpack.c.l.b16 %v2610
    %v3486 = vunpack.c.l.b16 %v2611
    %v3487 = vunpack.c.h.b16 %v2611
    %v3488 = vunpack.c.l.b16 %v2612
    %v3489 = vunpack.c.l.b16 %v2613
    %v3490 = vunpack.c.h.b16 %v2613
    %v3491 = vunpack.c.l.b16 %v2614
    %v3492 = vunpack.c.l.b16 %v2615
    %v3493 = vunpack.c.h.b16 %v2615
    %v3494 = vunpack.c.l.b16 %v2616
    %v3495 = vunpack.c.l.b16 %v2617
    %v3496 = vunpack.c.h.b16 %v2617
    %v3497 = vunpack.c.l.b16 %v2618
    %v3498 = vunpack.c.l.b16 %v2619
    %v3499 = vunpack.c.h.b16 %v2619
    %v3500 = vunpack.c.l.b16 %v2620
    %v3501 = vunpack.c.l.b16 %v2621
    %v3502 = vunpack.c.h.b16 %v2621
    %v3503 = vunpack.c.l.b16 %v2622
    %v3504 = vunpack.c.l.b16 %v2623
    %v3505 = vunpack.c.h.b16 %v2623
    %v3506 = vunpack.c.l.b16 %v2624
    %v3507 = vunpack.c.l.b16 %v2625
    %v3508 = vunpack.c.h.b16 %v2625
    %v3509 = vunpack.c.l.b16 %v2626
    %v3510 = vunpack.c.l.b16 %v2627
    %v3511 = vunpack.c.h.b16 %v2627
    %v3512 = vunpack.c.l.b16 %v2628
    %v3513 = vunpack.c.l.b16 %v2629
    %v3514 = vunpack.c.h.b16 %v2629
    %v3515 = vunpack.c.l.b16 %v2630
    %v3516 = vunpack.c.l.b16 %v2631
    %v3517 = vunpack.c.h.b16 %v2631
    %v3518 = vunpack.c.l.b16 %v2632
    %v3519 = vunpack.c.l.b16 %v2633
    %v3520 = vunpack.c.h.b16 %v2633
    %v3521 = vunpack.c.l.b16 %v2634
    %v3522 = vunpack.c.l.b16 %v2635
    %v3523 = vunpack.c.h.b16 %v2635
    %v3524 = vunpack.c.l.b16 %v2636
    %v3525 = vunpack.c.l.b16 %v2637
    %v3526 = vunpack.c.h.b16 %v2637
    %v3527 = vunpack.c.l.b16 %v2638
    %v3528 = vunpack.c.l.b16 %v2639
    %v3529 = vunpack.c.h.b16 %v2639
    %v3530 = vunpack.c.l.b16 %v2640
    %v3531 = vunpack.c.l.b16 %v2641
    %v3532 = vunpack.c.h.b16 %v2641
    %v3533 = vunpack.c.l.b16 %v2642
    %v3534 = vunpack.c.l.b16 %v2643
    %v3535 = vunpack.c.h.b16 %v2643
    %v3536 = vunpack.c.l.b16 %v2644
    %v3537 = vunpack.c.l.b16 %v2645
    %v3538 = vunpack.c.h.b16 %v2645
    %v3539 = vunpack.c.l.b16 %v2646
    %v3540 = vunpack.c.l.b16 %v2647
    %v3541 = vunpack.c.h.b16 %v2647
    %v3542 = vunpack.c.l.b16 %v2648
    %v3543 = vunpack.c.l.b16 %v2649
    %v3544 = vunpack.c.h.b16 %v2649
    %v3545 = vunpack.c.l.b16 %v2650
    %v3546 = vunpack.c.l.b16 %v2651
    %v3547 = vunpack.c.h.b16 %v2651
    %v3548 = vunpack.c.l.b16 %v2652
    %v3549 = vunpack.c.l.b16 %v2653
    %v3550 = vunpack.c.h.b16 %v2653
    %v3551 = vunpack.c.l.b16 %v2654
    %v3552 = vunpack.c.l.b16 %v2655
    %v3553 = vunpack.c.h.b16 %v2655
    %v3554 = vunpack.c.l.b16 %v2656
    %v3555 = vunpack.c.l.b16 %v2657
    %v3556 = vunpack.c.h.b16 %v2657
    %v3557 = vunpack.c.l.b16 %v2658
    %v3558 = vunpack.c.l.b16 %v2659
    %v3559 = vunpack.c.h.b16 %v2659
    %v3560 = vunpack.c.l.b16 %v2660
    %v3561 = vunpack.c.l.b16 %v2661
    %v3562 = vunpack.c.h.b16 %v2661
    %v3563 = vunpack.c.l.b16 %v2662
    %v3564 = vunpack.c.l.b16 %v2663
    %v3565 = vunpack.c.h.b16 %v2663
    %v3566 = vunpack.c.l.b16 %v2664
    %v3567 = vunpack.c.l.b16 %v2665
    %v3568 = vunpack.c.h.b16 %v2665
    %v3569 = vunpack.c.l.b16 %v2666
    %v3570 = vunpack.c.l.b16 %v2667
    %v3571 = vunpack.c.h.b16 %v2667
    %v3572 = vunpack.c.l.b16 %v2668
    %v3573 = vunpack.c.l.b16 %v2669
    %v3574 = vunpack.c.h.b16 %v2669
    %v3575 = vunpack.c.l.b16 %v2670
    %v3576 = vunpack.c.l.b16 %v2671
    %v3577 = vunpack.c.h.b16 %v2671
    %v3578 = vunpack.c.l.b16 %v2672
    %v3579 = vunpack.c.l.b16 %v2673
    %v3580 = vunpack.c.h.b16 %v2673
    %v3581 = vunpack.c.l.b16 %v2674
    %v3582 = vunpack.c.l.b16 %v2675
    %v3583 = vunpack.c.h.b16 %v2675
    %v3584 = vunpack.c.l.b16 %v2676
    %v3585 = vunpack.c.l.b16 %v2677
    %v3586 = vunpack.c.h.b16 %v2677
    %v3587 = vunpack.c.l.b16 %v2678
    %v3588 = vunpack.c.l.b16 %v2679
    %v3589 = vunpack.c.h.b16 %v2679
    %v3590 = vunpack.c.l.b16 %v2680
    %v3591 = vunpack.c.l.b16 %v2681
    %v3592 = vunpack.c.h.b16 %v2681
    %v3593 = vunpack.c.l.b16 %v2682
    %v3594 = vunpack.c.l.b16 %v2683
    %v3595 = vunpack.c.h.b16 %v2683
    %v3596 = vunpack.c.l.b16 %v2684
    %v3597 = vunpack.c.l.b16 %v2685
    %v3598 = vunpack.c.h.b16 %v2685
    %v3599 = vunpack.c.l.b16 %v2686
    %v3600 = vunpack.c.l.b16 %v2687
    %v3601 = vunpack.c.h.b16 %v2687
    %v3602 = vunpack.c.l.b16 %v2688
    %v3603 = vunpack.c.l.b16 %v2689
    %v3604 = vunpack.c.h.b16 %v2689
    %v3605 = vunpack.c.l.b16 %v2690
    %v3606 = vunpack.c.l.b16 %v2691
    %v3607 = vunpack.c.h.b16 %v2691
    %v3608 = vunpack.c.l.b16 %v2692
    %v3609 = vunpack.c.l.b16 %v2693
    %v3610 = vunpack.c.h.b16 %v2693
    %v3611 = vunpack.c.l.b16 %v2694
    %v3612 = vunpack.c.l.b16 %v2695
    %v3613 = vunpack.c.h.b16 %v2695
    %v3614 = vunpack.c.l.b16 %v2696
    %v3615 = vunpack.c.l.b16 %v2697
    %v3616 = vunpack.c.h.b16 %v2697
    %v3617 = vunpack.c.l.b16 %v2698
    %v3618 = vunpack.c.l.b16 %v2699
    %v3619 = vunpack.c.h.b16 %v2699
    %v3620 = vunpack.c.l.b16 %v2700
    %v3621 = vunpack.c.l.b16 %v2701
    %v3622 = vunpack.c.h.b16 %v2701
    %v3623 = vunpack.c.l.b16 %v2702
    %v3624 = vunpack.c.l.b16 %v2703
    %v3625 = vunpack.c.h.b16 %v2703
    %v3626 = vunpack.c.l.b16 %v2704
    %v3627 = vunpack.c.l.b16 %v2705
    %v3628 = vunpack.c.h.b16 %v2705
    %v3629 = vunpack.c.l.b16 %v2706
    %v3630 = vunpack.c.l.b16 %v2707
    %v3631 = vunpack.c.h.b16 %v2707
    %v3632 = vunpack.c.l.b16 %v2708
    %v3633 = vunpack.c.l.b16 %v2709
    %v3634 = vunpack.c.h.b16 %v2709
    %v3635 = vunpack.c.l.b16 %v2710
    %v3636 = vunpack.c.l.b16 %v2711
    %v3637 = vunpack.c.h.b16 %v2711
    %v3638 = vunpack.c.l.b16 %v2712
    %v3639 = vunpack.c.l.b16 %v2713
    %v3640 = vunpack.c.h.b16 %v2713
    %v3641 = vunpack.c.l.b16 %v2714
    %v3642 = vunpack.c.l.b16 %v2715
    %v3643 = vunpack.c.h.b16 %v2715
    %v3644 = vunpack.c.l.b16 %v2716
    %v3645 = vunpack.c.l.b16 %v2717
    %v3646 = vunpack.c.h.b16 %v2717
    %v3647 = vunpack.c.l.b16 %v2718
    %v3648 = vunpack.c.l.b16 %v2719
    %v3649 = vunpack.c.h.b16 %v2719
    %v3650 = vunpack.c.l.b16 %v2720
    %v3651 = vunpack.c.l.b16 %v2721
    %v3652 = vunpack.c.h.b16 %v2721
    %v3653 = vunpack.c.l.b16 %v2722
    %v3654 = vunpack.c.l.b16 %v2723
    %v3655 = vunpack.c.h.b16 %v2723
    %v3656 = vunpack.c.l.b16 %v2724
    %v3657 = vunpack.c.l.b16 %v2725
    %v3658 = vunpack.c.h.b16 %v2725
    %v3659 = vunpack.c.l.b16 %v2726
    %v3660 = vunpack.c.l.b16 %v2727
    %v3661 = vunpack.c.h.b16 %v2727
    %v3662 = vunpack.c.l.b16 %v2728
    %v3663 = vunpack.c.l.b16 %v2729
    %v3664 = vunpack.c.h.b16 %v2729
    %v3665 = vunpack.c.l.b16 %v2730
    %v3666 = vunpack.c.l.b16 %v2731
    %v3667 = vunpack.c.h.b16 %v2731
    %v3668 = vunpack.c.l.b16 %v2732
    %v3669 = vunpack.c.l.b16 %v2733
    %v3670 = vunpack.c.h.b16 %v2733
    %v3671 = vunpack.c.l.b16 %v2734
    %v3672 = vunpack.c.l.b16 %v2735
    %v3673 = vunpack.c.h.b16 %v2735
    %v3674 = vunpack.c.l.b16 %v2736
    %v3675 = vunpack.c.l.b16 %v2737
    %v3676 = vunpack.c.h.b16 %v2737
    %v3677 = vunpack.c.l.b16 %v2738
    %v3678 = vunpack.c.l.b16 %v2739
    %v3679 = vunpack.c.h.b16 %v2739
    %v3680 = vunpack.c.l.b16 %v2740
    %v3681 = vunpack.c.l.b16 %v2741
    %v3682 = vunpack.c.h.b16 %v2741
    %v3683 = vunpack.c.l.b16 %v2742
    %v3684 = vunpack.c.l.b16 %v2743
    %v3685 = vunpack.c.h.b16 %v2743
    %v3686 = vunpack.c.l.b16 %v2744
    %v3687 = vunpack.c.l.b16 %v2745
    %v3688 = vunpack.c.h.b16 %v2745
    %v3689 = vunpack.c.l.b16 %v2746
    %v3690 = vunpack.c.l.b16 %v2747
    %v3691 = vunpack.c.h.b16 %v2747
    %v3692 = vunpack.c.l.b16 %v2748
    %v3693 = vunpack.c.l.b16 %v2749
    %v3694 = vunpack.c.h.b16 %v2749
    %v3695 = vunpack.c.l.b16 %v2750
    %v3696 = vunpack.c.l.b16 %v2751
    %v3697 = vunpack.c.h.b16 %v2751
    %v3698 = vunpack.c.l.b16 %v2752
    %v3699 = vunpack.c.l.b16 %v2753
    %v3700 = vunpack.c.h.b16 %v2753
    %v3701 = vunpack.c.l.b16 %v2754
    %v3702 = vunpack.c.l.b16 %v2755
    %v3703 = vunpack.c.h.b16 %v2755
    %v3704 = vunpack.c.l.b16 %v2756
    %v3705 = vunpack.c.l.b16 %v2757
    %v3706 = vunpack.c.h.b16 %v2757
    %v3707 = vunpack.c.l.b16 %v2758
    %v3708 = vunpack.c.l.b16 %v2759
    %v3709 = vunpack.c.h.b16 %v2759
    %v3710 = vunpack.c.l.b16 %v2760
    %v3711 = vunpack.c.l.b16 %v2761
    %v3712 = vunpack.c.h.b16 %v2761
    %v3713 = vunpack.c.l.b16 %v2762
    %v3714 = vunpack.c.l.b16 %v2763
    %v3715 = vunpack.c.h.b16 %v2763
    %v3716 = vunpack.c.l.b16 %v2764
    %v3717 = vunpack.c.l.b16 %v2765
    %v3718 = vunpack.c.h.b16 %v2765
    %v3719 = vunpack.c.l.b16 %v2766
    %v3720 = vunpack.c.l.b16 %v2767
    %v3721 = vunpack.c.h.b16 %v2767
    %v3722 = vunpack.c.l.b16 %v2768
    %v3723 = vunpack.c.l.b16 %v2769
    %v3724 = vunpack.c.h.b16 %v2769
    %v3725 = vunpack.c.l.b16 %v2770
    %v3726 = vunpack.c.l.b16 %v2771
    %v3727 = vunpack.c.h.b16 %v2771
    %v3728 = vunpack.c.l.b16 %v2772
    %v3729 = vunpack.c.l.b16 %v2773
    %v3730 = vunpack.c.h.b16 %v2773
    %v3731 = vunpack.c.l.b16 %v2774
    %v3732 = vunpack.c.l.b16 %v2775
    %v3733 = vunpack.c.h.b16 %v2775
    %v3734 = vunpack.c.l.b16 %v2776
    %v3735 = vunpack.c.l.b16 %v2777
    %v3736 = vunpack.c.h.b16 %v2777
    %v3737 = vunpack.c.l.b16 %v2778
    %v3738 = vunpack.c.l.b16 %v2779
    %v3739 = vunpack.c.h.b16 %v2779
    %v3740 = vunpack.c.l.b16 %v2780
    %v3741 = vunpack.c.l.b16 %v2781
    %v3742 = vunpack.c.h.b16 %v2781
    %v3743 = vunpack.c.l.b16 %v2782
    %v3744 = vunpack.c.l.b16 %v2783
    %v3745 = vunpack.c.h.b16 %v2783
    %v3746 = vunpack.c.l.b16 %v2784
    %v3747 = vunpack.c.l.b16 %v2785
    %v3748 = vunpack.c.h.b16 %v2785
    %v3749 = vunpack.c.l.b16 %v2786
    %v3750 = vunpack.c.l.b16 %v2787
    %v3751 = vunpack.c.h.b16 %v2787
    %v3752 = vunpack.c.l.b16 %v2788
    %v3753 = vunpack.c.l.b16 %v2789
    %v3754 = vunpack.c.h.b16 %v2789
    %v3755 = vunpack.c.l.b16 %v2790
    %v3756 = vunpack.c.l.b16 %v2791
    %v3757 = vunpack.c.h.b16 %v2791
    %v3758 = vunpack.c.l.b16 %v2792
    %v3759 = vunpack.c.l.b16 %v2793
    %v3760 = vunpack.c.h.b16 %v2793
    %v3761 = vunpack.c.l.b16 %v2794
    %v3762 = vunpack.c.l.b16 %v2795
    %v3763 = vunpack.c.h.b16 %v2795
    %v3764 = vunpack.c.l.b16 %v2796
    %v3765 = vpack.c.b16 %v3192, %v3189
    %v3766 = vpack.c.b16 %v3193, %v3190
    %v3767 = vpack.c.b16 %v3194, %v3191
    %v3768 = vpack.c.b16 %v3198, %v3195
    %v3769 = vpack.c.b16 %v3199, %v3196
    %v3770 = vpack.c.b16 %v3200, %v3197
    %v3771 = vpack.c.b16 %v3204, %v3201
    %v3772 = vpack.c.b16 %v3205, %v3202
    %v3773 = vpack.c.b16 %v3206, %v3203
    %v3774 = vpack.c.b16 %v3210, %v3207
    %v3775 = vpack.c.b16 %v3211, %v3208
    %v3776 = vpack.c.b16 %v3212, %v3209
    %v3777 = vpack.c.b16 %v3216, %v3213
    %v3778 = vpack.c.b16 %v3217, %v3214
    %v3779 = vpack.c.b16 %v3218, %v3215
    %v3780 = vpack.c.b16 %v3222, %v3219
    %v3781 = vpack.c.b16 %v3223, %v3220
    %v3782 = vpack.c.b16 %v3224, %v3221
    %v3783 = vpack.c.b16 %v3228, %v3225
    %v3784 = vpack.c.b16 %v3229, %v3226
    %v3785 = vpack.c.b16 %v3230, %v3227
    %v3786 = vpack.c.b16 %v3234, %v3231
    %v3787 = vpack.c.b16 %v3235, %v3232
    %v3788 = vpack.c.b16 %v3236, %v3233
    %v3789 = vpack.c.b16 %v3240, %v3237
    %v3790 = vpack.c.b16 %v3241, %v3238
    %v3791 = vpack.c.b16 %v3242, %v3239
    %v3792 = vpack.c.b16 %v3246, %v3243
    %v3793 = vpack.c.b16 %v3247, %v3244
    %v3794 = vpack.c.b16 %v3248, %v3245
    %v3795 = vpack.c.b16 %v3252, %v3249
    %v3796 = vpack.c.b16 %v3253, %v3250
    %v3797 = vpack.c.b16 %v3254, %v3251
    %v3798 = vpack.c.b16 %v3258, %v3255
    %v3799 = vpack.c.b16 %v3259, %v3256
    %v3800 = vpack.c.b16 %v3260, %v3257
    %v3801 = vpack.c.b16 %v3264, %v3261
    %v3802 = vpack.c.b16 %v3265, %v3262
    %v3803 = vpack.c.b16 %v3266, %v3263
    %v3804 = vpack.c.b16 %v3270, %v3267
    %v3805 = vpack.c.b16 %v3271, %v3268
    %v3806 = vpack.c.b16 %v3272, %v3269
    %v3807 = vpack.c.b16 %v3276, %v3273
    %v3808 = vpack.c.b16 %v3277, %v3274
    %v3809 = vpack.c.b16 %v3278, %v3275
    %v3810 = vpack.c.b16 %v3282, %v3279
    %v3811 = vpack.c.b16 %v3283, %v3280
    %v3812 = vpack.c.b16 %v3284, %v3281
    %v3813 = vpack.c.b16 %v3288, %v3285
    %v3814 = vpack.c.b16 %v3289, %v3286
    %v3815 = vpack.c.b16 %v3290, %v3287
    %v3816 = vpack.c.b16 %v3294, %v3291
    %v3817 = vpack.c.b16 %v3295, %v3292
    %v3818 = vpack.c.b16 %v3296, %v3293
    %v3819 = vpack.c.b16 %v3300, %v3297
    %v3820 = vpack.c.b16 %v3301, %v3298
    %v3821 = vpack.c.b16 %v3302, %v3299
    %v3822 = vpack.c.b16 %v3306, %v3303
    %v3823 = vpack.c.b16 %v3307, %v3304
    %v3824 = vpack.c.b16 %v3308, %v3305
    %v3825 = vpack.c.b16 %v3312, %v3309
    %v3826 = vpack.c.b16 %v3313, %v3310
    %v3827 = vpack.c.b16 %v3314, %v3311
    %v3828 = vpack.c.b16 %v3318, %v3315
    %v3829 = vpack.c.b16 %v3319, %v3316
    %v3830 = vpack.c.b16 %v3320, %v3317
    %v3831 = vpack.c.b16 %v3324, %v3321
    %v3832 = vpack.c.b16 %v3325, %v3322
    %v3833 = vpack.c.b16 %v3326, %v3323
    %v3834 = vpack.c.b16 %v3330, %v3327
    %v3835 = vpack.c.b16 %v3331, %v3328
    %v3836 = vpack.c.b16 %v3332, %v3329
    %v3837 = vpack.c.b16 %v3336, %v3333
    %v3838 = vpack.c.b16 %v3337, %v3334
    %v3839 = vpack.c.b16 %v3338, %v3335
    %v3840 = vpack.c.b16 %v3342, %v3339
    %v3841 = vpack.c.b16 %v3343, %v3340
    %v3842 = vpack.c.b16 %v3344, %v3341
    %v3843 = vpack.c.b16 %v3348, %v3345
    %v3844 = vpack.c.b16 %v3349, %v3346
    %v3845 = vpack.c.b16 %v3350, %v3347
    %v3846 = vpack.c.b16 %v3354, %v3351
    %v3847 = vpack.c.b16 %v3355, %v3352
    %v3848 = vpack.c.b16 %v3356, %v3353
    %v3849 = vpack.c.b16 %v3360, %v3357
    %v3850 = vpack.c.b16 %v3361, %v3358
    %v3851 = vpack.c.b16 %v3362, %v3359
    %v3852 = vpack.c.b16 %v3366, %v3363
    %v3853 = vpack.c.b16 %v3367, %v3364
    %v3854 = vpack.c.b16 %v3368, %v3365
    %v3855 = vpack.c.b16 %v3372, %v3369
    %v3856 = vpack.c.b16 %v3373, %v3370
    %v3857 = vpack.c.b16 %v3374, %v3371
    %v3858 = vpack.c.b16 %v3378, %v3375
    %v3859 = vpack.c.b16 %v3379, %v3376
    %v3860 = vpack.c.b16 %v3380, %v3377
    %v3861 = vpack.c.b16 %v3384, %v3381
    %v3862 = vpack.c.b16 %v3385, %v3382
    %v3863 = vpack.c.b16 %v3386, %v3383
    %v3864 = vpack.c.b16 %v3390, %v3387
    %v3865 = vpack.c.b16 %v3391, %v3388
    %v3866 = vpack.c.b16 %v3392, %v3389
    %v3867 = vpack.c.b16 %v3396, %v3393
    %v3868 = vpack.c.b16 %v3397, %v3394
    %v3869 = vpack.c.b16 %v3398, %v3395
    %v3870 = vpack.c.b16 %v3402, %v3399
    %v3871 = vpack.c.b16 %v3403, %v3400
    %v3872 = vpack.c.b16 %v3404, %v3401
    %v3873 = vpack.c.b16 %v3408, %v3405
    %v3874 = vpack.c.b16 %v3409, %v3406
    %v3875 = vpack.c.b16 %v3410, %v3407
    %v3876 = vpack.c.b16 %v3414, %v3411
    %v3877 = vpack.c.b16 %v3415, %v3412
    %v3878 = vpack.c.b16 %v3416, %v3413
    %v3879 = vpack.c.b16 %v3420, %v3417
    %v3880 = vpack.c.b16 %v3421, %v3418
    %v3881 = vpack.c.b16 %v3422, %v3419
    %v3882 = vpack.c.b16 %v3426, %v3423
    %v3883 = vpack.c.b16 %v3427, %v3424
    %v3884 = vpack.c.b16 %v3428, %v3425
    %v3885 = vpack.c.b16 %v3432, %v3429
    %v3886 = vpack.c.b16 %v3433, %v3430
    %v3887 = vpack.c.b16 %v3434, %v3431
    %v3888 = vpack.c.b16 %v3438, %v3435
    %v3889 = vpack.c.b16 %v3439, %v3436
    %v3890 = vpack.c.b16 %v3440, %v3437
    %v3891 = vpack.c.b16 %v3444, %v3441
    %v3892 = vpack.c.b16 %v3445, %v3442
    %v3893 = vpack.c.b16 %v3446, %v3443
    %v3894 = vpack.c.b16 %v3450, %v3447
    %v3895 = vpack.c.b16 %v3451, %v3448
    %v3896 = vpack.c.b16 %v3452, %v3449
    %v3897 = vpack.c.b16 %v3456, %v3453
    %v3898 = vpack.c.b16 %v3457, %v3454
    %v3899 = vpack.c.b16 %v3458, %v3455
    %v3900 = vpack.c.b16 %v3462, %v3459
    %v3901 = vpack.c.b16 %v3463, %v3460
    %v3902 = vpack.c.b16 %v3464, %v3461
    %v3903 = vpack.c.b16 %v3468, %v3465
    %v3904 = vpack.c.b16 %v3469, %v3466
    %v3905 = vpack.c.b16 %v3470, %v3467
    %v3906 = vpack.c.b16 %v3474, %v3471
    %v3907 = vpack.c.b16 %v3475, %v3472
    %v3908 = vpack.c.b16 %v3476, %v3473
    %v3909 = vpack.c.b16 %v3480, %v3477
    %v3910 = vpack.c.b16 %v3481, %v3478
    %v3911 = vpack.c.b16 %v3482, %v3479
    %v3912 = vpack.c.b16 %v3486, %v3483
    %v3913 = vpack.c.b16 %v3487, %v3484
    %v3914 = vpack.c.b16 %v3488, %v3485
    %v3915 = vpack.c.b16 %v3492, %v3489
    %v3916 = vpack.c.b16 %v3493, %v3490
    %v3917 = vpack.c.b16 %v3494, %v3491
    %v3918 = vpack.c.b16 %v3498, %v3495
    %v3919 = vpack.c.b16 %v3499, %v3496
    %v3920 = vpack.c.b16 %v3500, %v3497
    %v3921 = vpack.c.b16 %v3504, %v3501
    %v3922 = vpack.c.b16 %v3505, %v3502
    %v3923 = vpack.c.b16 %v3506, %v3503
    %v3924 = vpack.c.b16 %v3510, %v3507
    %v3925 = vpack.c.b16 %v3511, %v3508
    %v3926 = vpack.c.b16 %v3512, %v3509
    %v3927 = vpack.c.b16 %v3516, %v3513
    %v3928 = vpack.c.b16 %v3517, %v3514
    %v3929 = vpack.c.b16 %v3518, %v3515
    %v3930 = vpack.c.b16 %v3522, %v3519
    %v3931 = vpack.c.b16 %v3523, %v3520
    %v3932 = vpack.c.b16 %v3524, %v3521
    %v3933 = vpack.c.b16 %v3528, %v3525
    %v3934 = vpack.c.b16 %v3529, %v3526
    %v3935 = vpack.c.b16 %v3530, %v3527
    %v3936 = vpack.c.b16 %v3534, %v3531
    %v3937 = vpack.c.b16 %v3535, %v3532
    %v3938 = vpack.c.b16 %v3536, %v3533
    %v3939 = vpack.c.b16 %v3540, %v3537
    %v3940 = vpack.c.b16 %v3541, %v3538
    %v3941 = vpack.c.b16 %v3542, %v3539
    %v3942 = vpack.c.b16 %v3546, %v3543
    %v3943 = vpack.c.b16 %v3547, %v3544
    %v3944 = vpack.c.b16 %v3548, %v3545
    %v3945 = vpack.c.b16 %v3552, %v3549
    %v3946 = vpack.c.b16 %v3553, %v3550
    %v3947 = vpack.c.b16 %v3554, %v3551
    %v3948 = vpack.c.b16 %v3558, %v3555
    %v3949 = vpack.c.b16 %v3559, %v3556
    %v3950 = vpack.c.b16 %v3560, %v3557
    %v3951 = vpack.c.b16 %v3564, %v3561
    %v3952 = vpack.c.b16 %v3565, %v3562
    %v3953 = vpack.c.b16 %v3566, %v3563
    %v3954 = vpack.c.b16 %v3570, %v3567
    %v3955 = vpack.c.b16 %v3571, %v3568
    %v3956 = vpack.c.b16 %v3572, %v3569
    %v3957 = vpack.c.b16 %v3576, %v3573
    %v3958 = vpack.c.b16 %v3577, %v3574
    %v3959 = vpack.c.b16 %v3578, %v3575
    %v3960 = vpack.c.b16 %v3582, %v3579
    %v3961 = vpack.c.b16 %v3583, %v3580
    %v3962 = vpack.c.b16 %v3584, %v3581
    %v3963 = vpack.c.b16 %v3588, %v3585
    %v3964 = vpack.c.b16 %v3589, %v3586
    %v3965 = vpack.c.b16 %v3590, %v3587
    %v3966 = vpack.c.b16 %v3594, %v3591
    %v3967 = vpack.c.b16 %v3595, %v3592
    %v3968 = vpack.c.b16 %v3596, %v3593
    %v3969 = vpack.c.b16 %v3600, %v3597
    %v3970 = vpack.c.b16 %v3601, %v3598
    %v3971 = vpack.c.b16 %v3602, %v3599
    %v3972 = vpack.c.b16 %v3606, %v3603
    %v3973 = vpack.c.b16 %v3607, %v3604
    %v3974 = vpack.c.b16 %v3608, %v3605
    %v3975 = vpack.c.b16 %v3612, %v3609
    %v3976 = vpack.c.b16 %v3613, %v3610
    %v3977 = vpack.c.b16 %v3614, %v3611
    %v3978 = vpack.c.b16 %v3618, %v3615
    %v3979 = vpack.c.b16 %v3619, %v3616
    %v3980 = vpack.c.b16 %v3620, %v3617
    %v3981 = vpack.c.b16 %v3624, %v3621
    %v3982 = vpack.c.b16 %v3625, %v3622
    %v3983 = vpack.c.b16 %v3626, %v3623
    %v3984 = vpack.c.b16 %v3630, %v3627
    %v3985 = vpack.c.b16 %v3631, %v3628
    %v3986 = vpack.c.b16 %v3632, %v3629
    %v3987 = vpack.c.b16 %v3636, %v3633
    %v3988 = vpack.c.b16 %v3637, %v3634
    %v3989 = vpack.c.b16 %v3638, %v3635
    %v3990 = vpack.c.b16 %v3642, %v3639
    %v3991 = vpack.c.b16 %v3643, %v3640
    %v3992 = vpack.c.b16 %v3644, %v3641
    %v3993 = vpack.c.b16 %v3648, %v3645
    %v3994 = vpack.c.b16 %v3649, %v3646
    %v3995 = vpack.c.b16 %v3650, %v3647
    %v3996 = vpack.c.b16 %v3654, %v3651
    %v3997 = vpack.c.b16 %v3655, %v3652
    %v3998 = vpack.c.b16 %v3656, %v3653
    %v3999 = vpack.c.b16 %v3660, %v3657
    %v4000 = vpack.c.b16 %v3661, %v3658
    %v4001 = vpack.c.b16 %v3662, %v3659
    %v4002 = vpack.c.b16 %v3666, %v3663
    %v4003 = vpack.c.b16 %v3667, %v3664
    %v4004 = vpack.c.b16 %v3668, %v3665
    %v4005 = vpack.c.b16 %v3672, %v3669
    %v4006 = vpack.c.b16 %v3673, %v3670
    %v4007 = vpack.c.b16 %v3674, %v3671
    %v4008 = vpack.c.b16 %v3678, %v3675
    %v4009 = vpack.c.b16 %v3679, %v3676
    %v4010 = vpack.c.b16 %v3680, %v3677
    %v4011 = vpack.c.b16 %v3684, %v3681
    %v4012 = vpack.c.b16 %v3685, %v3682
    %v4013 = vpack.c.b16 %v3686, %v3683
    %v4014 = vpack.c.b16 %v3690, %v3687
    %v4015 = vpack.c.b16 %v3691, %v3688
    %v4016 = vpack.c.b16 %v3692, %v3689
    %v4017 = vpack.c.b16 %v3696, %v3693
    %v4018 = vpack.c.b16 %v3697, %v3694
    %v4019 = vpack.c.b16 %v3698, %v3695
    %v4020 = vpack.c.b16 %v3702, %v3699
    %v4021 = vpack.c.b16 %v3703, %v3700
    %v4022 = vpack.c.b16 %v3704, %v3701
    %v4023 = vpack.c.b16 %v3708, %v3705
    %v4024 = vpack.c.b16 %v3709, %v3706
    %v4025 = vpack.c.b16 %v3710, %v3707
    %v4026 = vpack.c.b16 %v3714, %v3711
    %v4027 = vpack.c.b16 %v3715, %v3712
    %v4028 = vpack.c.b16 %v3716, %v3713
    %v4029 = vpack.c.b16 %v3720, %v3717
    %v4030 = vpack.c.b16 %v3721, %v3718
    %v4031 = vpack.c.b16 %v3722, %v3719
    %v4032 = vpack.c.b16 %v3726, %v3723
    %v4033 = vpack.c.b16 %v3727, %v3724
    %v4034 = vpack.c.b16 %v3728, %v3725
    %v4035 = vpack.c.b16 %v3732, %v3729
    %v4036 = vpack.c.b16 %v3733, %v3730
    %v4037 = vpack.c.b16 %v3734, %v3731
    %v4038 = vpack.c.b16 %v3738, %v3735
    %v4039 = vpack.c.b16 %v3739, %v3736
    %v4040 = vpack.c.b16 %v3740, %v3737
    %v4041 = vpack.c.b16 %v3744, %v3741
    %v4042 = vpack.c.b16 %v3745, %v3742
    %v4043 = vpack.c.b16 %v3746, %v3743
    %v4044 = vpack.c.b16 %v3750, %v3747
    %v4045 = vpack.c.b16 %v3751, %v3748
    %v4046 = vpack.c.b16 %v3752, %v3749
    %v4047 = vpack.c.b16 %v3756, %v3753
    %v4048 = vpack.c.b16 %v3757, %v3754
    %v4049 = vpack.c.b16 %v3758, %v3755
    %v4050 = vpack.c.b16 %v3762, %v3759
    %v4051 = vpack.c.b16 %v3763, %v3760
    %v4052 = vpack.c.b16 %v3764, %v3761
    %4341 = vmatpush.bf16.msra.mxu0 %v3786
    %4342 = vmatpush.bf16.msra.mxu0 %v3783
    %4343 = vmatpush.bf16.msra.mxu0 %v3780
    %4344 = vmatpush.bf16.msra.mxu0 %v3777
    %4345 = vmatpush.bf16.msra.mxu0 %v3774
    %4346 = vmatpush.bf16.msra.mxu0 %v3771
    %4347 = vmatpush.bf16.msra.mxu0 %v3768
    %4348 = vmatpush.bf16.msra.mxu0 %v3765
    %4349 = vmatmul.bf16.gmra.mxu0 %v2401
    %v4350 = vpop.f32.mrf.mxu0
    %v4351 = vadd.f32 %v2799, %v4350
    %v4352 = vpop.f32.mrf.mxu0
    %v4353 = vadd.f32 %v2799, %v4352
    %4354 = vdwg.mxu0
    %4355 = vmatpush.bf16.msra.mxu0 %v3810
    %4356 = vmatpush.bf16.msra.mxu0 %v3807
    %4357 = vmatpush.bf16.msra.mxu0 %v3804
    %4358 = vmatpush.bf16.msra.mxu0 %v3801
    %4359 = vmatpush.bf16.msra.mxu0 %v3798
    %4360 = vmatpush.bf16.msra.mxu0 %v3795
    %4361 = vmatpush.bf16.msra.mxu0 %v3792
    %4362 = vmatpush.bf16.msra.mxu0 %v3789
    %4363 = vmatmul.bf16.gmra.mxu0 %v2402
    %v4364 = vpop.f32.mrf.mxu0
    %v4365 = vadd.f32 %v4351, %v4364
    %v4366 = vpop.f32.mrf.mxu0
    %v4367 = vadd.f32 %v4353, %v4366
    %4368 = vdwg.mxu0
    %4369 = vmatpush.bf16.msra.mxu0 %v3834
    %4370 = vmatpush.bf16.msra.mxu0 %v3831
    %4371 = vmatpush.bf16.msra.mxu0 %v3828
    %4372 = vmatpush.bf16.msra.mxu0 %v3825
    %4373 = vmatpush.bf16.msra.mxu0 %v3822
    %4374 = vmatpush.bf16.msra.mxu0 %v3819
    %4375 = vmatpush.bf16.msra.mxu0 %v3816
    %4376 = vmatpush.bf16.msra.mxu0 %v3813
    %4377 = vmatmul.bf16.gmra.mxu0 %v2403
    %v4378 = vpop.f32.mrf.mxu0
    %v4379 = vadd.f32 %v4365, %v4378
    %v4380 = vpop.f32.mrf.mxu0
    %v4381 = vadd.f32 %v4367, %v4380
    %4382 = vdwg.mxu0
    %4383 = vmatpush.bf16.msra.mxu0 %v3858
    %4384 = vmatpush.bf16.msra.mxu0 %v3855
    %4385 = vmatpush.bf16.msra.mxu0 %v3852
    %4386 = vmatpush.bf16.msra.mxu0 %v3849
    %4387 = vmatpush.bf16.msra.mxu0 %v3846
    %4388 = vmatpush.bf16.msra.mxu0 %v3843
    %4389 = vmatpush.bf16.msra.mxu0 %v3840
    %4390 = vmatpush.bf16.msra.mxu0 %v3837
    %4391 = vmatmul.bf16.gmra.mxu0 %v2404
    %v4392 = vpop.f32.mrf.mxu0
    %v4393 = vadd.f32 %v4379, %v4392
    %v4394 = vpop.f32.mrf.mxu0
    %v4395 = vadd.f32 %v4381, %v4394
    %4396 = vdwg.mxu0
    %4397 = vmatpush.bf16.msra.mxu0 %v3882
    %4398 = vmatpush.bf16.msra.mxu0 %v3879
    %4399 = vmatpush.bf16.msra.mxu0 %v3876
    %4400 = vmatpush.bf16.msra.mxu0 %v3873
    %4401 = vmatpush.bf16.msra.mxu0 %v3870
    %4402 = vmatpush.bf16.msra.mxu0 %v3867
    %4403 = vmatpush.bf16.msra.mxu0 %v3864
    %4404 = vmatpush.bf16.msra.mxu0 %v3861
    %4405 = vmatmul.bf16.gmra.mxu0 %v2405
    %v4406 = vpop.f32.mrf.mxu0
    %v4407 = vadd.f32 %v4393, %v4406
    %v4408 = vpop.f32.mrf.mxu0
    %v4409 = vadd.f32 %v4395, %v4408
    %4410 = vdwg.mxu0
    %4411 = vmatpush.bf16.msra.mxu0 %v3906
    %4412 = vmatpush.bf16.msra.mxu0 %v3903
    %4413 = vmatpush.bf16.msra.mxu0 %v3900
    %4414 = vmatpush.bf16.msra.mxu0 %v3897
    %4415 = vmatpush.bf16.msra.mxu0 %v3894
    %4416 = vmatpush.bf16.msra.mxu0 %v3891
    %4417 = vmatpush.bf16.msra.mxu0 %v3888
    %4418 = vmatpush.bf16.msra.mxu0 %v3885
    %4419 = vmatmul.bf16.gmra.mxu0 %v2406
    %v4420 = vpop.f32.mrf.mxu0
    %v4421 = vadd.f32 %v4407, %v4420
    %v4422 = vpop.f32.mrf.mxu0
    %v4423 = vadd.f32 %v4409, %v4422
    %4424 = vdwg.mxu0
    %4425 = vmatpush.bf16.msra.mxu0 %v3930
    %4426 = vmatpush.bf16.msra.mxu0 %v3927
    %4427 = vmatpush.bf16.msra.mxu0 %v3924
    %4428 = vmatpush.bf16.msra.mxu0 %v3921
    %4429 = vmatpush.bf16.msra.mxu0 %v3918
    %4430 = vmatpush.bf16.msra.mxu0 %v3915
    %4431 = vmatpush.bf16.msra.mxu0 %v3912
    %4432 = vmatpush.bf16.msra.mxu0 %v3909
    %4433 = vmatmul.bf16.gmra.mxu0 %v2407
    %v4434 = vpop.f32.mrf.mxu0
    %v4435 = vadd.f32 %v4421, %v4434
    %v4436 = vpop.f32.mrf.mxu0
    %v4437 = vadd.f32 %v4423, %v4436
    %4438 = vdwg.mxu0
    %4439 = vmatpush.bf16.msra.mxu0 %v3954
    %4440 = vmatpush.bf16.msra.mxu0 %v3951
    %4441 = vmatpush.bf16.msra.mxu0 %v3948
    %4442 = vmatpush.bf16.msra.mxu0 %v3945
    %4443 = vmatpush.bf16.msra.mxu0 %v3942
    %4444 = vmatpush.bf16.msra.mxu0 %v3939
    %4445 = vmatpush.bf16.msra.mxu0 %v3936
    %4446 = vmatpush.bf16.msra.mxu0 %v3933
    %4447 = vmatmul.bf16.gmra.mxu0 %v2408
    %v4448 = vpop.f32.mrf.mxu0
    %v4449 = vadd.f32 %v4435, %v4448
    %v4450 = vpop.f32.mrf.mxu0
    %v4451 = vadd.f32 %v4437, %v4450
    %4452 = vdwg.mxu0
    %4453 = vmatpush.bf16.msra.mxu0 %v3978
    %4454 = vmatpush.bf16.msra.mxu0 %v3975
    %4455 = vmatpush.bf16.msra.mxu0 %v3972
    %4456 = vmatpush.bf16.msra.mxu0 %v3969
    %4457 = vmatpush.bf16.msra.mxu0 %v3966
    %4458 = vmatpush.bf16.msra.mxu0 %v3963
    %4459 = vmatpush.bf16.msra.mxu0 %v3960
    %4460 = vmatpush.bf16.msra.mxu0 %v3957
    %4461 = vmatmul.bf16.gmra.mxu0 %v2409
    %v4462 = vpop.f32.mrf.mxu0
    %v4463 = vadd.f32 %v4449, %v4462
    %v4464 = vpop.f32.mrf.mxu0
    %v4465 = vadd.f32 %v4451, %v4464
    %4466 = vdwg.mxu0
    %4467 = vmatpush.bf16.msra.mxu0 %v4002
    %4468 = vmatpush.bf16.msra.mxu0 %v3999
    %4469 = vmatpush.bf16.msra.mxu0 %v3996
    %4470 = vmatpush.bf16.msra.mxu0 %v3993
    %4471 = vmatpush.bf16.msra.mxu0 %v3990
    %4472 = vmatpush.bf16.msra.mxu0 %v3987
    %4473 = vmatpush.bf16.msra.mxu0 %v3984
    %4474 = vmatpush.bf16.msra.mxu0 %v3981
    %4475 = vmatmul.bf16.gmra.mxu0 %v2410
    %v4476 = vpop.f32.mrf.mxu0
    %v4477 = vadd.f32 %v4463, %v4476
    %v4478 = vpop.f32.mrf.mxu0
    %v4479 = vadd.f32 %v4465, %v4478
    %4480 = vdwg.mxu0
    %4481 = vmatpush.bf16.msra.mxu0 %v4026
    %4482 = vmatpush.bf16.msra.mxu0 %v4023
    %4483 = vmatpush.bf16.msra.mxu0 %v4020
    %4484 = vmatpush.bf16.msra.mxu0 %v4017
    %4485 = vmatpush.bf16.msra.mxu0 %v4014
    %4486 = vmatpush.bf16.msra.mxu0 %v4011
    %4487 = vmatpush.bf16.msra.mxu0 %v4008
    %4488 = vmatpush.bf16.msra.mxu0 %v4005
    %4489 = vmatmul.bf16.gmra.mxu0 %v2411
    %v4490 = vpop.f32.mrf.mxu0
    %v4491 = vadd.f32 %v4477, %v4490
    %v4492 = vpop.f32.mrf.mxu0
    %v4493 = vadd.f32 %v4479, %v4492
    %4494 = vdwg.mxu0
    %4495 = vmatpush.bf16.msra.mxu0 %v4050
    %4496 = vmatpush.bf16.msra.mxu0 %v4047
    %4497 = vmatpush.bf16.msra.mxu0 %v4044
    %4498 = vmatpush.bf16.msra.mxu0 %v4041
    %4499 = vmatpush.bf16.msra.mxu0 %v4038
    %4500 = vmatpush.bf16.msra.mxu0 %v4035
    %4501 = vmatpush.bf16.msra.mxu0 %v4032
    %4502 = vmatpush.bf16.msra.mxu0 %v4029
    %4503 = vmatmul.bf16.gmra.mxu0 %v2412
    %v4504 = vpop.f32.mrf.mxu0
    %v4505 = vadd.f32 %v4491, %v4504
    %v4506 = vpop.f32.mrf.mxu0
    %v4507 = vadd.f32 %v4493, %v4506
    %4508 = vdwg.mxu0
    %4509 = vmatpush.bf16.msra.mxu0 %v3787
    %4510 = vmatpush.bf16.msra.mxu0 %v3784
    %4511 = vmatpush.bf16.msra.mxu0 %v3781
    %4512 = vmatpush.bf16.msra.mxu0 %v3778
    %4513 = vmatpush.bf16.msra.mxu0 %v3775
    %4514 = vmatpush.bf16.msra.mxu0 %v3772
    %4515 = vmatpush.bf16.msra.mxu0 %v3769
    %4516 = vmatpush.bf16.msra.mxu0 %v3766
    %4517 = vmatmul.bf16.gmra.mxu0 %v2401
    %v4518 = vpop.f32.mrf.mxu0
    %v4519 = vadd.f32 %v2800, %v4518
    %v4520 = vpop.f32.mrf.mxu0
    %v4521 = vadd.f32 %v2800, %v4520
    %4522 = vdwg.mxu0
    %4523 = vmatpush.bf16.msra.mxu0 %v3811
    %4524 = vmatpush.bf16.msra.mxu0 %v3808
    %4525 = vmatpush.bf16.msra.mxu0 %v3805
    %4526 = vmatpush.bf16.msra.mxu0 %v3802
    %4527 = vmatpush.bf16.msra.mxu0 %v3799
    %4528 = vmatpush.bf16.msra.mxu0 %v3796
    %4529 = vmatpush.bf16.msra.mxu0 %v3793
    %4530 = vmatpush.bf16.msra.mxu0 %v3790
    %4531 = vmatmul.bf16.gmra.mxu0 %v2402
    %v4532 = vpop.f32.mrf.mxu0
    %v4533 = vadd.f32 %v4519, %v4532
    %v4534 = vpop.f32.mrf.mxu0
    %v4535 = vadd.f32 %v4521, %v4534
    %4536 = vdwg.mxu0
    %4537 = vmatpush.bf16.msra.mxu0 %v3835
    %4538 = vmatpush.bf16.msra.mxu0 %v3832
    %4539 = vmatpush.bf16.msra.mxu0 %v3829
    %4540 = vmatpush.bf16.msra.mxu0 %v3826
    %4541 = vmatpush.bf16.msra.mxu0 %v3823
    %4542 = vmatpush.bf16.msra.mxu0 %v3820
    %4543 = vmatpush.bf16.msra.mxu0 %v3817
    %4544 = vmatpush.bf16.msra.mxu0 %v3814
    %4545 = vmatmul.bf16.gmra.mxu0 %v2403
    %v4546 = vpop.f32.mrf.mxu0
    %v4547 = vadd.f32 %v4533, %v4546
    %v4548 = vpop.f32.mrf.mxu0
    %v4549 = vadd.f32 %v4535, %v4548
    %4550 = vdwg.mxu0
    %4551 = vmatpush.bf16.msra.mxu0 %v3859
    %4552 = vmatpush.bf16.msra.mxu0 %v3856
    %4553 = vmatpush.bf16.msra.mxu0 %v3853
    %4554 = vmatpush.bf16.msra.mxu0 %v3850
    %4555 = vmatpush.bf16.msra.mxu0 %v3847
    %4556 = vmatpush.bf16.msra.mxu0 %v3844
    %4557 = vmatpush.bf16.msra.mxu0 %v3841
    %4558 = vmatpush.bf16.msra.mxu0 %v3838
    %4559 = vmatmul.bf16.gmra.mxu0 %v2404
    %v4560 = vpop.f32.mrf.mxu0
    %v4561 = vadd.f32 %v4547, %v4560
    %v4562 = vpop.f32.mrf.mxu0
    %v4563 = vadd.f32 %v4549, %v4562
    %4564 = vdwg.mxu0
    %4565 = vmatpush.bf16.msra.mxu0 %v3883
    %4566 = vmatpush.bf16.msra.mxu0 %v3880
    %4567 = vmatpush.bf16.msra.mxu0 %v3877
    %4568 = vmatpush.bf16.msra.mxu0 %v3874
    %4569 = vmatpush.bf16.msra.mxu0 %v3871
    %4570 = vmatpush.bf16.msra.mxu0 %v3868
    %4571 = vmatpush.bf16.msra.mxu0 %v3865
    %4572 = vmatpush.bf16.msra.mxu0 %v3862
    %4573 = vmatmul.bf16.gmra.mxu0 %v2405
    %v4574 = vpop.f32.mrf.mxu0
    %v4575 = vadd.f32 %v4561, %v4574
    %v4576 = vpop.f32.mrf.mxu0
    %v4577 = vadd.f32 %v4563, %v4576
    %4578 = vdwg.mxu0
    %4579 = vmatpush.bf16.msra.mxu0 %v3907
    %4580 = vmatpush.bf16.msra.mxu0 %v3904
    %4581 = vmatpush.bf16.msra.mxu0 %v3901
    %4582 = vmatpush.bf16.msra.mxu0 %v3898
    %4583 = vmatpush.bf16.msra.mxu0 %v3895
    %4584 = vmatpush.bf16.msra.mxu0 %v3892
    %4585 = vmatpush.bf16.msra.mxu0 %v3889
    %4586 = vmatpush.bf16.msra.mxu0 %v3886
    %4587 = vmatmul.bf16.gmra.mxu0 %v2406
    %v4588 = vpop.f32.mrf.mxu0
    %v4589 = vadd.f32 %v4575, %v4588
    %v4590 = vpop.f32.mrf.mxu0
    %v4591 = vadd.f32 %v4577, %v4590
    %4592 = vdwg.mxu0
    %4593 = vmatpush.bf16.msra.mxu0 %v3931
    %4594 = vmatpush.bf16.msra.mxu0 %v3928
    %4595 = vmatpush.bf16.msra.mxu0 %v3925
    %4596 = vmatpush.bf16.msra.mxu0 %v3922
    %4597 = vmatpush.bf16.msra.mxu0 %v3919
    %4598 = vmatpush.bf16.msra.mxu0 %v3916
    %4599 = vmatpush.bf16.msra.mxu0 %v3913
    %4600 = vmatpush.bf16.msra.mxu0 %v3910
    %4601 = vmatmul.bf16.gmra.mxu0 %v2407
    %v4602 = vpop.f32.mrf.mxu0
    %v4603 = vadd.f32 %v4589, %v4602
    %v4604 = vpop.f32.mrf.mxu0
    %v4605 = vadd.f32 %v4591, %v4604
    %4606 = vdwg.mxu0
    %4607 = vmatpush.bf16.msra.mxu0 %v3955
    %4608 = vmatpush.bf16.msra.mxu0 %v3952
    %4609 = vmatpush.bf16.msra.mxu0 %v3949
    %4610 = vmatpush.bf16.msra.mxu0 %v3946
    %4611 = vmatpush.bf16.msra.mxu0 %v3943
    %4612 = vmatpush.bf16.msra.mxu0 %v3940
    %4613 = vmatpush.bf16.msra.mxu0 %v3937
    %4614 = vmatpush.bf16.msra.mxu0 %v3934
    %4615 = vmatmul.bf16.gmra.mxu0 %v2408
    %v4616 = vpop.f32.mrf.mxu0
    %v4617 = vadd.f32 %v4603, %v4616
    %v4618 = vpop.f32.mrf.mxu0
    %v4619 = vadd.f32 %v4605, %v4618
    %4620 = vdwg.mxu0
    %4621 = vmatpush.bf16.msra.mxu0 %v3979
    %4622 = vmatpush.bf16.msra.mxu0 %v3976
    %4623 = vmatpush.bf16.msra.mxu0 %v3973
    %4624 = vmatpush.bf16.msra.mxu0 %v3970
    %4625 = vmatpush.bf16.msra.mxu0 %v3967
    %4626 = vmatpush.bf16.msra.mxu0 %v3964
    %4627 = vmatpush.bf16.msra.mxu0 %v3961
    %4628 = vmatpush.bf16.msra.mxu0 %v3958
    %4629 = vmatmul.bf16.gmra.mxu0 %v2409
    %v4630 = vpop.f32.mrf.mxu0
    %v4631 = vadd.f32 %v4617, %v4630
    %v4632 = vpop.f32.mrf.mxu0
    %v4633 = vadd.f32 %v4619, %v4632
    %4634 = vdwg.mxu0
    %4635 = vmatpush.bf16.msra.mxu0 %v4003
    %4636 = vmatpush.bf16.msra.mxu0 %v4000
    %4637 = vmatpush.bf16.msra.mxu0 %v3997
    %4638 = vmatpush.bf16.msra.mxu0 %v3994
    %4639 = vmatpush.bf16.msra.mxu0 %v3991
    %4640 = vmatpush.bf16.msra.mxu0 %v3988
    %4641 = vmatpush.bf16.msra.mxu0 %v3985
    %4642 = vmatpush.bf16.msra.mxu0 %v3982
    %4643 = vmatmul.bf16.gmra.mxu0 %v2410
    %v4644 = vpop.f32.mrf.mxu0
    %v4645 = vadd.f32 %v4631, %v4644
    %v4646 = vpop.f32.mrf.mxu0
    %v4647 = vadd.f32 %v4633, %v4646
    %4648 = vdwg.mxu0
    %4649 = vmatpush.bf16.msra.mxu0 %v4027
    %4650 = vmatpush.bf16.msra.mxu0 %v4024
    %4651 = vmatpush.bf16.msra.mxu0 %v4021
    %4652 = vmatpush.bf16.msra.mxu0 %v4018
    %4653 = vmatpush.bf16.msra.mxu0 %v4015
    %4654 = vmatpush.bf16.msra.mxu0 %v4012
    %4655 = vmatpush.bf16.msra.mxu0 %v4009
    %4656 = vmatpush.bf16.msra.mxu0 %v4006
    %4657 = vmatmul.bf16.gmra.mxu0 %v2411
    %v4658 = vpop.f32.mrf.mxu0
    %v4659 = vadd.f32 %v4645, %v4658
    %v4660 = vpop.f32.mrf.mxu0
    %v4661 = vadd.f32 %v4647, %v4660
    %4662 = vdwg.mxu0
    %4663 = vmatpush.bf16.msra.mxu0 %v4051
    %4664 = vmatpush.bf16.msra.mxu0 %v4048
    %4665 = vmatpush.bf16.msra.mxu0 %v4045
    %4666 = vmatpush.bf16.msra.mxu0 %v4042
    %4667 = vmatpush.bf16.msra.mxu0 %v4039
    %4668 = vmatpush.bf16.msra.mxu0 %v4036
    %4669 = vmatpush.bf16.msra.mxu0 %v4033
    %4670 = vmatpush.bf16.msra.mxu0 %v4030
    %4671 = vmatmul.bf16.gmra.mxu0 %v2412
    %v4672 = vpop.f32.mrf.mxu0
    %v4673 = vadd.f32 %v4659, %v4672
    %v4674 = vpop.f32.mrf.mxu0
    %v4675 = vadd.f32 %v4661, %v4674
    %4676 = vdwg.mxu0
    %4677 = vmatpush.bf16.msra.mxu0 %v3788
    %4678 = vmatpush.bf16.msra.mxu0 %v3785
    %4679 = vmatpush.bf16.msra.mxu0 %v3782
    %4680 = vmatpush.bf16.msra.mxu0 %v3779
    %4681 = vmatpush.bf16.msra.mxu0 %v3776
    %4682 = vmatpush.bf16.msra.mxu0 %v3773
    %4683 = vmatpush.bf16.msra.mxu0 %v3770
    %4684 = vmatpush.bf16.msra.mxu0 %v3767
    %4685 = vmatmul.bf16.gmra.mxu0 %v2401
    %v4686 = vpop.f32.mrf.mxu0
    %v4687 = vadd.f32 %v2801, %v4686
    %v4688 = vpop.f32.mrf.mxu0
    %v4689 = vadd.f32 %v2801, %v4688
    %4690 = vdwg.mxu0
    %4691 = vmatpush.bf16.msra.mxu0 %v3812
    %4692 = vmatpush.bf16.msra.mxu0 %v3809
    %4693 = vmatpush.bf16.msra.mxu0 %v3806
    %4694 = vmatpush.bf16.msra.mxu0 %v3803
    %4695 = vmatpush.bf16.msra.mxu0 %v3800
    %4696 = vmatpush.bf16.msra.mxu0 %v3797
    %4697 = vmatpush.bf16.msra.mxu0 %v3794
    %4698 = vmatpush.bf16.msra.mxu0 %v3791
    %4699 = vmatmul.bf16.gmra.mxu0 %v2402
    %v4700 = vpop.f32.mrf.mxu0
    %v4701 = vadd.f32 %v4687, %v4700
    %v4702 = vpop.f32.mrf.mxu0
    %v4703 = vadd.f32 %v4689, %v4702
    %4704 = vdwg.mxu0
    %4705 = vmatpush.bf16.msra.mxu0 %v3836
    %4706 = vmatpush.bf16.msra.mxu0 %v3833
    %4707 = vmatpush.bf16.msra.mxu0 %v3830
    %4708 = vmatpush.bf16.msra.mxu0 %v3827
    %4709 = vmatpush.bf16.msra.mxu0 %v3824
    %4710 = vmatpush.bf16.msra.mxu0 %v3821
    %4711 = vmatpush.bf16.msra.mxu0 %v3818
    %4712 = vmatpush.bf16.msra.mxu0 %v3815
    %4713 = vmatmul.bf16.gmra.mxu0 %v2403
    %v4714 = vpop.f32.mrf.mxu0
    %v4715 = vadd.f32 %v4701, %v4714
    %v4716 = vpop.f32.mrf.mxu0
    %v4717 = vadd.f32 %v4703, %v4716
    %4718 = vdwg.mxu0
    %4719 = vmatpush.bf16.msra.mxu0 %v3860
    %4720 = vmatpush.bf16.msra.mxu0 %v3857
    %4721 = vmatpush.bf16.msra.mxu0 %v3854
    %4722 = vmatpush.bf16.msra.mxu0 %v3851
    %4723 = vmatpush.bf16.msra.mxu0 %v3848
    %4724 = vmatpush.bf16.msra.mxu0 %v3845
    %4725 = vmatpush.bf16.msra.mxu0 %v3842
    %4726 = vmatpush.bf16.msra.mxu0 %v3839
    %4727 = vmatmul.bf16.gmra.mxu0 %v2404
    %v4728 = vpop.f32.mrf.mxu0
    %v4729 = vadd.f32 %v4715, %v4728
    %v4730 = vpop.f32.mrf.mxu0
    %v4731 = vadd.f32 %v4717, %v4730
    %4732 = vdwg.mxu0
    %4733 = vmatpush.bf16.msra.mxu0 %v3884
    %4734 = vmatpush.bf16.msra.mxu0 %v3881
    %4735 = vmatpush.bf16.msra.mxu0 %v3878
    %4736 = vmatpush.bf16.msra.mxu0 %v3875
    %4737 = vmatpush.bf16.msra.mxu0 %v3872
    %4738 = vmatpush.bf16.msra.mxu0 %v3869
    %4739 = vmatpush.bf16.msra.mxu0 %v3866
    %4740 = vmatpush.bf16.msra.mxu0 %v3863
    %4741 = vmatmul.bf16.gmra.mxu0 %v2405
    %v4742 = vpop.f32.mrf.mxu0
    %v4743 = vadd.f32 %v4729, %v4742
    %v4744 = vpop.f32.mrf.mxu0
    %v4745 = vadd.f32 %v4731, %v4744
    %4746 = vdwg.mxu0
    %4747 = vmatpush.bf16.msra.mxu0 %v3908
    %4748 = vmatpush.bf16.msra.mxu0 %v3905
    %4749 = vmatpush.bf16.msra.mxu0 %v3902
    %4750 = vmatpush.bf16.msra.mxu0 %v3899
    %4751 = vmatpush.bf16.msra.mxu0 %v3896
    %4752 = vmatpush.bf16.msra.mxu0 %v3893
    %4753 = vmatpush.bf16.msra.mxu0 %v3890
    %4754 = vmatpush.bf16.msra.mxu0 %v3887
    %4755 = vmatmul.bf16.gmra.mxu0 %v2406
    %v4756 = vpop.f32.mrf.mxu0
    %v4757 = vadd.f32 %v4743, %v4756
    %v4758 = vpop.f32.mrf.mxu0
    %v4759 = vadd.f32 %v4745, %v4758
    %4760 = vdwg.mxu0
    %4761 = vmatpush.bf16.msra.mxu0 %v3932
    %4762 = vmatpush.bf16.msra.mxu0 %v3929
    %4763 = vmatpush.bf16.msra.mxu0 %v3926
    %4764 = vmatpush.bf16.msra.mxu0 %v3923
    %4765 = vmatpush.bf16.msra.mxu0 %v3920
    %4766 = vmatpush.bf16.msra.mxu0 %v3917
    %4767 = vmatpush.bf16.msra.mxu0 %v3914
    %4768 = vmatpush.bf16.msra.mxu0 %v3911
    %4769 = vmatmul.bf16.gmra.mxu0 %v2407
    %v4770 = vpop.f32.mrf.mxu0
    %v4771 = vadd.f32 %v4757, %v4770
    %v4772 = vpop.f32.mrf.mxu0
    %v4773 = vadd.f32 %v4759, %v4772
    %4774 = vdwg.mxu0
    %4775 = vmatpush.bf16.msra.mxu0 %v3956
    %4776 = vmatpush.bf16.msra.mxu0 %v3953
    %4777 = vmatpush.bf16.msra.mxu0 %v3950
    %4778 = vmatpush.bf16.msra.mxu0 %v3947
    %4779 = vmatpush.bf16.msra.mxu0 %v3944
    %4780 = vmatpush.bf16.msra.mxu0 %v3941
    %4781 = vmatpush.bf16.msra.mxu0 %v3938
    %4782 = vmatpush.bf16.msra.mxu0 %v3935
    %4783 = vmatmul.bf16.gmra.mxu0 %v2408
    %v4784 = vpop.f32.mrf.mxu0
    %v4785 = vadd.f32 %v4771, %v4784
    %v4786 = vpop.f32.mrf.mxu0
    %v4787 = vadd.f32 %v4773, %v4786
    %4788 = vdwg.mxu0
    %4789 = vmatpush.bf16.msra.mxu0 %v3980
    %4790 = vmatpush.bf16.msra.mxu0 %v3977
    %4791 = vmatpush.bf16.msra.mxu0 %v3974
    %4792 = vmatpush.bf16.msra.mxu0 %v3971
    %4793 = vmatpush.bf16.msra.mxu0 %v3968
    %4794 = vmatpush.bf16.msra.mxu0 %v3965
    %4795 = vmatpush.bf16.msra.mxu0 %v3962
    %4796 = vmatpush.bf16.msra.mxu0 %v3959
    %4797 = vmatmul.bf16.gmra.mxu0 %v2409
    %v4798 = vpop.f32.mrf.mxu0
    %v4799 = vadd.f32 %v4785, %v4798
    %v4800 = vpop.f32.mrf.mxu0
    %v4801 = vadd.f32 %v4787, %v4800
    %4802 = vdwg.mxu0
    %4803 = vmatpush.bf16.msra.mxu0 %v4004
    %4804 = vmatpush.bf16.msra.mxu0 %v4001
    %4805 = vmatpush.bf16.msra.mxu0 %v3998
    %4806 = vmatpush.bf16.msra.mxu0 %v3995
    %4807 = vmatpush.bf16.msra.mxu0 %v3992
    %4808 = vmatpush.bf16.msra.mxu0 %v3989
    %4809 = vmatpush.bf16.msra.mxu0 %v3986
    %4810 = vmatpush.bf16.msra.mxu0 %v3983
    %4811 = vmatmul.bf16.gmra.mxu0 %v2410
    %v4812 = vpop.f32.mrf.mxu0
    %v4813 = vadd.f32 %v4799, %v4812
    %v4814 = vpop.f32.mrf.mxu0
    %v4815 = vadd.f32 %v4801, %v4814
    %4816 = vdwg.mxu0
    %4817 = vmatpush.bf16.msra.mxu0 %v4028
    %4818 = vmatpush.bf16.msra.mxu0 %v4025
    %4819 = vmatpush.bf16.msra.mxu0 %v4022
    %4820 = vmatpush.bf16.msra.mxu0 %v4019
    %4821 = vmatpush.bf16.msra.mxu0 %v4016
    %4822 = vmatpush.bf16.msra.mxu0 %v4013
    %4823 = vmatpush.bf16.msra.mxu0 %v4010
    %4824 = vmatpush.bf16.msra.mxu0 %v4007
    %4825 = vmatmul.bf16.gmra.mxu0 %v2411
    %v4826 = vpop.f32.mrf.mxu0
    %v4827 = vadd.f32 %v4813, %v4826
    %v4828 = vpop.f32.mrf.mxu0
    %v4829 = vadd.f32 %v4815, %v4828
    %4830 = vdwg.mxu0
    %4831 = vmatpush.bf16.msra.mxu0 %v4052
    %4832 = vmatpush.bf16.msra.mxu0 %v4049
    %4833 = vmatpush.bf16.msra.mxu0 %v4046
    %4834 = vmatpush.bf16.msra.mxu0 %v4043
    %4835 = vmatpush.bf16.msra.mxu0 %v4040
    %4836 = vmatpush.bf16.msra.mxu0 %v4037
    %4837 = vmatpush.bf16.msra.mxu0 %v4034
    %4838 = vmatpush.bf16.msra.mxu0 %v4031
    %4839 = vmatmul.bf16.gmra.mxu0 %v2412
    %v4840 = vpop.f32.mrf.mxu0
    %v4841 = vadd.f32 %v4827, %v4840
    %v4842 = vpop.f32.mrf.mxu0
    %v4843 = vadd.f32 %v4829, %v4842
    %4844 = vdwg.mxu0
    %s4845 = smul.u32 0, 16
    %s4846 = sld [smem:[#allocation3]]
    %v4847 = vlaneseq
    %v4848 = vshrl.u32 %v4847, 7
    %v4849 = vadd.s32 %v4848, 8
    %v4850 = vstv %s4845
    %v4851 = vadd.s32 %v4848, %v4850
    %v4852 = vadd.s32 %v4849, %v4850
    %v4853 = vlaneseq
    %v4854 = vand.u32 %v4853, 127
    %v4855 = vadd.s32 %v4854, 128
    %v4856 = vadd.s32 %v4854, 256
    %v4857 = vmul.u32 %v4851, 384
    %v4858 = vmul.u32 %v4852, 384
    %v4859 = vadd.s32 %v4857, %v4854
    %v4860 = vadd.s32 %v4857, %v4855
    %v4861 = vadd.s32 %v4857, %v4856
    %v4862 = vadd.s32 %v4858, %v4854
    %v4863 = vadd.s32 %v4858, %v4855
    %v4864 = vadd.s32 %v4858, %v4856
    %s4865 = smul.u32 %s4846, 2654435769
    %v4866 = vstv %s4865
    %v4867 = vxor.u32 %v4859, %v4866
    %v4868 = vxor.u32 %v4860, %v4866
    %v4869 = vxor.u32 %v4861, %v4866
    %v4870 = vxor.u32 %v4862, %v4866
    %v4871 = vxor.u32 %v4863, %v4866
    %v4872 = vxor.u32 %v4864, %v4866
    %v4873 = vshrl.u32 %v4867, 16
    %v4874 = vshrl.u32 %v4868, 16
    %v4875 = vshrl.u32 %v4869, 16
    %v4876 = vshrl.u32 %v4870, 16
    %v4877 = vshrl.u32 %v4871, 16
    %v4878 = vshrl.u32 %v4872, 16
    %v4879 = vxor.u32 %v4867, %v4873
    %v4880 = vxor.u32 %v4868, %v4874
    %v4881 = vxor.u32 %v4869, %v4875
    %v4882 = vxor.u32 %v4870, %v4876
    %v4883 = vxor.u32 %v4871, %v4877
    %v4884 = vxor.u32 %v4872, %v4878
    %v4885 = vmul.u32 %v4879, 2246822507
    %v4886 = vmul.u32 %v4880, 2246822507
    %v4887 = vmul.u32 %v4881, 2246822507
    %v4888 = vmul.u32 %v4882, 2246822507
    %v4889 = vmul.u32 %v4883, 2246822507
    %v4890 = vmul.u32 %v4884, 2246822507
    %v4891 = vshrl.u32 %v4885, 13
    %v4892 = vshrl.u32 %v4886, 13
    %v4893 = vshrl.u32 %v4887, 13
    %v4894 = vshrl.u32 %v4888, 13
    %v4895 = vshrl.u32 %v4889, 13
    %v4896 = vshrl.u32 %v4890, 13
    %v4897 = vxor.u32 %v4885, %v4891
    %v4898 = vxor.u32 %v4886, %v4892
    %v4899 = vxor.u32 %v4887, %v4893
    %v4900 = vxor.u32 %v4888, %v4894
    %v4901 = vxor.u32 %v4889, %v4895
    %v4902 = vxor.u32 %v4890, %v4896
    %v4903 = vmul.u32 %v4897, 3266489909
    %v4904 = vmul.u32 %v4898, 3266489909
    %v4905 = vmul.u32 %v4899, 3266489909
    %v4906 = vmul.u32 %v4900, 3266489909
    %v4907 = vmul.u32 %v4901, 3266489909
    %v4908 = vmul.u32 %v4902, 3266489909
    %v4909 = vshrl.u32 %v4903, 16
    %v4910 = vshrl.u32 %v4904, 16
    %v4911 = vshrl.u32 %v4905, 16
    %v4912 = vshrl.u32 %v4906, 16
    %v4913 = vshrl.u32 %v4907, 16
    %v4914 = vshrl.u32 %v4908, 16
    %v4915 = vxor.u32 %v4903, %v4909
    %v4916 = vxor.u32 %v4904, %v4910
    %v4917 = vxor.u32 %v4905, %v4911
    %v4918 = vxor.u32 %v4906, %v4912
    %v4919 = vxor.u32 %v4907, %v4913
    %v4920 = vxor.u32 %v4908, %v4914
    %v4921 = vadd.s32 %v4915, 2147483648
    %vm4923 = vcmp.ge.s32.totalorder %v4921, 3006477107
    %v4924 = vadd.s32 %v4916, 2147483648
    %vm4926 = vcmp.ge.s32.totalorder %v4924, 3006477107
    %v4927 = vadd.s32 %v4917, 2147483648
    %vm4929 = vcmp.ge.s32.totalorder %v4927, 3006477107
    %v4930 = vadd.s32 %v4918, 2147483648
    %vm4932 = vcmp.ge.s32.totalorder %v4930, 3006477107
    %v4933 = vadd.s32 %v4919, 2147483648
    %vm4935 = vcmp.ge.s32.totalorder %v4933, 3006477107
    %v4936 = vadd.s32 %v4920, 2147483648
    %vm4938 = vcmp.ge.s32.totalorder %v4936, 3006477107
    %v4939 = vmul.f32 %v4505, 1.25
    %v4940 = vmul.f32 %v4673, 1.25
    %v4941 = vmul.f32 %v4841, 1.25
    %v4942 = vmul.f32 %v4507, 1.25
    %v4943 = vmul.f32 %v4675, 1.25
    %v4944 = vmul.f32 %v4843, 1.25
    %v4945 = vsel %vm4923, %v4939, 0.0
    %v4946 = vsel %vm4926, %v4940, 0.0
    %v4947 = vsel %vm4929, %v4941, 0.0
    %v4948 = vsel %vm4932, %v4942, 0.0
    %v4949 = vsel %vm4935, %v4943, 0.0
    %v4950 = vsel %vm4938, %v4944, 0.0
    %4951 = vst [vmem:[#allocation13] sm:$0xff] %v4945
    %4952 = vst [vmem:[#allocation13 + $0x8] sm:$0xff] %v4946
    %4953 = vst [vmem:[#allocation13 + $0x10] sm:$0xff] %v4947
    %4954 = vst [vmem:[#allocation13 + $0x18] sm:$0xff] %v4948
    %4955 = vst [vmem:[#allocation13 + $0x20] sm:$0xff] %v4949
    %4956 = vst [vmem:[#allocation13 + $0x28] sm:$0xff] %v4950
    // Predicated region
    $region42: #{tpu_custom_call.1} parent=1 // pred_check
      _
    $region43: #{tpu_custom_call.1} parent=1 // pred_check_branch
      %4958 = sbr.rel (0) target = $region45
    $region44: #{tpu_custom_call.1} parent=1 // pred_region
      %4960 = vsyncadd [#allocation6], 0
      %s4961 = sshll.u32 [#allocation13], 4
      %s4962 = int_to_ptr.vmem [resolvable:$true] %s4961
      %s4963 = sshll.u32 %s6, 4
      %s4964 = int_to_ptr.hbm [resolvable:$true] %s4963
      %4969 = dma.vmem_to_hbm [thread:$0]  %s4962, 768, %s4964, [#allocation6], 384, 384, 24
    $region45: #{tpu_custom_call.1} parent=1 // pred_fallthru
      _
    // Predicated region
    $region46: #{tpu_custom_call.1} parent=1 // pred_check
      _
    $region47: #{tpu_custom_call.1} parent=1 // pred_check_branch
      %4971 = sbr.rel (0) target = $region49
    $region48: #{tpu_custom_call.1} parent=1 // pred_region
      %4973 = dma.done [#allocation6], 768
    $region49: #{tpu_custom_call.1} parent=1 // pred_fallthru
      _
    %4974 = vsyncpa [#allocation5], 1
    %4975 = vsyncpa [#allocation8], 1
    %4976 = vsyncpa [#allocation11], 1
    %4977 = vsyncpa [#allocation6], 1

</llo_original>
